<compile_context>
chip_gen: v5e
topology: v5e:2x2
jax: 0.10.0
libtpu: 0.0.40
codegen_flags: <defaults>
</compile_context>

<pallas_src>
import jax
import jax.numpy as jnp
from jax import lax
from jax.experimental import pallas as pl
from jax.experimental.pallas import tpu as pltpu

_LANE = 128      # lanes per vreg: each gate gets its own full stripe
_SUBLANE = 8     # sublanes per vreg: batch padded to this


def _round_up(x, m):
    return (x + m - 1) // m * m


def _bigru_kernel(len_ref, x_ref, wih_ref, bih_ref,
                  whh_f_ref, bhh_f_ref, whh_b_ref, bhh_b_ref,
                  out_ref, hid_ref,
                  gif_ref, gib_ref, outb_ref):
    """Masked bidirectional GRU; whole (small) sequence resident in VMEM."""
    T, Bp, Hp = x_ref.shape
    G = 3 * Hp                                 # r|z|n, each in its own 128-lane stripe

    # ---- Hoisted input projection: one MXU matmul for both directions, all timesteps ----
    x2d = x_ref[...].reshape(T * Bp, Hp)                                   # (T*Bp, Hp)
    gi = jnp.dot(x2d, wih_ref[...], preferred_element_type=jnp.float32)   # (T*Bp, 6*Hp)
    gi = gi + bih_ref[...]
    gif_ref[...] = gi[:, :G].reshape(T, Bp, G)                             # forward gates
    gib_ref[...] = gi[:, G:].reshape(T, Bp, G)                             # backward gates

    lens = len_ref[...]                                                    # (Bp, 1) int32

    def gru_step(gi_t, h, whh_ref, bhh_ref):
        # PyTorch GRUCell math; only the recurrent h @ whh stays on the serial chain.
        gh = jnp.dot(h, whh_ref[...], preferred_element_type=jnp.float32) + bhh_ref[...]
        r = jax.nn.sigmoid(gi_t[:, 0:Hp] + gh[:, 0:Hp])
        z = jax.nn.sigmoid(gi_t[:, Hp:2 * Hp] + gh[:, Hp:2 * Hp])
        n = jnp.tanh(gi_t[:, 2 * Hp:3 * Hp] + r * gh[:, 2 * Hp:3 * Hp])
        return (1.0 - z) * n + z * h

    h0 = jnp.zeros((Bp, Hp), jnp.float32)

    # ---- Fused forward/backward recurrence (two independent chains per iteration) ----
    def body(i, carry):
        h_f, h_b = carry
        tf = i                      # forward time index
        tb = T - 1 - i              # backward time index

        # forward direction: write masked output straight to the final slab
        m_f = lens > tf                                                    # (Bp, 1) bool
        hf_new = gru_step(gif_ref[tf], h_f, whh_f_ref, bhh_f_ref)
        h_f = jnp.where(m_f, hf_new, h_f)                                  # freeze past seq end
        out_ref[tf] = jnp.where(m_f, h_f, 0.0)                             # zero padded slots

        # backward direction: independent chain, goes to scratch (summed below)
        m_b = lens > tb
        hb_new = gru_step(gib_ref[tb], h_b, whh_b_ref, bhh_b_ref)
        h_b = jnp.where(m_b, hb_new, h_b)
        outb_ref[tb] = jnp.where(m_b, h_b, 0.0)

        return (h_f, h_b)

    h_f, h_b = lax.fori_loop(0, T, body, (h0, h0), unroll=True)

    # single lane-dense finalize: out = fwd half + bwd half
    out_ref[...] = out_ref[...] + outb_ref[...]
    hid_ref[0] = h_f
    hid_ref[1] = h_b


def encoder_forward(input_seq, input_length, params):
    """Equivalent of Encoder.forward(input_seq, input_length, hidden=None)."""
    emb_table = params["embedding"]                    # (V, H)
    V, H = emb_table.shape
    T, B = input_seq.shape

    Hp = _round_up(H, _LANE)
    Bp = _round_up(B, _SUBLANE)
    G = 3 * Hp

    # --- Glue: embedding gather + zero-padding to hardware tiles ---
    emb_p = jnp.zeros((V, Hp), jnp.float32).at[:, :H].set(emb_table)
    x = jnp.take(emb_p, input_seq, axis=0)                                   # (T, B, Hp)
    x = jnp.zeros((T, Bp, Hp), jnp.float32).at[:, :B, :].set(x)              # (T, Bp, Hp)

    lens = jnp.zeros((Bp, 1), jnp.int32).at[:B, 0].set(input_length.astype(jnp.int32))

    # --- Pack weights so each gate lives in its own 128-lane stripe ---
    def pad_gates(w):        # (H, 3H) -> (Hp, 3*Hp)
        out = jnp.zeros((Hp, 3 * Hp), jnp.float32)
        for g in range(3):
            out = out.at[:H, g * Hp:g * Hp + H].set(w[:, g * H:(g + 1) * H])
        return out

    def pad_bias(b):         # (1, 3H) -> (1, 3*Hp)
        out = jnp.zeros((1, 3 * Hp), jnp.float32)
        for g in range(3):
            out = out.at[0, g * Hp:g * Hp + H].set(b[0, g * H:(g + 1) * H])
        return out

    wih = jnp.concatenate([pad_gates(params["wih_f"]), pad_gates(params["wih_b"])], axis=1)  # (Hp, 6Hp)
    bih = jnp.concatenate([pad_bias(params["bih_f"]), pad_bias(params["bih_b"])], axis=1)    # (1, 6Hp)
    whh_f = pad_gates(params["whh_f"]); bhh_f = pad_bias(params["bhh_f"])
    whh_b = pad_gates(params["whh_b"]); bhh_b = pad_bias(params["bhh_b"])

    vmem = pl.BlockSpec(memory_space=pltpu.MemorySpace.VMEM)
    kernel_in = (lens, x, wih, bih, whh_f, bhh_f, whh_b, bhh_b)

    out_p, hid_p = pl.pallas_call(
        _bigru_kernel,
        out_shape=(jax.ShapeDtypeStruct((T, Bp, Hp), jnp.float32),
                   jax.ShapeDtypeStruct((2, Bp, Hp), jnp.float32)),
        in_specs=[vmem] * len(kernel_in),
        out_specs=(vmem, vmem),
        scratch_shapes=[
            pltpu.VMEM((T, Bp, G), jnp.float32),    # hoisted forward input projections
            pltpu.VMEM((T, Bp, G), jnp.float32),    # hoisted backward input projections
            pltpu.VMEM((T, Bp, Hp), jnp.float32),   # backward outputs
        ],
    )(*kernel_in)

    # strip padding back to logical shapes
    return out_p[:, :B, :H], hid_p[:, :B, :H]


# ---------------------------------------------------------------------------
# Pure-JAX reference (same masked packed-sequence semantics) for verification.
# ---------------------------------------------------------------------------
def encoder_ref(input_seq, input_length, params):
    emb_table = params["embedding"]
    T, B = input_seq.shape
    H = emb_table.shape[1]
    x = jnp.take(emb_table, input_seq, axis=0)
    mask = (jnp.arange(T)[:, None] < input_length[None, :]).astype(jnp.float32)[..., None]

    def cell(x_t, h, wih, whh, bih, bhh):
        gi = x_t @ wih + bih
        gh = h @ whh + bhh
        r = jax.nn.sigmoid(gi[:, :H] + gh[:, :H])
        z = jax.nn.sigmoid(gi[:, H:2 * H] + gh[:, H:2 * H])
        n = jnp.tanh(gi[:, 2 * H:] + r * gh[:, 2 * H:])
        return (1.0 - z) * n + z * h

    out_f = []
    h = jnp.zeros((B, H), jnp.float32)
    for t in range(T):
        h_new = cell(x[t], h, params["wih_f"], params["whh_f"], params["bih_f"], params["bhh_f"])
        h = mask[t] * h_new + (1.0 - mask[t]) * h
        out_f.append(mask[t] * h)
    h_fwd = h

    out_b = [None] * T
    h = jnp.zeros((B, H), jnp.float32)
    for t in range(T - 1, -1, -1):
        h_new = cell(x[t], h, params["wih_b"], params["whh_b"], params["bih_b"], params["bhh_b"])
        h = mask[t] * h_new + (1.0 - mask[t]) * h
        out_b[t] = mask[t] * h
    h_bwd = h

    out_sum = jnp.stack(out_f) + jnp.stack(out_b)
    hidden = jnp.stack([h_fwd, h_bwd])
    return out_sum, hidden


def init_params(key, vocab_size, hidden_size):
    H = hidden_size
    k = 1.0 / jnp.sqrt(H)
    keys = jax.random.split(key, 9)
    u = lambda kk, shape: jax.random.uniform(kk, shape, jnp.float32, -k, k)
    params = {
        # nn.Embedding default init: N(0, 1)
        "embedding": jax.random.normal(keys[0], (vocab_size, H), jnp.float32),
        # PyTorch stores (3H, H); we keep the pre-transposed (H, 3H) layout, gate order r|z|n.
        "wih_f": u(keys[1], (H, 3 * H)),
        "whh_f": u(keys[2], (H, 3 * H)),
        "bih_f": u(keys[3], (1, 3 * H)),
        "bhh_f": u(keys[4], (1, 3 * H)),
        "wih_b": u(keys[5], (H, 3 * H)),
        "whh_b": u(keys[6], (H, 3 * H)),
        "bih_b": u(keys[7], (1, 3 * H)),
        "bhh_b": u(keys[8], (1, 3 * H)),
    }
    return params


if __name__ == "__main__":
    T, B, H, V = 8, 2, 32, 20     # seq_len, batch, hidden_size, vocab
    key = jax.random.PRNGKey(0)
    k_param, k_tok = jax.random.split(key)

    params = init_params(k_param, V, H)

    # Lengths sorted descending (pack_padded_sequence enforce_sorted=True).
    input_length = jnp.array([8, 5], dtype=jnp.int32)
    input_seq = jax.random.randint(k_tok, (T, B), 1, V, dtype=jnp.int32)
    # Zero out padded token positions (they are masked anyway).
    pad_mask = (jnp.arange(T)[:, None] < input_length[None, :])
    input_seq = jnp.where(pad_mask, input_seq, 0)

    out_sum, hidden = encoder_forward(input_seq, input_length, params)
    jax.block_until_ready((out_sum, hidden))

    ref_out, ref_hid = encoder_ref(input_seq, input_length, params)
    assert out_sum.shape == (T, B, H) and hidden.shape == (2, B, H)
    assert jnp.allclose(out_sum, ref_out, atol=1e-4, rtol=1e-4)
    assert jnp.allclose(hidden, ref_hid, atol=1e-4, rtol=1e-4)

    print("KERNEL_OK")
</pallas_src>

<mosaic_0001>
module attributes {stable_mosaic.version = 11 : i64} {
  func.func @_bigru_kernel(%arg0: memref<8x1xi32, #tpu.memory_space<vmem>>, %arg1: memref<8x8x128xf32, #tpu.memory_space<vmem>>, %arg2: memref<128x768xf32, #tpu.memory_space<vmem>>, %arg3: memref<1x768xf32, #tpu.memory_space<vmem>>, %arg4: memref<128x384xf32, #tpu.memory_space<vmem>>, %arg5: memref<1x384xf32, #tpu.memory_space<vmem>>, %arg6: memref<128x384xf32, #tpu.memory_space<vmem>>, %arg7: memref<1x384xf32, #tpu.memory_space<vmem>>, %arg8: memref<8x8x128xf32, #tpu.memory_space<vmem>>, %arg9: memref<2x8x128xf32, #tpu.memory_space<vmem>>, %arg10: memref<8x8x384xf32, #tpu.memory_space<vmem>>, %arg11: memref<8x8x384xf32, #tpu.memory_space<vmem>>, %arg12: memref<8x8x128xf32, #tpu.memory_space<vmem>>) attributes {dimension_semantics = [], scalar_prefetch = 0 : i64, scratch_operands = 3 : i64, tpu.core_type = #tpu.core_type<tc>} {
    %c0 = arith.constant 0 : index
    %c0_0 = arith.constant 0 : index
    %c0_1 = arith.constant 0 : index
    %0 = vector.load %arg1[%c0, %c0_0, %c0_1] : memref<8x8x128xf32, #tpu.memory_space<vmem>>, vector<8x8x128xf32>
    %1 = vector.shape_cast %0 : vector<8x8x128xf32> to vector<64x128xf32>
    %c0_2 = arith.constant 0 : index
    %c0_3 = arith.constant 0 : index
    %2 = vector.load %arg2[%c0_2, %c0_3] : memref<128x768xf32, #tpu.memory_space<vmem>>, vector<128x768xf32>
    %cst = arith.constant dense<0.000000e+00> : vector<64x768xf32>
    %3 = tpu.matmul %1, %2, %cst {dimension_numbers = #tpu.dot_dimension_numbers<[1], [0], [0], [1], [0, 0, 1, 1], [], []>} : vector<64x128xf32>, vector<128x768xf32>, vector<64x768xf32> -> vector<64x768xf32>
    %c0_4 = arith.constant 0 : index
    %c0_5 = arith.constant 0 : index
    %4 = vector.load %arg3[%c0_4, %c0_5] : memref<1x768xf32, #tpu.memory_space<vmem>>, vector<1x768xf32>
    %5 = vector.broadcast %4 : vector<1x768xf32> to vector<64x768xf32>
    %6 = arith.addf %3, %5 : vector<64x768xf32>
    %7 = vector.extract_strided_slice %6 {offsets = [0, 0], sizes = [64, 384], strides = [1, 1]} : vector<64x768xf32> to vector<64x384xf32>
    %8 = vector.shape_cast %7 : vector<64x384xf32> to vector<8x8x384xf32>
    %c0_6 = arith.constant 0 : index
    %c0_7 = arith.constant 0 : index
    %c0_8 = arith.constant 0 : index
    %9 = vector.load %arg10[%c0_6, %c0_7, %c0_8] : memref<8x8x384xf32, #tpu.memory_space<vmem>>, vector<8x8x384xf32>
    tpu.vector_store %arg10[%c0_6, %c0_7, %c0_8], %8 {strides = array<i32>} : memref<8x8x384xf32, #tpu.memory_space<vmem>>, vector<8x8x384xf32>,
    %10 = vector.extract_strided_slice %6 {offsets = [0, 384], sizes = [64, 384], strides = [1, 1]} : vector<64x768xf32> to vector<64x384xf32>
    %11 = vector.shape_cast %10 : vector<64x384xf32> to vector<8x8x384xf32>
    %c0_9 = arith.constant 0 : index
    %c0_10 = arith.constant 0 : index
    %c0_11 = arith.constant 0 : index
    %12 = vector.load %arg11[%c0_9, %c0_10, %c0_11] : memref<8x8x384xf32, #tpu.memory_space<vmem>>, vector<8x8x384xf32>
    tpu.vector_store %arg11[%c0_9, %c0_10, %c0_11], %11 {strides = array<i32>} : memref<8x8x384xf32, #tpu.memory_space<vmem>>, vector<8x8x384xf32>,
    %c0_12 = arith.constant 0 : index
    %c0_13 = arith.constant 0 : index
    %13 = vector.load %arg0[%c0_12, %c0_13] : memref<8x1xi32, #tpu.memory_space<vmem>>, vector<8x1xi32>
    %cst_14 = arith.constant 0.000000e+00 : f32
    %14 = vector.broadcast %cst_14 : f32 to vector<8x128xf32>
    %c0_i32 = arith.constant 0 : i32
    %c7_i32 = arith.constant 7 : i32
    %15 = arith.subi %c7_i32, %c0_i32 : i32
    %16 = vector.broadcast %c0_i32 : i32 to vector<8x1xi32>
    %17 = arith.cmpi sgt, %13, %16 : vector<8x1xi32>
    %18 = arith.index_cast %c0_i32 : i32 to index
    %c0_15 = arith.constant 0 : index
    %c0_16 = arith.constant 0 : index
    %19 = vector.load %arg10[%18, %c0_15, %c0_16] : memref<8x8x384xf32, #tpu.memory_space<vmem>>, vector<1x8x384xf32>
    %20 = vector.shape_cast %19 : vector<1x8x384xf32> to vector<8x384xf32>
    %c0_17 = arith.constant 0 : index
    %c0_18 = arith.constant 0 : index
    %21 = vector.load %arg4[%c0_17, %c0_18] : memref<128x384xf32, #tpu.memory_space<vmem>>, vector<128x384xf32>
    %cst_19 = arith.constant dense<0.000000e+00> : vector<8x384xf32>
    %22 = tpu.matmul %14, %21, %cst_19 {dimension_numbers = #tpu.dot_dimension_numbers<[1], [0], [0], [1], [0, 0, 1, 1], [], []>} : vector<8x128xf32>, vector<128x384xf32>, vector<8x384xf32> -> vector<8x384xf32>
    %c0_20 = arith.constant 0 : index
    %c0_21 = arith.constant 0 : index
    %23 = vector.load %arg5[%c0_20, %c0_21] : memref<1x384xf32, #tpu.memory_space<vmem>>, vector<1x384xf32>
    %24 = vector.broadcast %23 : vector<1x384xf32> to vector<8x384xf32>
    %25 = arith.addf %22, %24 : vector<8x384xf32>
    %26 = vector.extract_strided_slice %20 {offsets = [0, 0], sizes = [8, 128], strides = [1, 1]} : vector<8x384xf32> to vector<8x128xf32>
    %27 = vector.extract_strided_slice %25 {offsets = [0, 0], sizes = [8, 128], strides = [1, 1]} : vector<8x384xf32> to vector<8x128xf32>
    %28 = arith.addf %26, %27 : vector<8x128xf32>
    %29 = arith.negf %28 : vector<8x128xf32>
    %30 = math.exp %29 : vector<8x128xf32>
    %cst_22 = arith.constant 1.000000e+00 : f32
    %31 = vector.broadcast %cst_22 : f32 to vector<8x128xf32>
    %32 = arith.addf %31, %30 : vector<8x128xf32>
    %33 = arith.divf %31, %32 : vector<8x128xf32>
    %34 = vector.extract_strided_slice %20 {offsets = [0, 128], sizes = [8, 128], strides = [1, 1]} : vector<8x384xf32> to vector<8x128xf32>
    %35 = vector.extract_strided_slice %25 {offsets = [0, 128], sizes = [8, 128], strides = [1, 1]} : vector<8x384xf32> to vector<8x128xf32>
    %36 = arith.addf %34, %35 : vector<8x128xf32>
    %37 = arith.negf %36 : vector<8x128xf32>
    %38 = math.exp %37 : vector<8x128xf32>
    %cst_23 = arith.constant 1.000000e+00 : f32
    %39 = vector.broadcast %cst_23 : f32 to vector<8x128xf32>
    %40 = arith.addf %39, %38 : vector<8x128xf32>
    %41 = arith.divf %39, %40 : vector<8x128xf32>
    %42 = vector.extract_strided_slice %20 {offsets = [0, 256], sizes = [8, 128], strides = [1, 1]} : vector<8x384xf32> to vector<8x128xf32>
    %43 = vector.extract_strided_slice %25 {offsets = [0, 256], sizes = [8, 128], strides = [1, 1]} : vector<8x384xf32> to vector<8x128xf32>
    %44 = arith.mulf %33, %43 : vector<8x128xf32>
    %45 = arith.addf %42, %44 : vector<8x128xf32>
    %46 = math.tanh %45 : vector<8x128xf32>
    %cst_24 = arith.constant 1.000000e+00 : f32
    %47 = vector.broadcast %cst_24 : f32 to vector<8x128xf32>
    %48 = arith.subf %47, %41 : vector<8x128xf32>
    %49 = arith.mulf %48, %46 : vector<8x128xf32>
    %50 = arith.mulf %41, %14 : vector<8x128xf32>
    %51 = arith.addf %49, %50 : vector<8x128xf32>
    %52 = vector.shape_cast %17 : vector<8x1xi1> to vector<8x1xi1>
    %53 = vector.broadcast %52 : vector<8x1xi1> to vector<8x128xi1>
    %54 = arith.select %53, %51, %14 : vector<8x128xi1>, vector<8x128xf32>
    %cst_25 = arith.constant 0.000000e+00 : f32
    %55 = vector.shape_cast %17 : vector<8x1xi1> to vector<8x1xi1>
    %56 = vector.broadcast %55 : vector<8x1xi1> to vector<8x128xi1>
    %57 = vector.broadcast %cst_25 : f32 to vector<8x128xf32>
    %58 = arith.select %56, %54, %57 : vector<8x128xi1>, vector<8x128xf32>
    %59 = arith.index_cast %c0_i32 : i32 to index
    %c0_26 = arith.constant 0 : index
    %c0_27 = arith.constant 0 : index
    %60 = vector.load %arg8[%59, %c0_26, %c0_27] : memref<8x8x128xf32, #tpu.memory_space<vmem>>, vector<1x8x128xf32>
    %61 = vector.shape_cast %60 : vector<1x8x128xf32> to vector<8x128xf32>
    %62 = vector.shape_cast %58 : vector<8x128xf32> to vector<1x8x128xf32>
    tpu.vector_store %arg8[%59, %c0_26, %c0_27], %62 {strides = array<i32>} : memref<8x8x128xf32, #tpu.memory_space<vmem>>, vector<1x8x128xf32>,
    %63 = vector.broadcast %15 : i32 to vector<8x1xi32>
    %64 = arith.cmpi sgt, %13, %63 : vector<8x1xi32>
    %65 = arith.index_cast %15 : i32 to index
    %c0_28 = arith.constant 0 : index
    %c0_29 = arith.constant 0 : index
    %66 = vector.load %arg11[%65, %c0_28, %c0_29] : memref<8x8x384xf32, #tpu.memory_space<vmem>>, vector<1x8x384xf32>
    %67 = vector.shape_cast %66 : vector<1x8x384xf32> to vector<8x384xf32>
    %c0_30 = arith.constant 0 : index
    %c0_31 = arith.constant 0 : index
    %68 = vector.load %arg6[%c0_30, %c0_31] : memref<128x384xf32, #tpu.memory_space<vmem>>, vector<128x384xf32>
    %cst_32 = arith.constant dense<0.000000e+00> : vector<8x384xf32>
    %69 = tpu.matmul %14, %68, %cst_32 {dimension_numbers = #tpu.dot_dimension_numbers<[1], [0], [0], [1], [0, 0, 1, 1], [], []>} : vector<8x128xf32>, vector<128x384xf32>, vector<8x384xf32> -> vector<8x384xf32>
    %c0_33 = arith.constant 0 : index
    %c0_34 = arith.constant 0 : index
    %70 = vector.load %arg7[%c0_33, %c0_34] : memref<1x384xf32, #tpu.memory_space<vmem>>, vector<1x384xf32>
    %71 = vector.broadcast %70 : vector<1x384xf32> to vector<8x384xf32>
    %72 = arith.addf %69, %71 : vector<8x384xf32>
    %73 = vector.extract_strided_slice %67 {offsets = [0, 0], sizes = [8, 128], strides = [1, 1]} : vector<8x384xf32> to vector<8x128xf32>
    %74 = vector.extract_strided_slice %72 {offsets = [0, 0], sizes = [8, 128], strides = [1, 1]} : vector<8x384xf32> to vector<8x128xf32>
    %75 = arith.addf %73, %74 : vector<8x128xf32>
    %76 = arith.negf %75 : vector<8x128xf32>
    %77 = math.exp %76 : vector<8x128xf32>
    %cst_35 = arith.constant 1.000000e+00 : f32
    %78 = vector.broadcast %cst_35 : f32 to vector<8x128xf32>
    %79 = arith.addf %78, %77 : vector<8x128xf32>
    %80 = arith.divf %78, %79 : vector<8x128xf32>
    %81 = vector.extract_strided_slice %67 {offsets = [0, 128], sizes = [8, 128], strides = [1, 1]} : vector<8x384xf32> to vector<8x128xf32>
    %82 = vector.extract_strided_slice %72 {offsets = [0, 128], sizes = [8, 128], strides = [1, 1]} : vector<8x384xf32> to vector<8x128xf32>
    %83 = arith.addf %81, %82 : vector<8x128xf32>
    %84 = arith.negf %83 : vector<8x128xf32>
    %85 = math.exp %84 : vector<8x128xf32>
    %cst_36 = arith.constant 1.000000e+00 : f32
    %86 = vector.broadcast %cst_36 : f32 to vector<8x128xf32>
    %87 = arith.addf %86, %85 : vector<8x128xf32>
    %88 = arith.divf %86, %87 : vector<8x128xf32>
    %89 = vector.extract_strided_slice %67 {offsets = [0, 256], sizes = [8, 128], strides = [1, 1]} : vector<8x384xf32> to vector<8x128xf32>
    %90 = vector.extract_strided_slice %72 {offsets = [0, 256], sizes = [8, 128], strides = [1, 1]} : vector<8x384xf32> to vector<8x128xf32>
    %91 = arith.mulf %80, %90 : vector<8x128xf32>
    %92 = arith.addf %89, %91 : vector<8x128xf32>
    %93 = math.tanh %92 : vector<8x128xf32>
    %cst_37 = arith.constant 1.000000e+00 : f32
    %94 = vector.broadcast %cst_37 : f32 to vector<8x128xf32>
    %95 = arith.subf %94, %88 : vector<8x128xf32>
    %96 = arith.mulf %95, %93 : vector<8x128xf32>
    %97 = arith.mulf %88, %14 : vector<8x128xf32>
    %98 = arith.addf %96, %97 : vector<8x128xf32>
    %99 = vector.shape_cast %64 : vector<8x1xi1> to vector<8x1xi1>
    %100 = vector.broadcast %99 : vector<8x1xi1> to vector<8x128xi1>
    %101 = arith.select %100, %98, %14 : vector<8x128xi1>, vector<8x128xf32>
    %cst_38 = arith.constant 0.000000e+00 : f32
    %102 = vector.shape_cast %64 : vector<8x1xi1> to vector<8x1xi1>
    %103 = vector.broadcast %102 : vector<8x1xi1> to vector<8x128xi1>
    %104 = vector.broadcast %cst_38 : f32 to vector<8x128xf32>
    %105 = arith.select %103, %101, %104 : vector<8x128xi1>, vector<8x128xf32>
    %106 = arith.index_cast %15 : i32 to index
    %c0_39 = arith.constant 0 : index
    %c0_40 = arith.constant 0 : index
    %107 = vector.load %arg12[%106, %c0_39, %c0_40] : memref<8x8x128xf32, #tpu.memory_space<vmem>>, vector<1x8x128xf32>
    %108 = vector.shape_cast %107 : vector<1x8x128xf32> to vector<8x128xf32>
    %109 = vector.shape_cast %105 : vector<8x128xf32> to vector<1x8x128xf32>
    tpu.vector_store %arg12[%106, %c0_39, %c0_40], %109 {strides = array<i32>} : memref<8x8x128xf32, #tpu.memory_space<vmem>>, vector<1x8x128xf32>,
    %c1_i32 = arith.constant 1 : i32
    %c7_i32_41 = arith.constant 7 : i32
    %110 = arith.subi %c7_i32_41, %c1_i32 : i32
    %111 = vector.broadcast %c1_i32 : i32 to vector<8x1xi32>
    %112 = arith.cmpi sgt, %13, %111 : vector<8x1xi32>
    %113 = arith.index_cast %c1_i32 : i32 to index
    %c0_42 = arith.constant 0 : index
    %c0_43 = arith.constant 0 : index
    %114 = vector.load %arg10[%113, %c0_42, %c0_43] : memref<8x8x384xf32, #tpu.memory_space<vmem>>, vector<1x8x384xf32>
    %115 = vector.shape_cast %114 : vector<1x8x384xf32> to vector<8x384xf32>
    %c0_44 = arith.constant 0 : index
    %c0_45 = arith.constant 0 : index
    %116 = vector.load %arg4[%c0_44, %c0_45] : memref<128x384xf32, #tpu.memory_space<vmem>>, vector<128x384xf32>
    %cst_46 = arith.constant dense<0.000000e+00> : vector<8x384xf32>
    %117 = tpu.matmul %54, %116, %cst_46 {dimension_numbers = #tpu.dot_dimension_numbers<[1], [0], [0], [1], [0, 0, 1, 1], [], []>} : vector<8x128xf32>, vector<128x384xf32>, vector<8x384xf32> -> vector<8x384xf32>
    %c0_47 = arith.constant 0 : index
    %c0_48 = arith.constant 0 : index
    %118 = vector.load %arg5[%c0_47, %c0_48] : memref<1x384xf32, #tpu.memory_space<vmem>>, vector<1x384xf32>
    %119 = vector.broadcast %118 : vector<1x384xf32> to vector<8x384xf32>
    %120 = arith.addf %117, %119 : vector<8x384xf32>
    %121 = vector.extract_strided_slice %115 {offsets = [0, 0], sizes = [8, 128], strides = [1, 1]} : vector<8x384xf32> to vector<8x128xf32>
    %122 = vector.extract_strided_slice %120 {offsets = [0, 0], sizes = [8, 128], strides = [1, 1]} : vector<8x384xf32> to vector<8x128xf32>
    %123 = arith.addf %121, %122 : vector<8x128xf32>
    %124 = arith.negf %123 : vector<8x128xf32>
    %125 = math.exp %124 : vector<8x128xf32>
    %cst_49 = arith.constant 1.000000e+00 : f32
    %126 = vector.broadcast %cst_49 : f32 to vector<8x128xf32>
    %127 = arith.addf %126, %125 : vector<8x128xf32>
    %128 = arith.divf %126, %127 : vector<8x128xf32>
    %129 = vector.extract_strided_slice %115 {offsets = [0, 128], sizes = [8, 128], strides = [1, 1]} : vector<8x384xf32> to vector<8x128xf32>
    %130 = vector.extract_strided_slice %120 {offsets = [0, 128], sizes = [8, 128], strides = [1, 1]} : vector<8x384xf32> to vector<8x128xf32>
    %131 = arith.addf %129, %130 : vector<8x128xf32>
    %132 = arith.negf %131 : vector<8x128xf32>
    %133 = math.exp %132 : vector<8x128xf32>
    %cst_50 = arith.constant 1.000000e+00 : f32
    %134 = vector.broadcast %cst_50 : f32 to vector<8x128xf32>
    %135 = arith.addf %134, %133 : vector<8x128xf32>
    %136 = arith.divf %134, %135 : vector<8x128xf32>
    %137 = vector.extract_strided_slice %115 {offsets = [0, 256], sizes = [8, 128], strides = [1, 1]} : vector<8x384xf32> to vector<8x128xf32>
    %138 = vector.extract_strided_slice %120 {offsets = [0, 256], sizes = [8, 128], strides = [1, 1]} : vector<8x384xf32> to vector<8x128xf32>
    %139 = arith.mulf %128, %138 : vector<8x128xf32>
    %140 = arith.addf %137, %139 : vector<8x128xf32>
    %141 = math.tanh %140 : vector<8x128xf32>
    %cst_51 = arith.constant 1.000000e+00 : f32
    %142 = vector.broadcast %cst_51 : f32 to vector<8x128xf32>
    %143 = arith.subf %142, %136 : vector<8x128xf32>
    %144 = arith.mulf %143, %141 : vector<8x128xf32>
    %145 = arith.mulf %136, %54 : vector<8x128xf32>
    %146 = arith.addf %144, %145 : vector<8x128xf32>
    %147 = vector.shape_cast %112 : vector<8x1xi1> to vector<8x1xi1>
    %148 = vector.broadcast %147 : vector<8x1xi1> to vector<8x128xi1>
    %149 = arith.select %148, %146, %54 : vector<8x128xi1>, vector<8x128xf32>
    %cst_52 = arith.constant 0.000000e+00 : f32
    %150 = vector.shape_cast %112 : vector<8x1xi1> to vector<8x1xi1>
    %151 = vector.broadcast %150 : vector<8x1xi1> to vector<8x128xi1>
    %152 = vector.broadcast %cst_52 : f32 to vector<8x128xf32>
    %153 = arith.select %151, %149, %152 : vector<8x128xi1>, vector<8x128xf32>
    %154 = arith.index_cast %c1_i32 : i32 to index
    %c0_53 = arith.constant 0 : index
    %c0_54 = arith.constant 0 : index
    %155 = vector.load %arg8[%154, %c0_53, %c0_54] : memref<8x8x128xf32, #tpu.memory_space<vmem>>, vector<1x8x128xf32>
    %156 = vector.shape_cast %155 : vector<1x8x128xf32> to vector<8x128xf32>
    %157 = vector.shape_cast %153 : vector<8x128xf32> to vector<1x8x128xf32>
    tpu.vector_store %arg8[%154, %c0_53, %c0_54], %157 {strides = array<i32>} : memref<8x8x128xf32, #tpu.memory_space<vmem>>, vector<1x8x128xf32>,
    %158 = vector.broadcast %110 : i32 to vector<8x1xi32>
    %159 = arith.cmpi sgt, %13, %158 : vector<8x1xi32>
    %160 = arith.index_cast %110 : i32 to index
    %c0_55 = arith.constant 0 : index
    %c0_56 = arith.constant 0 : index
    %161 = vector.load %arg11[%160, %c0_55, %c0_56] : memref<8x8x384xf32, #tpu.memory_space<vmem>>, vector<1x8x384xf32>
    %162 = vector.shape_cast %161 : vector<1x8x384xf32> to vector<8x384xf32>
    %c0_57 = arith.constant 0 : index
    %c0_58 = arith.constant 0 : index
    %163 = vector.load %arg6[%c0_57, %c0_58] : memref<128x384xf32, #tpu.memory_space<vmem>>, vector<128x384xf32>
    %cst_59 = arith.constant dense<0.000000e+00> : vector<8x384xf32>
    %164 = tpu.matmul %101, %163, %cst_59 {dimension_numbers = #tpu.dot_dimension_numbers<[1], [0], [0], [1], [0, 0, 1, 1], [], []>} : vector<8x128xf32>, vector<128x384xf32>, vector<8x384xf32> -> vector<8x384xf32>
    %c0_60 = arith.constant 0 : index
    %c0_61 = arith.constant 0 : index
    %165 = vector.load %arg7[%c0_60, %c0_61] : memref<1x384xf32, #tpu.memory_space<vmem>>, vector<1x384xf32>
    %166 = vector.broadcast %165 : vector<1x384xf32> to vector<8x384xf32>
    %167 = arith.addf %164, %166 : vector<8x384xf32>
    %168 = vector.extract_strided_slice %162 {offsets = [0, 0], sizes = [8, 128], strides = [1, 1]} : vector<8x384xf32> to vector<8x128xf32>
    %169 = vector.extract_strided_slice %167 {offsets = [0, 0], sizes = [8, 128], strides = [1, 1]} : vector<8x384xf32> to vector<8x128xf32>
    %170 = arith.addf %168, %169 : vector<8x128xf32>
    %171 = arith.negf %170 : vector<8x128xf32>
    %172 = math.exp %171 : vector<8x128xf32>
    %cst_62 = arith.constant 1.000000e+00 : f32
    %173 = vector.broadcast %cst_62 : f32 to vector<8x128xf32>
    %174 = arith.addf %173, %172 : vector<8x128xf32>
    %175 = arith.divf %173, %174 : vector<8x128xf32>
    %176 = vector.extract_strided_slice %162 {offsets = [0, 128], sizes = [8, 128], strides = [1, 1]} : vector<8x384xf32> to vector<8x128xf32>
    %177 = vector.extract_strided_slice %167 {offsets = [0, 128], sizes = [8, 128], strides = [1, 1]} : vector<8x384xf32> to vector<8x128xf32>
    %178 = arith.addf %176, %177 : vector<8x128xf32>
    %179 = arith.negf %178 : vector<8x128xf32>
    %180 = math.exp %179 : vector<8x128xf32>
    %cst_63 = arith.constant 1.000000e+00 : f32
    %181 = vector.broadcast %cst_63 : f32 to vector<8x128xf32>
    %182 = arith.addf %181, %180 : vector<8x128xf32>
    %183 = arith.divf %181, %182 : vector<8x128xf32>
    %184 = vector.extract_strided_slice %162 {offsets = [0, 256], sizes = [8, 128], strides = [1, 1]} : vector<8x384xf32> to vector<8x128xf32>
    %185 = vector.extract_strided_slice %167 {offsets = [0, 256], sizes = [8, 128], strides = [1, 1]} : vector<8x384xf32> to vector<8x128xf32>
    %186 = arith.mulf %175, %185 : vector<8x128xf32>
    %187 = arith.addf %184, %186 : vector<8x128xf32>
    %188 = math.tanh %187 : vector<8x128xf32>
    %cst_64 = arith.constant 1.000000e+00 : f32
    %189 = vector.broadcast %cst_64 : f32 to vector<8x128xf32>
    %190 = arith.subf %189, %183 : vector<8x128xf32>
    %191 = arith.mulf %190, %188 : vector<8x128xf32>
    %192 = arith.mulf %183, %101 : vector<8x128xf32>
    %193 = arith.addf %191, %192 : vector<8x128xf32>
    %194 = vector.shape_cast %159 : vector<8x1xi1> to vector<8x1xi1>
    %195 = vector.broadcast %194 : vector<8x1xi1> to vector<8x128xi1>
    %196 = arith.select %195, %193, %101 : vector<8x128xi1>, vector<8x128xf32>
    %cst_65 = arith.constant 0.000000e+00 : f32
    %197 = vector.shape_cast %159 : vector<8x1xi1> to vector<8x1xi1>
    %198 = vector.broadcast %197 : vector<8x1xi1> to vector<8x128xi1>
    %199 = vector.broadcast %cst_65 : f32 to vector<8x128xf32>
    %200 = arith.select %198, %196, %199 : vector<8x128xi1>, vector<8x128xf32>
    %201 = arith.index_cast %110 : i32 to index
    %c0_66 = arith.constant 0 : index
    %c0_67 = arith.constant 0 : index
    %202 = vector.load %arg12[%201, %c0_66, %c0_67] : memref<8x8x128xf32, #tpu.memory_space<vmem>>, vector<1x8x128xf32>
    %203 = vector.shape_cast %202 : vector<1x8x128xf32> to vector<8x128xf32>
    %204 = vector.shape_cast %200 : vector<8x128xf32> to vector<1x8x128xf32>
    tpu.vector_store %arg12[%201, %c0_66, %c0_67], %204 {strides = array<i32>} : memref<8x8x128xf32, #tpu.memory_space<vmem>>, vector<1x8x128xf32>,
    %c2_i32 = arith.constant 2 : i32
    %c7_i32_68 = arith.constant 7 : i32
    %205 = arith.subi %c7_i32_68, %c2_i32 : i32
    %206 = vector.broadcast %c2_i32 : i32 to vector<8x1xi32>
    %207 = arith.cmpi sgt, %13, %206 : vector<8x1xi32>
    %208 = arith.index_cast %c2_i32 : i32 to index
    %c0_69 = arith.constant 0 : index
    %c0_70 = arith.constant 0 : index
    %209 = vector.load %arg10[%208, %c0_69, %c0_70] : memref<8x8x384xf32, #tpu.memory_space<vmem>>, vector<1x8x384xf32>
    %210 = vector.shape_cast %209 : vector<1x8x384xf32> to vector<8x384xf32>
    %c0_71 = arith.constant 0 : index
    %c0_72 = arith.constant 0 : index
    %211 = vector.load %arg4[%c0_71, %c0_72] : memref<128x384xf32, #tpu.memory_space<vmem>>, vector<128x384xf32>
    %cst_73 = arith.constant dense<0.000000e+00> : vector<8x384xf32>
    %212 = tpu.matmul %149, %211, %cst_73 {dimension_numbers = #tpu.dot_dimension_numbers<[1], [0], [0], [1], [0, 0, 1, 1], [], []>} : vector<8x128xf32>, vector<128x384xf32>, vector<8x384xf32> -> vector<8x384xf32>
    %c0_74 = arith.constant 0 : index
    %c0_75 = arith.constant 0 : index
    %213 = vector.load %arg5[%c0_74, %c0_75] : memref<1x384xf32, #tpu.memory_space<vmem>>, vector<1x384xf32>
    %214 = vector.broadcast %213 : vector<1x384xf32> to vector<8x384xf32>
    %215 = arith.addf %212, %214 : vector<8x384xf32>
    %216 = vector.extract_strided_slice %210 {offsets = [0, 0], sizes = [8, 128], strides = [1, 1]} : vector<8x384xf32> to vector<8x128xf32>
    %217 = vector.extract_strided_slice %215 {offsets = [0, 0], sizes = [8, 128], strides = [1, 1]} : vector<8x384xf32> to vector<8x128xf32>
    %218 = arith.addf %216, %217 : vector<8x128xf32>
    %219 = arith.negf %218 : vector<8x128xf32>
    %220 = math.exp %219 : vector<8x128xf32>
    %cst_76 = arith.constant 1.000000e+00 : f32
    %221 = vector.broadcast %cst_76 : f32 to vector<8x128xf32>
    %222 = arith.addf %221, %220 : vector<8x128xf32>
    %223 = arith.divf %221, %222 : vector<8x128xf32>
    %224 = vector.extract_strided_slice %210 {offsets = [0, 128], sizes = [8, 128], strides = [1, 1]} : vector<8x384xf32> to vector<8x128xf32>
    %225 = vector.extract_strided_slice %215 {offsets = [0, 128], sizes = [8, 128], strides = [1, 1]} : vector<8x384xf32> to vector<8x128xf32>
    %226 = arith.addf %224, %225 : vector<8x128xf32>
    %227 = arith.negf %226 : vector<8x128xf32>
    %228 = math.exp %227 : vector<8x128xf32>
    %cst_77 = arith.constant 1.000000e+00 : f32
    %229 = vector.broadcast %cst_77 : f32 to vector<8x128xf32>
    %230 = arith.addf %229, %228 : vector<8x128xf32>
    %231 = arith.divf %229, %230 : vector<8x128xf32>
    %232 = vector.extract_strided_slice %210 {offsets = [0, 256], sizes = [8, 128], strides = [1, 1]} : vector<8x384xf32> to vector<8x128xf32>
    %233 = vector.extract_strided_slice %215 {offsets = [0, 256], sizes = [8, 128], strides = [1, 1]} : vector<8x384xf32> to vector<8x128xf32>
    %234 = arith.mulf %223, %233 : vector<8x128xf32>
    %235 = arith.addf %232, %234 : vector<8x128xf32>
    %236 = math.tanh %235 : vector<8x128xf32>
    %cst_78 = arith.constant 1.000000e+00 : f32
    %237 = vector.broadcast %cst_78 : f32 to vector<8x128xf32>
    %238 = arith.subf %237, %231 : vector<8x128xf32>
    %239 = arith.mulf %238, %236 : vector<8x128xf32>
    %240 = arith.mulf %231, %149 : vector<8x128xf32>
    %241 = arith.addf %239, %240 : vector<8x128xf32>
    %242 = vector.shape_cast %207 : vector<8x1xi1> to vector<8x1xi1>
    %243 = vector.broadcast %242 : vector<8x1xi1> to vector<8x128xi1>
    %244 = arith.select %243, %241, %149 : vector<8x128xi1>, vector<8x128xf32>
    %cst_79 = arith.constant 0.000000e+00 : f32
    %245 = vector.shape_cast %207 : vector<8x1xi1> to vector<8x1xi1>
    %246 = vector.broadcast %245 : vector<8x1xi1> to vector<8x128xi1>
    %247 = vector.broadcast %cst_79 : f32 to vector<8x128xf32>
    %248 = arith.select %246, %244, %247 : vector<8x128xi1>, vector<8x128xf32>
    %249 = arith.index_cast %c2_i32 : i32 to index
    %c0_80 = arith.constant 0 : index
    %c0_81 = arith.constant 0 : index
    %250 = vector.load %arg8[%249, %c0_80, %c0_81] : memref<8x8x128xf32, #tpu.memory_space<vmem>>, vector<1x8x128xf32>
    %251 = vector.shape_cast %250 : vector<1x8x128xf32> to vector<8x128xf32>
    %252 = vector.shape_cast %248 : vector<8x128xf32> to vector<1x8x128xf32>
    tpu.vector_store %arg8[%249, %c0_80, %c0_81], %252 {strides = array<i32>} : memref<8x8x128xf32, #tpu.memory_space<vmem>>, vector<1x8x128xf32>,
    %253 = vector.broadcast %205 : i32 to vector<8x1xi32>
    %254 = arith.cmpi sgt, %13, %253 : vector<8x1xi32>
    %255 = arith.index_cast %205 : i32 to index
    %c0_82 = arith.constant 0 : index
    %c0_83 = arith.constant 0 : index
    %256 = vector.load %arg11[%255, %c0_82, %c0_83] : memref<8x8x384xf32, #tpu.memory_space<vmem>>, vector<1x8x384xf32>
    %257 = vector.shape_cast %256 : vector<1x8x384xf32> to vector<8x384xf32>
    %c0_84 = arith.constant 0 : index
    %c0_85 = arith.constant 0 : index
    %258 = vector.load %arg6[%c0_84, %c0_85] : memref<128x384xf32, #tpu.memory_space<vmem>>, vector<128x384xf32>
    %cst_86 = arith.constant dense<0.000000e+00> : vector<8x384xf32>
    %259 = tpu.matmul %196, %258, %cst_86 {dimension_numbers = #tpu.dot_dimension_numbers<[1], [0], [0], [1], [0, 0, 1, 1], [], []>} : vector<8x128xf32>, vector<128x384xf32>, vector<8x384xf32> -> vector<8x384xf32>
    %c0_87 = arith.constant 0 : index
    %c0_88 = arith.constant 0 : index
    %260 = vector.load %arg7[%c0_87, %c0_88] : memref<1x384xf32, #tpu.memory_space<vmem>>, vector<1x384xf32>
    %261 = vector.broadcast %260 : vector<1x384xf32> to vector<8x384xf32>
    %262 = arith.addf %259, %261 : vector<8x384xf32>
    %263 = vector.extract_strided_slice %257 {offsets = [0, 0], sizes = [8, 128], strides = [1, 1]} : vector<8x384xf32> to vector<8x128xf32>
    %264 = vector.extract_strided_slice %262 {offsets = [0, 0], sizes = [8, 128], strides = [1, 1]} : vector<8x384xf32> to vector<8x128xf32>
    %265 = arith.addf %263, %264 : vector<8x128xf32>
    %266 = arith.negf %265 : vector<8x128xf32>
    %267 = math.exp %266 : vector<8x128xf32>
    %cst_89 = arith.constant 1.000000e+00 : f32
    %268 = vector.broadcast %cst_89 : f32 to vector<8x128xf32>
    %269 = arith.addf %268, %267 : vector<8x128xf32>
    %270 = arith.divf %268, %269 : vector<8x128xf32>
    %271 = vector.extract_strided_slice %257 {offsets = [0, 128], sizes = [8, 128], strides = [1, 1]} : vector<8x384xf32> to vector<8x128xf32>
    %272 = vector.extract_strided_slice %262 {offsets = [0, 128], sizes = [8, 128], strides = [1, 1]} : vector<8x384xf32> to vector<8x128xf32>
    %273 = arith.addf %271, %272 : vector<8x128xf32>
    %274 = arith.negf %273 : vector<8x128xf32>
    %275 = math.exp %274 : vector<8x128xf32>
    %cst_90 = arith.constant 1.000000e+00 : f32
    %276 = vector.broadcast %cst_90 : f32 to vector<8x128xf32>
    %277 = arith.addf %276, %275 : vector<8x128xf32>
    %278 = arith.divf %276, %277 : vector<8x128xf32>
    %279 = vector.extract_strided_slice %257 {offsets = [0, 256], sizes = [8, 128], strides = [1, 1]} : vector<8x384xf32> to vector<8x128xf32>
    %280 = vector.extract_strided_slice %262 {offsets = [0, 256], sizes = [8, 128], strides = [1, 1]} : vector<8x384xf32> to vector<8x128xf32>
    %281 = arith.mulf %270, %280 : vector<8x128xf32>
    %282 = arith.addf %279, %281 : vector<8x128xf32>
    %283 = math.tanh %282 : vector<8x128xf32>
    %cst_91 = arith.constant 1.000000e+00 : f32
    %284 = vector.broadcast %cst_91 : f32 to vector<8x128xf32>
    %285 = arith.subf %284, %278 : vector<8x128xf32>
    %286 = arith.mulf %285, %283 : vector<8x128xf32>
    %287 = arith.mulf %278, %196 : vector<8x128xf32>
    %288 = arith.addf %286, %287 : vector<8x128xf32>
    %289 = vector.shape_cast %254 : vector<8x1xi1> to vector<8x1xi1>
    %290 = vector.broadcast %289 : vector<8x1xi1> to vector<8x128xi1>
    %291 = arith.select %290, %288, %196 : vector<8x128xi1>, vector<8x128xf32>
    %cst_92 = arith.constant 0.000000e+00 : f32
    %292 = vector.shape_cast %254 : vector<8x1xi1> to vector<8x1xi1>
    %293 = vector.broadcast %292 : vector<8x1xi1> to vector<8x128xi1>
    %294 = vector.broadcast %cst_92 : f32 to vector<8x128xf32>
    %295 = arith.select %293, %291, %294 : vector<8x128xi1>, vector<8x128xf32>
    %296 = arith.index_cast %205 : i32 to index
    %c0_93 = arith.constant 0 : index
    %c0_94 = arith.constant 0 : index
    %297 = vector.load %arg12[%296, %c0_93, %c0_94] : memref<8x8x128xf32, #tpu.memory_space<vmem>>, vector<1x8x128xf32>
    %298 = vector.shape_cast %297 : vector<1x8x128xf32> to vector<8x128xf32>
    %299 = vector.shape_cast %295 : vector<8x128xf32> to vector<1x8x128xf32>
    tpu.vector_store %arg12[%296, %c0_93, %c0_94], %299 {strides = array<i32>} : memref<8x8x128xf32, #tpu.memory_space<vmem>>, vector<1x8x128xf32>,
    %c3_i32 = arith.constant 3 : i32
    %c7_i32_95 = arith.constant 7 : i32
    %300 = arith.subi %c7_i32_95, %c3_i32 : i32
    %301 = vector.broadcast %c3_i32 : i32 to vector<8x1xi32>
    %302 = arith.cmpi sgt, %13, %301 : vector<8x1xi32>
    %303 = arith.index_cast %c3_i32 : i32 to index
    %c0_96 = arith.constant 0 : index
    %c0_97 = arith.constant 0 : index
    %304 = vector.load %arg10[%303, %c0_96, %c0_97] : memref<8x8x384xf32, #tpu.memory_space<vmem>>, vector<1x8x384xf32>
    %305 = vector.shape_cast %304 : vector<1x8x384xf32> to vector<8x384xf32>
    %c0_98 = arith.constant 0 : index
    %c0_99 = arith.constant 0 : index
    %306 = vector.load %arg4[%c0_98, %c0_99] : memref<128x384xf32, #tpu.memory_space<vmem>>, vector<128x384xf32>
    %cst_100 = arith.constant dense<0.000000e+00> : vector<8x384xf32>
    %307 = tpu.matmul %244, %306, %cst_100 {dimension_numbers = #tpu.dot_dimension_numbers<[1], [0], [0], [1], [0, 0, 1, 1], [], []>} : vector<8x128xf32>, vector<128x384xf32>, vector<8x384xf32> -> vector<8x384xf32>
    %c0_101 = arith.constant 0 : index
    %c0_102 = arith.constant 0 : index
    %308 = vector.load %arg5[%c0_101, %c0_102] : memref<1x384xf32, #tpu.memory_space<vmem>>, vector<1x384xf32>
    %309 = vector.broadcast %308 : vector<1x384xf32> to vector<8x384xf32>
    %310 = arith.addf %307, %309 : vector<8x384xf32>
    %311 = vector.extract_strided_slice %305 {offsets = [0, 0], sizes = [8, 128], strides = [1, 1]} : vector<8x384xf32> to vector<8x128xf32>
    %312 = vector.extract_strided_slice %310 {offsets = [0, 0], sizes = [8, 128], strides = [1, 1]} : vector<8x384xf32> to vector<8x128xf32>
    %313 = arith.addf %311, %312 : vector<8x128xf32>
    %314 = arith.negf %313 : vector<8x128xf32>
    %315 = math.exp %314 : vector<8x128xf32>
    %cst_103 = arith.constant 1.000000e+00 : f32
    %316 = vector.broadcast %cst_103 : f32 to vector<8x128xf32>
    %317 = arith.addf %316, %315 : vector<8x128xf32>
    %318 = arith.divf %316, %317 : vector<8x128xf32>
    %319 = vector.extract_strided_slice %305 {offsets = [0, 128], sizes = [8, 128], strides = [1, 1]} : vector<8x384xf32> to vector<8x128xf32>
    %320 = vector.extract_strided_slice %310 {offsets = [0, 128], sizes = [8, 128], strides = [1, 1]} : vector<8x384xf32> to vector<8x128xf32>
    %321 = arith.addf %319, %320 : vector<8x128xf32>
    %322 = arith.negf %321 : vector<8x128xf32>
    %323 = math.exp %322 : vector<8x128xf32>
    %cst_104 = arith.constant 1.000000e+00 : f32
    %324 = vector.broadcast %cst_104 : f32 to vector<8x128xf32>
    %325 = arith.addf %324, %323 : vector<8x128xf32>
    %326 = arith.divf %324, %325 : vector<8x128xf32>
    %327 = vector.extract_strided_slice %305 {offsets = [0, 256], sizes = [8, 128], strides = [1, 1]} : vector<8x384xf32> to vector<8x128xf32>
    %328 = vector.extract_strided_slice %310 {offsets = [0, 256], sizes = [8, 128], strides = [1, 1]} : vector<8x384xf32> to vector<8x128xf32>
    %329 = arith.mulf %318, %328 : vector<8x128xf32>
    %330 = arith.addf %327, %329 : vector<8x128xf32>
    %331 = math.tanh %330 : vector<8x128xf32>
    %cst_105 = arith.constant 1.000000e+00 : f32
    %332 = vector.broadcast %cst_105 : f32 to vector<8x128xf32>
    %333 = arith.subf %332, %326 : vector<8x128xf32>
    %334 = arith.mulf %333, %331 : vector<8x128xf32>
    %335 = arith.mulf %326, %244 : vector<8x128xf32>
    %336 = arith.addf %334, %335 : vector<8x128xf32>
    %337 = vector.shape_cast %302 : vector<8x1xi1> to vector<8x1xi1>
    %338 = vector.broadcast %337 : vector<8x1xi1> to vector<8x128xi1>
    %339 = arith.select %338, %336, %244 : vector<8x128xi1>, vector<8x128xf32>
    %cst_106 = arith.constant 0.000000e+00 : f32
    %340 = vector.shape_cast %302 : vector<8x1xi1> to vector<8x1xi1>
    %341 = vector.broadcast %340 : vector<8x1xi1> to vector<8x128xi1>
    %342 = vector.broadcast %cst_106 : f32 to vector<8x128xf32>
    %343 = arith.select %341, %339, %342 : vector<8x128xi1>, vector<8x128xf32>
    %344 = arith.index_cast %c3_i32 : i32 to index
    %c0_107 = arith.constant 0 : index
    %c0_108 = arith.constant 0 : index
    %345 = vector.load %arg8[%344, %c0_107, %c0_108] : memref<8x8x128xf32, #tpu.memory_space<vmem>>, vector<1x8x128xf32>
    %346 = vector.shape_cast %345 : vector<1x8x128xf32> to vector<8x128xf32>
    %347 = vector.shape_cast %343 : vector<8x128xf32> to vector<1x8x128xf32>
    tpu.vector_store %arg8[%344, %c0_107, %c0_108], %347 {strides = array<i32>} : memref<8x8x128xf32, #tpu.memory_space<vmem>>, vector<1x8x128xf32>,
    %348 = vector.broadcast %300 : i32 to vector<8x1xi32>
    %349 = arith.cmpi sgt, %13, %348 : vector<8x1xi32>
    %350 = arith.index_cast %300 : i32 to index
    %c0_109 = arith.constant 0 : index
    %c0_110 = arith.constant 0 : index
    %351 = vector.load %arg11[%350, %c0_109, %c0_110] : memref<8x8x384xf32, #tpu.memory_space<vmem>>, vector<1x8x384xf32>
    %352 = vector.shape_cast %351 : vector<1x8x384xf32> to vector<8x384xf32>
    %c0_111 = arith.constant 0 : index
    %c0_112 = arith.constant 0 : index
    %353 = vector.load %arg6[%c0_111, %c0_112] : memref<128x384xf32, #tpu.memory_space<vmem>>, vector<128x384xf32>
    %cst_113 = arith.constant dense<0.000000e+00> : vector<8x384xf32>
    %354 = tpu.matmul %291, %353, %cst_113 {dimension_numbers = #tpu.dot_dimension_numbers<[1], [0], [0], [1], [0, 0, 1, 1], [], []>} : vector<8x128xf32>, vector<128x384xf32>, vector<8x384xf32> -> vector<8x384xf32>
    %c0_114 = arith.constant 0 : index
    %c0_115 = arith.constant 0 : index
    %355 = vector.load %arg7[%c0_114, %c0_115] : memref<1x384xf32, #tpu.memory_space<vmem>>, vector<1x384xf32>
    %356 = vector.broadcast %355 : vector<1x384xf32> to vector<8x384xf32>
    %357 = arith.addf %354, %356 : vector<8x384xf32>
    %358 = vector.extract_strided_slice %352 {offsets = [0, 0], sizes = [8, 128], strides = [1, 1]} : vector<8x384xf32> to vector<8x128xf32>
    %359 = vector.extract_strided_slice %357 {offsets = [0, 0], sizes = [8, 128], strides = [1, 1]} : vector<8x384xf32> to vector<8x128xf32>
    %360 = arith.addf %358, %359 : vector<8x128xf32>
    %361 = arith.negf %360 : vector<8x128xf32>
    %362 = math.exp %361 : vector<8x128xf32>
    %cst_116 = arith.constant 1.000000e+00 : f32
    %363 = vector.broadcast %cst_116 : f32 to vector<8x128xf32>
    %364 = arith.addf %363, %362 : vector<8x128xf32>
    %365 = arith.divf %363, %364 : vector<8x128xf32>
    %366 = vector.extract_strided_slice %352 {offsets = [0, 128], sizes = [8, 128], strides = [1, 1]} : vector<8x384xf32> to vector<8x128xf32>
    %367 = vector.extract_strided_slice %357 {offsets = [0, 128], sizes = [8, 128], strides = [1, 1]} : vector<8x384xf32> to vector<8x128xf32>
    %368 = arith.addf %366, %367 : vector<8x128xf32>
    %369 = arith.negf %368 : vector<8x128xf32>
    %370 = math.exp %369 : vector<8x128xf32>
    %cst_117 = arith.constant 1.000000e+00 : f32
    %371 = vector.broadcast %cst_117 : f32 to vector<8x128xf32>
    %372 = arith.addf %371, %370 : vector<8x128xf32>
    %373 = arith.divf %371, %372 : vector<8x128xf32>
    %374 = vector.extract_strided_slice %352 {offsets = [0, 256], sizes = [8, 128], strides = [1, 1]} : vector<8x384xf32> to vector<8x128xf32>
    %375 = vector.extract_strided_slice %357 {offsets = [0, 256], sizes = [8, 128], strides = [1, 1]} : vector<8x384xf32> to vector<8x128xf32>
    %376 = arith.mulf %365, %375 : vector<8x128xf32>
    %377 = arith.addf %374, %376 : vector<8x128xf32>
    %378 = math.tanh %377 : vector<8x128xf32>
    %cst_118 = arith.constant 1.000000e+00 : f32
    %379 = vector.broadcast %cst_118 : f32 to vector<8x128xf32>
    %380 = arith.subf %379, %373 : vector<8x128xf32>
    %381 = arith.mulf %380, %378 : vector<8x128xf32>
    %382 = arith.mulf %373, %291 : vector<8x128xf32>
    %383 = arith.addf %381, %382 : vector<8x128xf32>
    %384 = vector.shape_cast %349 : vector<8x1xi1> to vector<8x1xi1>
    %385 = vector.broadcast %384 : vector<8x1xi1> to vector<8x128xi1>
    %386 = arith.select %385, %383, %291 : vector<8x128xi1>, vector<8x128xf32>
    %cst_119 = arith.constant 0.000000e+00 : f32
    %387 = vector.shape_cast %349 : vector<8x1xi1> to vector<8x1xi1>
    %388 = vector.broadcast %387 : vector<8x1xi1> to vector<8x128xi1>
    %389 = vector.broadcast %cst_119 : f32 to vector<8x128xf32>
    %390 = arith.select %388, %386, %389 : vector<8x128xi1>, vector<8x128xf32>
    %391 = arith.index_cast %300 : i32 to index
    %c0_120 = arith.constant 0 : index
    %c0_121 = arith.constant 0 : index
    %392 = vector.load %arg12[%391, %c0_120, %c0_121] : memref<8x8x128xf32, #tpu.memory_space<vmem>>, vector<1x8x128xf32>
    %393 = vector.shape_cast %392 : vector<1x8x128xf32> to vector<8x128xf32>
    %394 = vector.shape_cast %390 : vector<8x128xf32> to vector<1x8x128xf32>
    tpu.vector_store %arg12[%391, %c0_120, %c0_121], %394 {strides = array<i32>} : memref<8x8x128xf32, #tpu.memory_space<vmem>>, vector<1x8x128xf32>,
    %c4_i32 = arith.constant 4 : i32
    %c7_i32_122 = arith.constant 7 : i32
    %395 = arith.subi %c7_i32_122, %c4_i32 : i32
    %396 = vector.broadcast %c4_i32 : i32 to vector<8x1xi32>
    %397 = arith.cmpi sgt, %13, %396 : vector<8x1xi32>
    %398 = arith.index_cast %c4_i32 : i32 to index
    %c0_123 = arith.constant 0 : index
    %c0_124 = arith.constant 0 : index
    %399 = vector.load %arg10[%398, %c0_123, %c0_124] : memref<8x8x384xf32, #tpu.memory_space<vmem>>, vector<1x8x384xf32>
    %400 = vector.shape_cast %399 : vector<1x8x384xf32> to vector<8x384xf32>
    %c0_125 = arith.constant 0 : index
    %c0_126 = arith.constant 0 : index
    %401 = vector.load %arg4[%c0_125, %c0_126] : memref<128x384xf32, #tpu.memory_space<vmem>>, vector<128x384xf32>
    %cst_127 = arith.constant dense<0.000000e+00> : vector<8x384xf32>
    %402 = tpu.matmul %339, %401, %cst_127 {dimension_numbers = #tpu.dot_dimension_numbers<[1], [0], [0], [1], [0, 0, 1, 1], [], []>} : vector<8x128xf32>, vector<128x384xf32>, vector<8x384xf32> -> vector<8x384xf32>
    %c0_128 = arith.constant 0 : index
    %c0_129 = arith.constant 0 : index
    %403 = vector.load %arg5[%c0_128, %c0_129] : memref<1x384xf32, #tpu.memory_space<vmem>>, vector<1x384xf32>
    %404 = vector.broadcast %403 : vector<1x384xf32> to vector<8x384xf32>
    %405 = arith.addf %402, %404 : vector<8x384xf32>
    %406 = vector.extract_strided_slice %400 {offsets = [0, 0], sizes = [8, 128], strides = [1, 1]} : vector<8x384xf32> to vector<8x128xf32>
    %407 = vector.extract_strided_slice %405 {offsets = [0, 0], sizes = [8, 128], strides = [1, 1]} : vector<8x384xf32> to vector<8x128xf32>
    %408 = arith.addf %406, %407 : vector<8x128xf32>
    %409 = arith.negf %408 : vector<8x128xf32>
    %410 = math.exp %409 : vector<8x128xf32>
    %cst_130 = arith.constant 1.000000e+00 : f32
    %411 = vector.broadcast %cst_130 : f32 to vector<8x128xf32>
    %412 = arith.addf %411, %410 : vector<8x128xf32>
    %413 = arith.divf %411, %412 : vector<8x128xf32>
    %414 = vector.extract_strided_slice %400 {offsets = [0, 128], sizes = [8, 128], strides = [1, 1]} : vector<8x384xf32> to vector<8x128xf32>
    %415 = vector.extract_strided_slice %405 {offsets = [0, 128], sizes = [8, 128], strides = [1, 1]} : vector<8x384xf32> to vector<8x128xf32>
    %416 = arith.addf %414, %415 : vector<8x128xf32>
    %417 = arith.negf %416 : vector<8x128xf32>
    %418 = math.exp %417 : vector<8x128xf32>
    %cst_131 = arith.constant 1.000000e+00 : f32
    %419 = vector.broadcast %cst_131 : f32 to vector<8x128xf32>
    %420 = arith.addf %419, %418 : vector<8x128xf32>
    %421 = arith.divf %419, %420 : vector<8x128xf32>
    %422 = vector.extract_strided_slice %400 {offsets = [0, 256], sizes = [8, 128], strides = [1, 1]} : vector<8x384xf32> to vector<8x128xf32>
    %423 = vector.extract_strided_slice %405 {offsets = [0, 256], sizes = [8, 128], strides = [1, 1]} : vector<8x384xf32> to vector<8x128xf32>
    %424 = arith.mulf %413, %423 : vector<8x128xf32>
    %425 = arith.addf %422, %424 : vector<8x128xf32>
    %426 = math.tanh %425 : vector<8x128xf32>
    %cst_132 = arith.constant 1.000000e+00 : f32
    %427 = vector.broadcast %cst_132 : f32 to vector<8x128xf32>
    %428 = arith.subf %427, %421 : vector<8x128xf32>
    %429 = arith.mulf %428, %426 : vector<8x128xf32>
    %430 = arith.mulf %421, %339 : vector<8x128xf32>
    %431 = arith.addf %429, %430 : vector<8x128xf32>
    %432 = vector.shape_cast %397 : vector<8x1xi1> to vector<8x1xi1>
    %433 = vector.broadcast %432 : vector<8x1xi1> to vector<8x128xi1>
    %434 = arith.select %433, %431, %339 : vector<8x128xi1>, vector<8x128xf32>
    %cst_133 = arith.constant 0.000000e+00 : f32
    %435 = vector.shape_cast %397 : vector<8x1xi1> to vector<8x1xi1>
    %436 = vector.broadcast %435 : vector<8x1xi1> to vector<8x128xi1>
    %437 = vector.broadcast %cst_133 : f32 to vector<8x128xf32>
    %438 = arith.select %436, %434, %437 : vector<8x128xi1>, vector<8x128xf32>
    %439 = arith.index_cast %c4_i32 : i32 to index
    %c0_134 = arith.constant 0 : index
    %c0_135 = arith.constant 0 : index
    %440 = vector.load %arg8[%439, %c0_134, %c0_135] : memref<8x8x128xf32, #tpu.memory_space<vmem>>, vector<1x8x128xf32>
    %441 = vector.shape_cast %440 : vector<1x8x128xf32> to vector<8x128xf32>
    %442 = vector.shape_cast %438 : vector<8x128xf32> to vector<1x8x128xf32>
    tpu.vector_store %arg8[%439, %c0_134, %c0_135], %442 {strides = array<i32>} : memref<8x8x128xf32, #tpu.memory_space<vmem>>, vector<1x8x128xf32>,
    %443 = vector.broadcast %395 : i32 to vector<8x1xi32>
    %444 = arith.cmpi sgt, %13, %443 : vector<8x1xi32>
    %445 = arith.index_cast %395 : i32 to index
    %c0_136 = arith.constant 0 : index
    %c0_137 = arith.constant 0 : index
    %446 = vector.load %arg11[%445, %c0_136, %c0_137] : memref<8x8x384xf32, #tpu.memory_space<vmem>>, vector<1x8x384xf32>
    %447 = vector.shape_cast %446 : vector<1x8x384xf32> to vector<8x384xf32>
    %c0_138 = arith.constant 0 : index
    %c0_139 = arith.constant 0 : index
    %448 = vector.load %arg6[%c0_138, %c0_139] : memref<128x384xf32, #tpu.memory_space<vmem>>, vector<128x384xf32>
    %cst_140 = arith.constant dense<0.000000e+00> : vector<8x384xf32>
    %449 = tpu.matmul %386, %448, %cst_140 {dimension_numbers = #tpu.dot_dimension_numbers<[1], [0], [0], [1], [0, 0, 1, 1], [], []>} : vector<8x128xf32>, vector<128x384xf32>, vector<8x384xf32> -> vector<8x384xf32>
    %c0_141 = arith.constant 0 : index
    %c0_142 = arith.constant 0 : index
    %450 = vector.load %arg7[%c0_141, %c0_142] : memref<1x384xf32, #tpu.memory_space<vmem>>, vector<1x384xf32>
    %451 = vector.broadcast %450 : vector<1x384xf32> to vector<8x384xf32>
    %452 = arith.addf %449, %451 : vector<8x384xf32>
    %453 = vector.extract_strided_slice %447 {offsets = [0, 0], sizes = [8, 128], strides = [1, 1]} : vector<8x384xf32> to vector<8x128xf32>
    %454 = vector.extract_strided_slice %452 {offsets = [0, 0], sizes = [8, 128], strides = [1, 1]} : vector<8x384xf32> to vector<8x128xf32>
    %455 = arith.addf %453, %454 : vector<8x128xf32>
    %456 = arith.negf %455 : vector<8x128xf32>
    %457 = math.exp %456 : vector<8x128xf32>
    %cst_143 = arith.constant 1.000000e+00 : f32
    %458 = vector.broadcast %cst_143 : f32 to vector<8x128xf32>
    %459 = arith.addf %458, %457 : vector<8x128xf32>
    %460 = arith.divf %458, %459 : vector<8x128xf32>
    %461 = vector.extract_strided_slice %447 {offsets = [0, 128], sizes = [8, 128], strides = [1, 1]} : vector<8x384xf32> to vector<8x128xf32>
    %462 = vector.extract_strided_slice %452 {offsets = [0, 128], sizes = [8, 128], strides = [1, 1]} : vector<8x384xf32> to vector<8x128xf32>
    %463 = arith.addf %461, %462 : vector<8x128xf32>
    %464 = arith.negf %463 : vector<8x128xf32>
    %465 = math.exp %464 : vector<8x128xf32>
    %cst_144 = arith.constant 1.000000e+00 : f32
    %466 = vector.broadcast %cst_144 : f32 to vector<8x128xf32>
    %467 = arith.addf %466, %465 : vector<8x128xf32>
    %468 = arith.divf %466, %467 : vector<8x128xf32>
    %469 = vector.extract_strided_slice %447 {offsets = [0, 256], sizes = [8, 128], strides = [1, 1]} : vector<8x384xf32> to vector<8x128xf32>
    %470 = vector.extract_strided_slice %452 {offsets = [0, 256], sizes = [8, 128], strides = [1, 1]} : vector<8x384xf32> to vector<8x128xf32>
    %471 = arith.mulf %460, %470 : vector<8x128xf32>
    %472 = arith.addf %469, %471 : vector<8x128xf32>
    %473 = math.tanh %472 : vector<8x128xf32>
    %cst_145 = arith.constant 1.000000e+00 : f32
    %474 = vector.broadcast %cst_145 : f32 to vector<8x128xf32>
    %475 = arith.subf %474, %468 : vector<8x128xf32>
    %476 = arith.mulf %475, %473 : vector<8x128xf32>
    %477 = arith.mulf %468, %386 : vector<8x128xf32>
    %478 = arith.addf %476, %477 : vector<8x128xf32>
    %479 = vector.shape_cast %444 : vector<8x1xi1> to vector<8x1xi1>
    %480 = vector.broadcast %479 : vector<8x1xi1> to vector<8x128xi1>
    %481 = arith.select %480, %478, %386 : vector<8x128xi1>, vector<8x128xf32>
    %cst_146 = arith.constant 0.000000e+00 : f32
    %482 = vector.shape_cast %444 : vector<8x1xi1> to vector<8x1xi1>
    %483 = vector.broadcast %482 : vector<8x1xi1> to vector<8x128xi1>
    %484 = vector.broadcast %cst_146 : f32 to vector<8x128xf32>
    %485 = arith.select %483, %481, %484 : vector<8x128xi1>, vector<8x128xf32>
    %486 = arith.index_cast %395 : i32 to index
    %c0_147 = arith.constant 0 : index
    %c0_148 = arith.constant 0 : index
    %487 = vector.load %arg12[%486, %c0_147, %c0_148] : memref<8x8x128xf32, #tpu.memory_space<vmem>>, vector<1x8x128xf32>
    %488 = vector.shape_cast %487 : vector<1x8x128xf32> to vector<8x128xf32>
    %489 = vector.shape_cast %485 : vector<8x128xf32> to vector<1x8x128xf32>
    tpu.vector_store %arg12[%486, %c0_147, %c0_148], %489 {strides = array<i32>} : memref<8x8x128xf32, #tpu.memory_space<vmem>>, vector<1x8x128xf32>,
    %c5_i32 = arith.constant 5 : i32
    %c7_i32_149 = arith.constant 7 : i32
    %490 = arith.subi %c7_i32_149, %c5_i32 : i32
    %491 = vector.broadcast %c5_i32 : i32 to vector<8x1xi32>
    %492 = arith.cmpi sgt, %13, %491 : vector<8x1xi32>
    %493 = arith.index_cast %c5_i32 : i32 to index
    %c0_150 = arith.constant 0 : index
    %c0_151 = arith.constant 0 : index
    %494 = vector.load %arg10[%493, %c0_150, %c0_151] : memref<8x8x384xf32, #tpu.memory_space<vmem>>, vector<1x8x384xf32>
    %495 = vector.shape_cast %494 : vector<1x8x384xf32> to vector<8x384xf32>
    %c0_152 = arith.constant 0 : index
    %c0_153 = arith.constant 0 : index
    %496 = vector.load %arg4[%c0_152, %c0_153] : memref<128x384xf32, #tpu.memory_space<vmem>>, vector<128x384xf32>
    %cst_154 = arith.constant dense<0.000000e+00> : vector<8x384xf32>
    %497 = tpu.matmul %434, %496, %cst_154 {dimension_numbers = #tpu.dot_dimension_numbers<[1], [0], [0], [1], [0, 0, 1, 1], [], []>} : vector<8x128xf32>, vector<128x384xf32>, vector<8x384xf32> -> vector<8x384xf32>
    %c0_155 = arith.constant 0 : index
    %c0_156 = arith.constant 0 : index
    %498 = vector.load %arg5[%c0_155, %c0_156] : memref<1x384xf32, #tpu.memory_space<vmem>>, vector<1x384xf32>
    %499 = vector.broadcast %498 : vector<1x384xf32> to vector<8x384xf32>
    %500 = arith.addf %497, %499 : vector<8x384xf32>
    %501 = vector.extract_strided_slice %495 {offsets = [0, 0], sizes = [8, 128], strides = [1, 1]} : vector<8x384xf32> to vector<8x128xf32>
    %502 = vector.extract_strided_slice %500 {offsets = [0, 0], sizes = [8, 128], strides = [1, 1]} : vector<8x384xf32> to vector<8x128xf32>
    %503 = arith.addf %501, %502 : vector<8x128xf32>
    %504 = arith.negf %503 : vector<8x128xf32>
    %505 = math.exp %504 : vector<8x128xf32>
    %cst_157 = arith.constant 1.000000e+00 : f32
    %506 = vector.broadcast %cst_157 : f32 to vector<8x128xf32>
    %507 = arith.addf %506, %505 : vector<8x128xf32>
    %508 = arith.divf %506, %507 : vector<8x128xf32>
    %509 = vector.extract_strided_slice %495 {offsets = [0, 128], sizes = [8, 128], strides = [1, 1]} : vector<8x384xf32> to vector<8x128xf32>
    %510 = vector.extract_strided_slice %500 {offsets = [0, 128], sizes = [8, 128], strides = [1, 1]} : vector<8x384xf32> to vector<8x128xf32>
    %511 = arith.addf %509, %510 : vector<8x128xf32>
    %512 = arith.negf %511 : vector<8x128xf32>
    %513 = math.exp %512 : vector<8x128xf32>
    %cst_158 = arith.constant 1.000000e+00 : f32
    %514 = vector.broadcast %cst_158 : f32 to vector<8x128xf32>
    %515 = arith.addf %514, %513 : vector<8x128xf32>
    %516 = arith.divf %514, %515 : vector<8x128xf32>
    %517 = vector.extract_strided_slice %495 {offsets = [0, 256], sizes = [8, 128], strides = [1, 1]} : vector<8x384xf32> to vector<8x128xf32>
    %518 = vector.extract_strided_slice %500 {offsets = [0, 256], sizes = [8, 128], strides = [1, 1]} : vector<8x384xf32> to vector<8x128xf32>
    %519 = arith.mulf %508, %518 : vector<8x128xf32>
    %520 = arith.addf %517, %519 : vector<8x128xf32>
    %521 = math.tanh %520 : vector<8x128xf32>
    %cst_159 = arith.constant 1.000000e+00 : f32
    %522 = vector.broadcast %cst_159 : f32 to vector<8x128xf32>
    %523 = arith.subf %522, %516 : vector<8x128xf32>
    %524 = arith.mulf %523, %521 : vector<8x128xf32>
    %525 = arith.mulf %516, %434 : vector<8x128xf32>
    %526 = arith.addf %524, %525 : vector<8x128xf32>
    %527 = vector.shape_cast %492 : vector<8x1xi1> to vector<8x1xi1>
    %528 = vector.broadcast %527 : vector<8x1xi1> to vector<8x128xi1>
    %529 = arith.select %528, %526, %434 : vector<8x128xi1>, vector<8x128xf32>
    %cst_160 = arith.constant 0.000000e+00 : f32
    %530 = vector.shape_cast %492 : vector<8x1xi1> to vector<8x1xi1>
    %531 = vector.broadcast %530 : vector<8x1xi1> to vector<8x128xi1>
    %532 = vector.broadcast %cst_160 : f32 to vector<8x128xf32>
    %533 = arith.select %531, %529, %532 : vector<8x128xi1>, vector<8x128xf32>
    %534 = arith.index_cast %c5_i32 : i32 to index
    %c0_161 = arith.constant 0 : index
    %c0_162 = arith.constant 0 : index
    %535 = vector.load %arg8[%534, %c0_161, %c0_162] : memref<8x8x128xf32, #tpu.memory_space<vmem>>, vector<1x8x128xf32>
    %536 = vector.shape_cast %535 : vector<1x8x128xf32> to vector<8x128xf32>
    %537 = vector.shape_cast %533 : vector<8x128xf32> to vector<1x8x128xf32>
    tpu.vector_store %arg8[%534, %c0_161, %c0_162], %537 {strides = array<i32>} : memref<8x8x128xf32, #tpu.memory_space<vmem>>, vector<1x8x128xf32>,
    %538 = vector.broadcast %490 : i32 to vector<8x1xi32>
    %539 = arith.cmpi sgt, %13, %538 : vector<8x1xi32>
    %540 = arith.index_cast %490 : i32 to index
    %c0_163 = arith.constant 0 : index
    %c0_164 = arith.constant 0 : index
    %541 = vector.load %arg11[%540, %c0_163, %c0_164] : memref<8x8x384xf32, #tpu.memory_space<vmem>>, vector<1x8x384xf32>
    %542 = vector.shape_cast %541 : vector<1x8x384xf32> to vector<8x384xf32>
    %c0_165 = arith.constant 0 : index
    %c0_166 = arith.constant 0 : index
    %543 = vector.load %arg6[%c0_165, %c0_166] : memref<128x384xf32, #tpu.memory_space<vmem>>, vector<128x384xf32>
    %cst_167 = arith.constant dense<0.000000e+00> : vector<8x384xf32>
    %544 = tpu.matmul %481, %543, %cst_167 {dimension_numbers = #tpu.dot_dimension_numbers<[1], [0], [0], [1], [0, 0, 1, 1], [], []>} : vector<8x128xf32>, vector<128x384xf32>, vector<8x384xf32> -> vector<8x384xf32>
    %c0_168 = arith.constant 0 : index
    %c0_169 = arith.constant 0 : index
    %545 = vector.load %arg7[%c0_168, %c0_169] : memref<1x384xf32, #tpu.memory_space<vmem>>, vector<1x384xf32>
    %546 = vector.broadcast %545 : vector<1x384xf32> to vector<8x384xf32>
    %547 = arith.addf %544, %546 : vector<8x384xf32>
    %548 = vector.extract_strided_slice %542 {offsets = [0, 0], sizes = [8, 128], strides = [1, 1]} : vector<8x384xf32> to vector<8x128xf32>
    %549 = vector.extract_strided_slice %547 {offsets = [0, 0], sizes = [8, 128], strides = [1, 1]} : vector<8x384xf32> to vector<8x128xf32>
    %550 = arith.addf %548, %549 : vector<8x128xf32>
    %551 = arith.negf %550 : vector<8x128xf32>
    %552 = math.exp %551 : vector<8x128xf32>
    %cst_170 = arith.constant 1.000000e+00 : f32
    %553 = vector.broadcast %cst_170 : f32 to vector<8x128xf32>
    %554 = arith.addf %553, %552 : vector<8x128xf32>
    %555 = arith.divf %553, %554 : vector<8x128xf32>
    %556 = vector.extract_strided_slice %542 {offsets = [0, 128], sizes = [8, 128], strides = [1, 1]} : vector<8x384xf32> to vector<8x128xf32>
    %557 = vector.extract_strided_slice %547 {offsets = [0, 128], sizes = [8, 128], strides = [1, 1]} : vector<8x384xf32> to vector<8x128xf32>
    %558 = arith.addf %556, %557 : vector<8x128xf32>
    %559 = arith.negf %558 : vector<8x128xf32>
    %560 = math.exp %559 : vector<8x128xf32>
    %cst_171 = arith.constant 1.000000e+00 : f32
    %561 = vector.broadcast %cst_171 : f32 to vector<8x128xf32>
    %562 = arith.addf %561, %560 : vector<8x128xf32>
    %563 = arith.divf %561, %562 : vector<8x128xf32>
    %564 = vector.extract_strided_slice %542 {offsets = [0, 256], sizes = [8, 128], strides = [1, 1]} : vector<8x384xf32> to vector<8x128xf32>
    %565 = vector.extract_strided_slice %547 {offsets = [0, 256], sizes = [8, 128], strides = [1, 1]} : vector<8x384xf32> to vector<8x128xf32>
    %566 = arith.mulf %555, %565 : vector<8x128xf32>
    %567 = arith.addf %564, %566 : vector<8x128xf32>
    %568 = math.tanh %567 : vector<8x128xf32>
    %cst_172 = arith.constant 1.000000e+00 : f32
    %569 = vector.broadcast %cst_172 : f32 to vector<8x128xf32>
    %570 = arith.subf %569, %563 : vector<8x128xf32>
    %571 = arith.mulf %570, %568 : vector<8x128xf32>
    %572 = arith.mulf %563, %481 : vector<8x128xf32>
    %573 = arith.addf %571, %572 : vector<8x128xf32>
    %574 = vector.shape_cast %539 : vector<8x1xi1> to vector<8x1xi1>
    %575 = vector.broadcast %574 : vector<8x1xi1> to vector<8x128xi1>
    %576 = arith.select %575, %573, %481 : vector<8x128xi1>, vector<8x128xf32>
    %cst_173 = arith.constant 0.000000e+00 : f32
    %577 = vector.shape_cast %539 : vector<8x1xi1> to vector<8x1xi1>
    %578 = vector.broadcast %577 : vector<8x1xi1> to vector<8x128xi1>
    %579 = vector.broadcast %cst_173 : f32 to vector<8x128xf32>
    %580 = arith.select %578, %576, %579 : vector<8x128xi1>, vector<8x128xf32>
    %581 = arith.index_cast %490 : i32 to index
    %c0_174 = arith.constant 0 : index
    %c0_175 = arith.constant 0 : index
    %582 = vector.load %arg12[%581, %c0_174, %c0_175] : memref<8x8x128xf32, #tpu.memory_space<vmem>>, vector<1x8x128xf32>
    %583 = vector.shape_cast %582 : vector<1x8x128xf32> to vector<8x128xf32>
    %584 = vector.shape_cast %580 : vector<8x128xf32> to vector<1x8x128xf32>
    tpu.vector_store %arg12[%581, %c0_174, %c0_175], %584 {strides = array<i32>} : memref<8x8x128xf32, #tpu.memory_space<vmem>>, vector<1x8x128xf32>,
    %c6_i32 = arith.constant 6 : i32
    %c7_i32_176 = arith.constant 7 : i32
    %585 = arith.subi %c7_i32_176, %c6_i32 : i32
    %586 = vector.broadcast %c6_i32 : i32 to vector<8x1xi32>
    %587 = arith.cmpi sgt, %13, %586 : vector<8x1xi32>
    %588 = arith.index_cast %c6_i32 : i32 to index
    %c0_177 = arith.constant 0 : index
    %c0_178 = arith.constant 0 : index
    %589 = vector.load %arg10[%588, %c0_177, %c0_178] : memref<8x8x384xf32, #tpu.memory_space<vmem>>, vector<1x8x384xf32>
    %590 = vector.shape_cast %589 : vector<1x8x384xf32> to vector<8x384xf32>
    %c0_179 = arith.constant 0 : index
    %c0_180 = arith.constant 0 : index
    %591 = vector.load %arg4[%c0_179, %c0_180] : memref<128x384xf32, #tpu.memory_space<vmem>>, vector<128x384xf32>
    %cst_181 = arith.constant dense<0.000000e+00> : vector<8x384xf32>
    %592 = tpu.matmul %529, %591, %cst_181 {dimension_numbers = #tpu.dot_dimension_numbers<[1], [0], [0], [1], [0, 0, 1, 1], [], []>} : vector<8x128xf32>, vector<128x384xf32>, vector<8x384xf32> -> vector<8x384xf32>
    %c0_182 = arith.constant 0 : index
    %c0_183 = arith.constant 0 : index
    %593 = vector.load %arg5[%c0_182, %c0_183] : memref<1x384xf32, #tpu.memory_space<vmem>>, vector<1x384xf32>
    %594 = vector.broadcast %593 : vector<1x384xf32> to vector<8x384xf32>
    %595 = arith.addf %592, %594 : vector<8x384xf32>
    %596 = vector.extract_strided_slice %590 {offsets = [0, 0], sizes = [8, 128], strides = [1, 1]} : vector<8x384xf32> to vector<8x128xf32>
    %597 = vector.extract_strided_slice %595 {offsets = [0, 0], sizes = [8, 128], strides = [1, 1]} : vector<8x384xf32> to vector<8x128xf32>
    %598 = arith.addf %596, %597 : vector<8x128xf32>
    %599 = arith.negf %598 : vector<8x128xf32>
    %600 = math.exp %599 : vector<8x128xf32>
    %cst_184 = arith.constant 1.000000e+00 : f32
    %601 = vector.broadcast %cst_184 : f32 to vector<8x128xf32>
    %602 = arith.addf %601, %600 : vector<8x128xf32>
    %603 = arith.divf %601, %602 : vector<8x128xf32>
    %604 = vector.extract_strided_slice %590 {offsets = [0, 128], sizes = [8, 128], strides = [1, 1]} : vector<8x384xf32> to vector<8x128xf32>
    %605 = vector.extract_strided_slice %595 {offsets = [0, 128], sizes = [8, 128], strides = [1, 1]} : vector<8x384xf32> to vector<8x128xf32>
    %606 = arith.addf %604, %605 : vector<8x128xf32>
    %607 = arith.negf %606 : vector<8x128xf32>
    %608 = math.exp %607 : vector<8x128xf32>
    %cst_185 = arith.constant 1.000000e+00 : f32
    %609 = vector.broadcast %cst_185 : f32 to vector<8x128xf32>
    %610 = arith.addf %609, %608 : vector<8x128xf32>
    %611 = arith.divf %609, %610 : vector<8x128xf32>
    %612 = vector.extract_strided_slice %590 {offsets = [0, 256], sizes = [8, 128], strides = [1, 1]} : vector<8x384xf32> to vector<8x128xf32>
    %613 = vector.extract_strided_slice %595 {offsets = [0, 256], sizes = [8, 128], strides = [1, 1]} : vector<8x384xf32> to vector<8x128xf32>
    %614 = arith.mulf %603, %613 : vector<8x128xf32>
    %615 = arith.addf %612, %614 : vector<8x128xf32>
    %616 = math.tanh %615 : vector<8x128xf32>
    %cst_186 = arith.constant 1.000000e+00 : f32
    %617 = vector.broadcast %cst_186 : f32 to vector<8x128xf32>
    %618 = arith.subf %617, %611 : vector<8x128xf32>
    %619 = arith.mulf %618, %616 : vector<8x128xf32>
    %620 = arith.mulf %611, %529 : vector<8x128xf32>
    %621 = arith.addf %619, %620 : vector<8x128xf32>
    %622 = vector.shape_cast %587 : vector<8x1xi1> to vector<8x1xi1>
    %623 = vector.broadcast %622 : vector<8x1xi1> to vector<8x128xi1>
    %624 = arith.select %623, %621, %529 : vector<8x128xi1>, vector<8x128xf32>
    %cst_187 = arith.constant 0.000000e+00 : f32
    %625 = vector.shape_cast %587 : vector<8x1xi1> to vector<8x1xi1>
    %626 = vector.broadcast %625 : vector<8x1xi1> to vector<8x128xi1>
    %627 = vector.broadcast %cst_187 : f32 to vector<8x128xf32>
    %628 = arith.select %626, %624, %627 : vector<8x128xi1>, vector<8x128xf32>
    %629 = arith.index_cast %c6_i32 : i32 to index
    %c0_188 = arith.constant 0 : index
    %c0_189 = arith.constant 0 : index
    %630 = vector.load %arg8[%629, %c0_188, %c0_189] : memref<8x8x128xf32, #tpu.memory_space<vmem>>, vector<1x8x128xf32>
    %631 = vector.shape_cast %630 : vector<1x8x128xf32> to vector<8x128xf32>
    %632 = vector.shape_cast %628 : vector<8x128xf32> to vector<1x8x128xf32>
    tpu.vector_store %arg8[%629, %c0_188, %c0_189], %632 {strides = array<i32>} : memref<8x8x128xf32, #tpu.memory_space<vmem>>, vector<1x8x128xf32>,
    %633 = vector.broadcast %585 : i32 to vector<8x1xi32>
    %634 = arith.cmpi sgt, %13, %633 : vector<8x1xi32>
    %635 = arith.index_cast %585 : i32 to index
    %c0_190 = arith.constant 0 : index
    %c0_191 = arith.constant 0 : index
    %636 = vector.load %arg11[%635, %c0_190, %c0_191] : memref<8x8x384xf32, #tpu.memory_space<vmem>>, vector<1x8x384xf32>
    %637 = vector.shape_cast %636 : vector<1x8x384xf32> to vector<8x384xf32>
    %c0_192 = arith.constant 0 : index
    %c0_193 = arith.constant 0 : index
    %638 = vector.load %arg6[%c0_192, %c0_193] : memref<128x384xf32, #tpu.memory_space<vmem>>, vector<128x384xf32>
    %cst_194 = arith.constant dense<0.000000e+00> : vector<8x384xf32>
    %639 = tpu.matmul %576, %638, %cst_194 {dimension_numbers = #tpu.dot_dimension_numbers<[1], [0], [0], [1], [0, 0, 1, 1], [], []>} : vector<8x128xf32>, vector<128x384xf32>, vector<8x384xf32> -> vector<8x384xf32>
    %c0_195 = arith.constant 0 : index
    %c0_196 = arith.constant 0 : index
    %640 = vector.load %arg7[%c0_195, %c0_196] : memref<1x384xf32, #tpu.memory_space<vmem>>, vector<1x384xf32>
    %641 = vector.broadcast %640 : vector<1x384xf32> to vector<8x384xf32>
    %642 = arith.addf %639, %641 : vector<8x384xf32>
    %643 = vector.extract_strided_slice %637 {offsets = [0, 0], sizes = [8, 128], strides = [1, 1]} : vector<8x384xf32> to vector<8x128xf32>
    %644 = vector.extract_strided_slice %642 {offsets = [0, 0], sizes = [8, 128], strides = [1, 1]} : vector<8x384xf32> to vector<8x128xf32>
    %645 = arith.addf %643, %644 : vector<8x128xf32>
    %646 = arith.negf %645 : vector<8x128xf32>
    %647 = math.exp %646 : vector<8x128xf32>
    %cst_197 = arith.constant 1.000000e+00 : f32
    %648 = vector.broadcast %cst_197 : f32 to vector<8x128xf32>
    %649 = arith.addf %648, %647 : vector<8x128xf32>
    %650 = arith.divf %648, %649 : vector<8x128xf32>
    %651 = vector.extract_strided_slice %637 {offsets = [0, 128], sizes = [8, 128], strides = [1, 1]} : vector<8x384xf32> to vector<8x128xf32>
    %652 = vector.extract_strided_slice %642 {offsets = [0, 128], sizes = [8, 128], strides = [1, 1]} : vector<8x384xf32> to vector<8x128xf32>
    %653 = arith.addf %651, %652 : vector<8x128xf32>
    %654 = arith.negf %653 : vector<8x128xf32>
    %655 = math.exp %654 : vector<8x128xf32>
    %cst_198 = arith.constant 1.000000e+00 : f32
    %656 = vector.broadcast %cst_198 : f32 to vector<8x128xf32>
    %657 = arith.addf %656, %655 : vector<8x128xf32>
    %658 = arith.divf %656, %657 : vector<8x128xf32>
    %659 = vector.extract_strided_slice %637 {offsets = [0, 256], sizes = [8, 128], strides = [1, 1]} : vector<8x384xf32> to vector<8x128xf32>
    %660 = vector.extract_strided_slice %642 {offsets = [0, 256], sizes = [8, 128], strides = [1, 1]} : vector<8x384xf32> to vector<8x128xf32>
    %661 = arith.mulf %650, %660 : vector<8x128xf32>
    %662 = arith.addf %659, %661 : vector<8x128xf32>
    %663 = math.tanh %662 : vector<8x128xf32>
    %cst_199 = arith.constant 1.000000e+00 : f32
    %664 = vector.broadcast %cst_199 : f32 to vector<8x128xf32>
    %665 = arith.subf %664, %658 : vector<8x128xf32>
    %666 = arith.mulf %665, %663 : vector<8x128xf32>
    %667 = arith.mulf %658, %576 : vector<8x128xf32>
    %668 = arith.addf %666, %667 : vector<8x128xf32>
    %669 = vector.shape_cast %634 : vector<8x1xi1> to vector<8x1xi1>
    %670 = vector.broadcast %669 : vector<8x1xi1> to vector<8x128xi1>
    %671 = arith.select %670, %668, %576 : vector<8x128xi1>, vector<8x128xf32>
    %cst_200 = arith.constant 0.000000e+00 : f32
    %672 = vector.shape_cast %634 : vector<8x1xi1> to vector<8x1xi1>
    %673 = vector.broadcast %672 : vector<8x1xi1> to vector<8x128xi1>
    %674 = vector.broadcast %cst_200 : f32 to vector<8x128xf32>
    %675 = arith.select %673, %671, %674 : vector<8x128xi1>, vector<8x128xf32>
    %676 = arith.index_cast %585 : i32 to index
    %c0_201 = arith.constant 0 : index
    %c0_202 = arith.constant 0 : index
    %677 = vector.load %arg12[%676, %c0_201, %c0_202] : memref<8x8x128xf32, #tpu.memory_space<vmem>>, vector<1x8x128xf32>
    %678 = vector.shape_cast %677 : vector<1x8x128xf32> to vector<8x128xf32>
    %679 = vector.shape_cast %675 : vector<8x128xf32> to vector<1x8x128xf32>
    tpu.vector_store %arg12[%676, %c0_201, %c0_202], %679 {strides = array<i32>} : memref<8x8x128xf32, #tpu.memory_space<vmem>>, vector<1x8x128xf32>,
    %c7_i32_203 = arith.constant 7 : i32
    %c7_i32_204 = arith.constant 7 : i32
    %680 = arith.subi %c7_i32_204, %c7_i32_203 : i32
    %681 = vector.broadcast %c7_i32_203 : i32 to vector<8x1xi32>
    %682 = arith.cmpi sgt, %13, %681 : vector<8x1xi32>
    %683 = arith.index_cast %c7_i32_203 : i32 to index
    %c0_205 = arith.constant 0 : index
    %c0_206 = arith.constant 0 : index
    %684 = vector.load %arg10[%683, %c0_205, %c0_206] : memref<8x8x384xf32, #tpu.memory_space<vmem>>, vector<1x8x384xf32>
    %685 = vector.shape_cast %684 : vector<1x8x384xf32> to vector<8x384xf32>
    %c0_207 = arith.constant 0 : index
    %c0_208 = arith.constant 0 : index
    %686 = vector.load %arg4[%c0_207, %c0_208] : memref<128x384xf32, #tpu.memory_space<vmem>>, vector<128x384xf32>
    %cst_209 = arith.constant dense<0.000000e+00> : vector<8x384xf32>
    %687 = tpu.matmul %624, %686, %cst_209 {dimension_numbers = #tpu.dot_dimension_numbers<[1], [0], [0], [1], [0, 0, 1, 1], [], []>} : vector<8x128xf32>, vector<128x384xf32>, vector<8x384xf32> -> vector<8x384xf32>
    %c0_210 = arith.constant 0 : index
    %c0_211 = arith.constant 0 : index
    %688 = vector.load %arg5[%c0_210, %c0_211] : memref<1x384xf32, #tpu.memory_space<vmem>>, vector<1x384xf32>
    %689 = vector.broadcast %688 : vector<1x384xf32> to vector<8x384xf32>
    %690 = arith.addf %687, %689 : vector<8x384xf32>
    %691 = vector.extract_strided_slice %685 {offsets = [0, 0], sizes = [8, 128], strides = [1, 1]} : vector<8x384xf32> to vector<8x128xf32>
    %692 = vector.extract_strided_slice %690 {offsets = [0, 0], sizes = [8, 128], strides = [1, 1]} : vector<8x384xf32> to vector<8x128xf32>
    %693 = arith.addf %691, %692 : vector<8x128xf32>
    %694 = arith.negf %693 : vector<8x128xf32>
    %695 = math.exp %694 : vector<8x128xf32>
    %cst_212 = arith.constant 1.000000e+00 : f32
    %696 = vector.broadcast %cst_212 : f32 to vector<8x128xf32>
    %697 = arith.addf %696, %695 : vector<8x128xf32>
    %698 = arith.divf %696, %697 : vector<8x128xf32>
    %699 = vector.extract_strided_slice %685 {offsets = [0, 128], sizes = [8, 128], strides = [1, 1]} : vector<8x384xf32> to vector<8x128xf32>
    %700 = vector.extract_strided_slice %690 {offsets = [0, 128], sizes = [8, 128], strides = [1, 1]} : vector<8x384xf32> to vector<8x128xf32>
    %701 = arith.addf %699, %700 : vector<8x128xf32>
    %702 = arith.negf %701 : vector<8x128xf32>
    %703 = math.exp %702 : vector<8x128xf32>
    %cst_213 = arith.constant 1.000000e+00 : f32
    %704 = vector.broadcast %cst_213 : f32 to vector<8x128xf32>
    %705 = arith.addf %704, %703 : vector<8x128xf32>
    %706 = arith.divf %704, %705 : vector<8x128xf32>
    %707 = vector.extract_strided_slice %685 {offsets = [0, 256], sizes = [8, 128], strides = [1, 1]} : vector<8x384xf32> to vector<8x128xf32>
    %708 = vector.extract_strided_slice %690 {offsets = [0, 256], sizes = [8, 128], strides = [1, 1]} : vector<8x384xf32> to vector<8x128xf32>
    %709 = arith.mulf %698, %708 : vector<8x128xf32>
    %710 = arith.addf %707, %709 : vector<8x128xf32>
    %711 = math.tanh %710 : vector<8x128xf32>
    %cst_214 = arith.constant 1.000000e+00 : f32
    %712 = vector.broadcast %cst_214 : f32 to vector<8x128xf32>
    %713 = arith.subf %712, %706 : vector<8x128xf32>
    %714 = arith.mulf %713, %711 : vector<8x128xf32>
    %715 = arith.mulf %706, %624 : vector<8x128xf32>
    %716 = arith.addf %714, %715 : vector<8x128xf32>
    %717 = vector.shape_cast %682 : vector<8x1xi1> to vector<8x1xi1>
    %718 = vector.broadcast %717 : vector<8x1xi1> to vector<8x128xi1>
    %719 = arith.select %718, %716, %624 : vector<8x128xi1>, vector<8x128xf32>
    %cst_215 = arith.constant 0.000000e+00 : f32
    %720 = vector.shape_cast %682 : vector<8x1xi1> to vector<8x1xi1>
    %721 = vector.broadcast %720 : vector<8x1xi1> to vector<8x128xi1>
    %722 = vector.broadcast %cst_215 : f32 to vector<8x128xf32>
    %723 = arith.select %721, %719, %722 : vector<8x128xi1>, vector<8x128xf32>
    %724 = arith.index_cast %c7_i32_203 : i32 to index
    %c0_216 = arith.constant 0 : index
    %c0_217 = arith.constant 0 : index
    %725 = vector.load %arg8[%724, %c0_216, %c0_217] : memref<8x8x128xf32, #tpu.memory_space<vmem>>, vector<1x8x128xf32>
    %726 = vector.shape_cast %725 : vector<1x8x128xf32> to vector<8x128xf32>
    %727 = vector.shape_cast %723 : vector<8x128xf32> to vector<1x8x128xf32>
    tpu.vector_store %arg8[%724, %c0_216, %c0_217], %727 {strides = array<i32>} : memref<8x8x128xf32, #tpu.memory_space<vmem>>, vector<1x8x128xf32>,
    %728 = vector.broadcast %680 : i32 to vector<8x1xi32>
    %729 = arith.cmpi sgt, %13, %728 : vector<8x1xi32>
    %730 = arith.index_cast %680 : i32 to index
    %c0_218 = arith.constant 0 : index
    %c0_219 = arith.constant 0 : index
    %731 = vector.load %arg11[%730, %c0_218, %c0_219] : memref<8x8x384xf32, #tpu.memory_space<vmem>>, vector<1x8x384xf32>
    %732 = vector.shape_cast %731 : vector<1x8x384xf32> to vector<8x384xf32>
    %c0_220 = arith.constant 0 : index
    %c0_221 = arith.constant 0 : index
    %733 = vector.load %arg6[%c0_220, %c0_221] : memref<128x384xf32, #tpu.memory_space<vmem>>, vector<128x384xf32>
    %cst_222 = arith.constant dense<0.000000e+00> : vector<8x384xf32>
    %734 = tpu.matmul %671, %733, %cst_222 {dimension_numbers = #tpu.dot_dimension_numbers<[1], [0], [0], [1], [0, 0, 1, 1], [], []>} : vector<8x128xf32>, vector<128x384xf32>, vector<8x384xf32> -> vector<8x384xf32>
    %c0_223 = arith.constant 0 : index
    %c0_224 = arith.constant 0 : index
    %735 = vector.load %arg7[%c0_223, %c0_224] : memref<1x384xf32, #tpu.memory_space<vmem>>, vector<1x384xf32>
    %736 = vector.broadcast %735 : vector<1x384xf32> to vector<8x384xf32>
    %737 = arith.addf %734, %736 : vector<8x384xf32>
    %738 = vector.extract_strided_slice %732 {offsets = [0, 0], sizes = [8, 128], strides = [1, 1]} : vector<8x384xf32> to vector<8x128xf32>
    %739 = vector.extract_strided_slice %737 {offsets = [0, 0], sizes = [8, 128], strides = [1, 1]} : vector<8x384xf32> to vector<8x128xf32>
    %740 = arith.addf %738, %739 : vector<8x128xf32>
    %741 = arith.negf %740 : vector<8x128xf32>
    %742 = math.exp %741 : vector<8x128xf32>
    %cst_225 = arith.constant 1.000000e+00 : f32
    %743 = vector.broadcast %cst_225 : f32 to vector<8x128xf32>
    %744 = arith.addf %743, %742 : vector<8x128xf32>
    %745 = arith.divf %743, %744 : vector<8x128xf32>
    %746 = vector.extract_strided_slice %732 {offsets = [0, 128], sizes = [8, 128], strides = [1, 1]} : vector<8x384xf32> to vector<8x128xf32>
    %747 = vector.extract_strided_slice %737 {offsets = [0, 128], sizes = [8, 128], strides = [1, 1]} : vector<8x384xf32> to vector<8x128xf32>
    %748 = arith.addf %746, %747 : vector<8x128xf32>
    %749 = arith.negf %748 : vector<8x128xf32>
    %750 = math.exp %749 : vector<8x128xf32>
    %cst_226 = arith.constant 1.000000e+00 : f32
    %751 = vector.broadcast %cst_226 : f32 to vector<8x128xf32>
    %752 = arith.addf %751, %750 : vector<8x128xf32>
    %753 = arith.divf %751, %752 : vector<8x128xf32>
    %754 = vector.extract_strided_slice %732 {offsets = [0, 256], sizes = [8, 128], strides = [1, 1]} : vector<8x384xf32> to vector<8x128xf32>
    %755 = vector.extract_strided_slice %737 {offsets = [0, 256], sizes = [8, 128], strides = [1, 1]} : vector<8x384xf32> to vector<8x128xf32>
    %756 = arith.mulf %745, %755 : vector<8x128xf32>
    %757 = arith.addf %754, %756 : vector<8x128xf32>
    %758 = math.tanh %757 : vector<8x128xf32>
    %cst_227 = arith.constant 1.000000e+00 : f32
    %759 = vector.broadcast %cst_227 : f32 to vector<8x128xf32>
    %760 = arith.subf %759, %753 : vector<8x128xf32>
    %761 = arith.mulf %760, %758 : vector<8x128xf32>
    %762 = arith.mulf %753, %671 : vector<8x128xf32>
    %763 = arith.addf %761, %762 : vector<8x128xf32>
    %764 = vector.shape_cast %729 : vector<8x1xi1> to vector<8x1xi1>
    %765 = vector.broadcast %764 : vector<8x1xi1> to vector<8x128xi1>
    %766 = arith.select %765, %763, %671 : vector<8x128xi1>, vector<8x128xf32>
    %cst_228 = arith.constant 0.000000e+00 : f32
    %767 = vector.shape_cast %729 : vector<8x1xi1> to vector<8x1xi1>
    %768 = vector.broadcast %767 : vector<8x1xi1> to vector<8x128xi1>
    %769 = vector.broadcast %cst_228 : f32 to vector<8x128xf32>
    %770 = arith.select %768, %766, %769 : vector<8x128xi1>, vector<8x128xf32>
    %771 = arith.index_cast %680 : i32 to index
    %c0_229 = arith.constant 0 : index
    %c0_230 = arith.constant 0 : index
    %772 = vector.load %arg12[%771, %c0_229, %c0_230] : memref<8x8x128xf32, #tpu.memory_space<vmem>>, vector<1x8x128xf32>
    %773 = vector.shape_cast %772 : vector<1x8x128xf32> to vector<8x128xf32>
    %774 = vector.shape_cast %770 : vector<8x128xf32> to vector<1x8x128xf32>
    tpu.vector_store %arg12[%771, %c0_229, %c0_230], %774 {strides = array<i32>} : memref<8x8x128xf32, #tpu.memory_space<vmem>>, vector<1x8x128xf32>,
    %c8_i32 = arith.constant 8 : i32
    %c0_231 = arith.constant 0 : index
    %c0_232 = arith.constant 0 : index
    %c0_233 = arith.constant 0 : index
    %775 = vector.load %arg8[%c0_231, %c0_232, %c0_233] : memref<8x8x128xf32, #tpu.memory_space<vmem>>, vector<8x8x128xf32>
    %c0_234 = arith.constant 0 : index
    %c0_235 = arith.constant 0 : index
    %c0_236 = arith.constant 0 : index
    %776 = vector.load %arg12[%c0_234, %c0_235, %c0_236] : memref<8x8x128xf32, #tpu.memory_space<vmem>>, vector<8x8x128xf32>
    %777 = arith.addf %775, %776 : vector<8x8x128xf32>
    %c0_237 = arith.constant 0 : index
    %c0_238 = arith.constant 0 : index
    %c0_239 = arith.constant 0 : index
    %778 = vector.load %arg8[%c0_237, %c0_238, %c0_239] : memref<8x8x128xf32, #tpu.memory_space<vmem>>, vector<8x8x128xf32>
    tpu.vector_store %arg8[%c0_237, %c0_238, %c0_239], %777 {strides = array<i32>} : memref<8x8x128xf32, #tpu.memory_space<vmem>>, vector<8x8x128xf32>,
    %c0_240 = arith.constant 0 : index
    %c0_241 = arith.constant 0 : index
    %c0_242 = arith.constant 0 : index
    %779 = vector.load %arg9[%c0_240, %c0_241, %c0_242] : memref<2x8x128xf32, #tpu.memory_space<vmem>>, vector<1x8x128xf32>
    %780 = vector.shape_cast %779 : vector<1x8x128xf32> to vector<8x128xf32>
    %781 = vector.shape_cast %719 : vector<8x128xf32> to vector<1x8x128xf32>
    tpu.vector_store %arg9[%c0_240, %c0_241, %c0_242], %781 {strides = array<i32>} : memref<2x8x128xf32, #tpu.memory_space<vmem>>, vector<1x8x128xf32>,
    %c1 = arith.constant 1 : index
    %c0_243 = arith.constant 0 : index
    %c0_244 = arith.constant 0 : index
    %782 = vector.load %arg9[%c1, %c0_243, %c0_244] : memref<2x8x128xf32, #tpu.memory_space<vmem>>, vector<1x8x128xf32>
    %783 = vector.shape_cast %782 : vector<1x8x128xf32> to vector<8x128xf32>
    %784 = vector.shape_cast %766 : vector<8x128xf32> to vector<1x8x128xf32>
    tpu.vector_store %arg9[%c1, %c0_243, %c0_244], %784 {strides = array<i32>} : memref<2x8x128xf32, #tpu.memory_space<vmem>>, vector<1x8x128xf32>,
    return
  }
}

</mosaic_0001>

<llo_original>
// kernel: tpu_custom_call.1
$region0: #{tpu_custom_call.1}
  #allocation0 [shape = 'u32[]', space=smem, size = 0x4, offset = 0x4, fixed_abs, tag = 'smem constant byte address 0x4 - core index']
  #allocation1 [shape = 'u32[72,128]{1,0:T(1,128)}', space=vmem, size = 0x9000, scoped, tag = 'internal scratch']
  #allocation2 [shape = 'f32[8,8,384]{2,1,0:T(8,128)}', space=vmem, size = 0x18000, scoped, tag = 'scratch operand']
  #allocation3 [shape = 'f32[8,8,384]{2,1,0:T(8,128)}', space=vmem, size = 0x18000, scoped, tag = 'scratch operand']
  #allocation4 [shape = 'f32[8,8,128]{2,1,0:T(8,128)}', space=vmem, size = 0x8000, scoped, tag = 'scratch operand']
  %s0 = inlined_call_operand.vmem [shape: s32[8,1], index: 0, kind: input, shape index: {}]
  %s1 = inlined_call_operand.hbm [shape: f32[8,8,128], index: 1, kind: input, shape index: {}]
  %s2 = inlined_call_operand.hbm [shape: f32[128,768], index: 2, kind: input, shape index: {}]
  %s3 = inlined_call_operand.vmem [shape: f32[1,768], index: 3, kind: input, shape index: {}]
  %s4 = inlined_call_operand.hbm [shape: f32[128,384], index: 4, kind: input, shape index: {}]
  %s5 = inlined_call_operand.vmem [shape: f32[1,384], index: 5, kind: input, shape index: {}]
  %s6 = inlined_call_operand.hbm [shape: f32[128,384], index: 6, kind: input, shape index: {}]
  %s7 = inlined_call_operand.vmem [shape: f32[1,384], index: 7, kind: input, shape index: {}]
  %s8 = inlined_call_operand.hbm [shape: f32[8,8,128], index: 8, kind: output, shape index: {0}]
  %s9 = inlined_call_operand.hbm [shape: f32[2,8,128], index: 9, kind: output, shape index: {1}]
  %10 = xla_tuple %s8, %s9
  %s11 = sld [smem:[#allocation0]]
  $region66: #{tpu_custom_call.1} parent=0
    _
  %s13 = ssub.s32 1, %s11
  %s14 = scalar_select 0, %s13, %s11
  $region1: #{tpu_custom_call.1} parent=0
    #allocation5 [shape = 'u8[32768]{0}', space=vmem, size = 0x8000, scoped, tag = 'input window, operand 1, single buffered']
    #allocation6 [shape = 's32[1]{0}', space=sflag, size = 0x4, scoped, tag = 'scoped memory for tpu_custom_call.1']
    #allocation7 [shape = 's32[1]{0}', space=sflag, size = 0x4, scoped, tag = 'scoped memory for tpu_custom_call.1']
    #allocation8 [shape = 'u8[393216]{0}', space=vmem, size = 0x60000, scoped, tag = 'input window, operand 2, single buffered']
    #allocation9 [shape = 's32[1]{0}', space=sflag, size = 0x4, scoped, tag = 'scoped memory for tpu_custom_call.1']
    #allocation10 [shape = 'u8[196608]{0}', space=vmem, size = 0x30000, scoped, tag = 'input window, operand 4, single buffered']
    #allocation11 [shape = 'u8[196608]{0}', space=vmem, size = 0x30000, scoped, tag = 'input window, operand 6, single buffered']
    #allocation12 [shape = 's32[1]{0}', space=sflag, size = 0x4, scoped, tag = 'scoped memory for tpu_custom_call.1']
    #allocation13 [shape = 'u8[32768]{0}', space=vmem, size = 0x8000, scoped, tag = 'output window, operand 0, single buffered']
    #allocation14 [shape = 'u8[8192]{0}', space=vmem, size = 0x2000, scoped, tag = 'output window, operand 1, single buffered']
    #allocation15 [shape = 's32[1]{0}', space=sflag, size = 0x4, scoped, tag = 'scoped memory for tpu_custom_call.1']
    %15 = vsyncpa [#allocation6], 0
    %16 = vsyncpa [#allocation9], 0
    %17 = vsyncpa [#allocation12], 0
    %18 = vsyncpa [#allocation7], 0
    %19 = vsyncpa [#allocation15], 0
    // Predicated region
    $region2: #{tpu_custom_call.1} parent=1 // pred_check
      _
    $region3: #{tpu_custom_call.1} parent=1 // pred_check_branch
      %21 = sbr.rel (0) target = $region5
    $region4: #{tpu_custom_call.1} parent=1 // pred_region
      _
    $region5: #{tpu_custom_call.1} parent=1 // pred_fallthru
      _
    // Predicated region
    $region6: #{tpu_custom_call.1} parent=1 // pred_check
      _
    $region7: #{tpu_custom_call.1} parent=1 // pred_check_branch
      %23 = sbr.rel (0) target = $region9
    $region8: #{tpu_custom_call.1} parent=1 // pred_region
      %25 = vsyncadd [#allocation6], 0
      %s26 = sshll.u32 %s1, 4
      %s27 = int_to_ptr.hbm [resolvable:$true] %s26
      %s28 = sshll.u32 [#allocation5], 4
      %s29 = int_to_ptr.vmem [resolvable:$true] %s28
      %34 = dma.hbm_to_vmem [thread:$0]  %s27, 1024, %s29, [#allocation6], 128, 128, 8
    $region9: #{tpu_custom_call.1} parent=1 // pred_fallthru
      _
    // Predicated region
    $region10: #{tpu_custom_call.1} parent=1 // pred_check
      _
    $region11: #{tpu_custom_call.1} parent=1 // pred_check_branch
      %36 = sbr.rel (0) target = $region13
    $region12: #{tpu_custom_call.1} parent=1 // pred_region
      %38 = vsyncadd [#allocation9], 0
      %s39 = sshll.u32 %s2, 4
      %s40 = int_to_ptr.hbm [resolvable:$true] %s39
      %s41 = sshll.u32 [#allocation8], 4
      %s42 = int_to_ptr.vmem [resolvable:$true] %s41
      %47 = dma.hbm_to_vmem [thread:$0]  %s40, 12288, %s42, [#allocation9], 768, 768, 48
    $region13: #{tpu_custom_call.1} parent=1 // pred_fallthru
      _
    // Predicated region
    $region14: #{tpu_custom_call.1} parent=1 // pred_check
      _
    $region15: #{tpu_custom_call.1} parent=1 // pred_check_branch
      %49 = sbr.rel (0) target = $region17
    $region16: #{tpu_custom_call.1} parent=1 // pred_region
      _
    $region17: #{tpu_custom_call.1} parent=1 // pred_fallthru
      _
    // Predicated region
    $region18: #{tpu_custom_call.1} parent=1 // pred_check
      _
    $region19: #{tpu_custom_call.1} parent=1 // pred_check_branch
      %51 = sbr.rel (0) target = $region21
    $region20: #{tpu_custom_call.1} parent=1 // pred_region
      %53 = vsyncadd [#allocation9], 0
      %s54 = sshll.u32 %s4, 4
      %s55 = int_to_ptr.hbm [resolvable:$true] %s54
      %s56 = sshll.u32 [#allocation10], 4
      %s57 = int_to_ptr.vmem [resolvable:$true] %s56
      %62 = dma.hbm_to_vmem [thread:$0]  %s55, 6144, %s57, [#allocation9], 384, 384, 24
    $region21: #{tpu_custom_call.1} parent=1 // pred_fallthru
      _
    // Predicated region
    $region22: #{tpu_custom_call.1} parent=1 // pred_check
      _
    $region23: #{tpu_custom_call.1} parent=1 // pred_check_branch
      %64 = sbr.rel (0) target = $region25
    $region24: #{tpu_custom_call.1} parent=1 // pred_region
      _
    $region25: #{tpu_custom_call.1} parent=1 // pred_fallthru
      _
    // Predicated region
    $region26: #{tpu_custom_call.1} parent=1 // pred_check
      _
    $region27: #{tpu_custom_call.1} parent=1 // pred_check_branch
      %66 = sbr.rel (0) target = $region29
    $region28: #{tpu_custom_call.1} parent=1 // pred_region
      %68 = vsyncadd [#allocation12], 0
      %s69 = sshll.u32 %s6, 4
      %s70 = int_to_ptr.hbm [resolvable:$true] %s69
      %s71 = sshll.u32 [#allocation11], 4
      %s72 = int_to_ptr.vmem [resolvable:$true] %s71
      %77 = dma.hbm_to_vmem [thread:$0]  %s70, 6144, %s72, [#allocation12], 384, 384, 24
    $region29: #{tpu_custom_call.1} parent=1 // pred_fallthru
      _
    // Predicated region
    $region30: #{tpu_custom_call.1} parent=1 // pred_check
      _
    $region31: #{tpu_custom_call.1} parent=1 // pred_check_branch
      %79 = sbr.rel (0) target = $region33
    $region32: #{tpu_custom_call.1} parent=1 // pred_region
      _
    $region33: #{tpu_custom_call.1} parent=1 // pred_fallthru
      _
    // Predicated region
    $region34: #{tpu_custom_call.1} parent=1 // pred_check
      _
    $region35: #{tpu_custom_call.1} parent=1 // pred_check_branch
      %81 = sbr.rel (0) target = $region37
    $region36: #{tpu_custom_call.1} parent=1 // pred_region
      %83 = dma.done [#allocation6], 1024
    $region37: #{tpu_custom_call.1} parent=1 // pred_fallthru
      _
    // Predicated region
    $region38: #{tpu_custom_call.1} parent=1 // pred_check
      _
    $region39: #{tpu_custom_call.1} parent=1 // pred_check_branch
      %85 = sbr.rel (0) target = $region41
    $region40: #{tpu_custom_call.1} parent=1 // pred_region
      %87 = dma.done [#allocation9], 12288
    $region41: #{tpu_custom_call.1} parent=1 // pred_fallthru
      _
    // Predicated region
    $region42: #{tpu_custom_call.1} parent=1 // pred_check
      _
    $region43: #{tpu_custom_call.1} parent=1 // pred_check_branch
      %89 = sbr.rel (0) target = $region45
    $region44: #{tpu_custom_call.1} parent=1 // pred_region
      %91 = dma.done [#allocation9], 6144
    $region45: #{tpu_custom_call.1} parent=1 // pred_fallthru
      _
    // Predicated region
    $region46: #{tpu_custom_call.1} parent=1 // pred_check
      _
    $region47: #{tpu_custom_call.1} parent=1 // pred_check_branch
      %93 = sbr.rel (0) target = $region49
    $region48: #{tpu_custom_call.1} parent=1 // pred_region
      %95 = dma.done [#allocation12], 6144
    $region49: #{tpu_custom_call.1} parent=1 // pred_fallthru
      _
    %v96 = vld [vmem:[#allocation5] sm:$0xff]
    %v97 = vld [vmem:[#allocation5 + $0x8] sm:$0xff]
    %v98 = vld [vmem:[#allocation5 + $0x10] sm:$0xff]
    %v99 = vld [vmem:[#allocation5 + $0x18] sm:$0xff]
    %v100 = vld [vmem:[#allocation5 + $0x20] sm:$0xff]
    %v101 = vld [vmem:[#allocation5 + $0x28] sm:$0xff]
    %v102 = vld [vmem:[#allocation5 + $0x30] sm:$0xff]
    %v103 = vld [vmem:[#allocation5 + $0x38] sm:$0xff]
    %v104 = vld [vmem:[#allocation8] sm:$0xff]
    %v105 = vld [vmem:[#allocation8 + $0x8] sm:$0xff]
    %v106 = vld [vmem:[#allocation8 + $0x10] sm:$0xff]
    %v107 = vld [vmem:[#allocation8 + $0x18] sm:$0xff]
    %v108 = vld [vmem:[#allocation8 + $0x20] sm:$0xff]
    %v109 = vld [vmem:[#allocation8 + $0x28] sm:$0xff]
    %v110 = vld [vmem:[#allocation8 + $0x30] sm:$0xff]
    %v111 = vld [vmem:[#allocation8 + $0x38] sm:$0xff]
    %v112 = vld [vmem:[#allocation8 + $0x40] sm:$0xff]
    %v113 = vld [vmem:[#allocation8 + $0x48] sm:$0xff]
    %v114 = vld [vmem:[#allocation8 + $0x50] sm:$0xff]
    %v115 = vld [vmem:[#allocation8 + $0x58] sm:$0xff]
    %v116 = vld [vmem:[#allocation8 + $0x60] sm:$0xff]
    %v117 = vld [vmem:[#allocation8 + $0x68] sm:$0xff]
    %v118 = vld [vmem:[#allocation8 + $0x70] sm:$0xff]
    %v119 = vld [vmem:[#allocation8 + $0x78] sm:$0xff]
    %v120 = vld [vmem:[#allocation8 + $0x80] sm:$0xff]
    %v121 = vld [vmem:[#allocation8 + $0x88] sm:$0xff]
    %v122 = vld [vmem:[#allocation8 + $0x90] sm:$0xff]
    %v123 = vld [vmem:[#allocation8 + $0x98] sm:$0xff]
    %v124 = vld [vmem:[#allocation8 + $0xa0] sm:$0xff]
    %v125 = vld [vmem:[#allocation8 + $0xa8] sm:$0xff]
    %v126 = vld [vmem:[#allocation8 + $0xb0] sm:$0xff]
    %v127 = vld [vmem:[#allocation8 + $0xb8] sm:$0xff]
    %v128 = vld [vmem:[#allocation8 + $0xc0] sm:$0xff]
    %v129 = vld [vmem:[#allocation8 + $0xc8] sm:$0xff]
    %v130 = vld [vmem:[#allocation8 + $0xd0] sm:$0xff]
    %v131 = vld [vmem:[#allocation8 + $0xd8] sm:$0xff]
    %v132 = vld [vmem:[#allocation8 + $0xe0] sm:$0xff]
    %v133 = vld [vmem:[#allocation8 + $0xe8] sm:$0xff]
    %v134 = vld [vmem:[#allocation8 + $0xf0] sm:$0xff]
    %v135 = vld [vmem:[#allocation8 + $0xf8] sm:$0xff]
    %v136 = vld [vmem:[#allocation8 + $0x100] sm:$0xff]
    %v137 = vld [vmem:[#allocation8 + $0x108] sm:$0xff]
    %v138 = vld [vmem:[#allocation8 + $0x110] sm:$0xff]
    %v139 = vld [vmem:[#allocation8 + $0x118] sm:$0xff]
    %v140 = vld [vmem:[#allocation8 + $0x120] sm:$0xff]
    %v141 = vld [vmem:[#allocation8 + $0x128] sm:$0xff]
    %v142 = vld [vmem:[#allocation8 + $0x130] sm:$0xff]
    %v143 = vld [vmem:[#allocation8 + $0x138] sm:$0xff]
    %v144 = vld [vmem:[#allocation8 + $0x140] sm:$0xff]
    %v145 = vld [vmem:[#allocation8 + $0x148] sm:$0xff]
    %v146 = vld [vmem:[#allocation8 + $0x150] sm:$0xff]
    %v147 = vld [vmem:[#allocation8 + $0x158] sm:$0xff]
    %v148 = vld [vmem:[#allocation8 + $0x160] sm:$0xff]
    %v149 = vld [vmem:[#allocation8 + $0x168] sm:$0xff]
    %v150 = vld [vmem:[#allocation8 + $0x170] sm:$0xff]
    %v151 = vld [vmem:[#allocation8 + $0x178] sm:$0xff]
    %v152 = vld [vmem:[#allocation8 + $0x180] sm:$0xff]
    %v153 = vld [vmem:[#allocation8 + $0x188] sm:$0xff]
    %v154 = vld [vmem:[#allocation8 + $0x190] sm:$0xff]
    %v155 = vld [vmem:[#allocation8 + $0x198] sm:$0xff]
    %v156 = vld [vmem:[#allocation8 + $0x1a0] sm:$0xff]
    %v157 = vld [vmem:[#allocation8 + $0x1a8] sm:$0xff]
    %v158 = vld [vmem:[#allocation8 + $0x1b0] sm:$0xff]
    %v159 = vld [vmem:[#allocation8 + $0x1b8] sm:$0xff]
    %v160 = vld [vmem:[#allocation8 + $0x1c0] sm:$0xff]
    %v161 = vld [vmem:[#allocation8 + $0x1c8] sm:$0xff]
    %v162 = vld [vmem:[#allocation8 + $0x1d0] sm:$0xff]
    %v163 = vld [vmem:[#allocation8 + $0x1d8] sm:$0xff]
    %v164 = vld [vmem:[#allocation8 + $0x1e0] sm:$0xff]
    %v165 = vld [vmem:[#allocation8 + $0x1e8] sm:$0xff]
    %v166 = vld [vmem:[#allocation8 + $0x1f0] sm:$0xff]
    %v167 = vld [vmem:[#allocation8 + $0x1f8] sm:$0xff]
    %v168 = vld [vmem:[#allocation8 + $0x200] sm:$0xff]
    %v169 = vld [vmem:[#allocation8 + $0x208] sm:$0xff]
    %v170 = vld [vmem:[#allocation8 + $0x210] sm:$0xff]
    %v171 = vld [vmem:[#allocation8 + $0x218] sm:$0xff]
    %v172 = vld [vmem:[#allocation8 + $0x220] sm:$0xff]
    %v173 = vld [vmem:[#allocation8 + $0x228] sm:$0xff]
    %v174 = vld [vmem:[#allocation8 + $0x230] sm:$0xff]
    %v175 = vld [vmem:[#allocation8 + $0x238] sm:$0xff]
    %v176 = vld [vmem:[#allocation8 + $0x240] sm:$0xff]
    %v177 = vld [vmem:[#allocation8 + $0x248] sm:$0xff]
    %v178 = vld [vmem:[#allocation8 + $0x250] sm:$0xff]
    %v179 = vld [vmem:[#allocation8 + $0x258] sm:$0xff]
    %v180 = vld [vmem:[#allocation8 + $0x260] sm:$0xff]
    %v181 = vld [vmem:[#allocation8 + $0x268] sm:$0xff]
    %v182 = vld [vmem:[#allocation8 + $0x270] sm:$0xff]
    %v183 = vld [vmem:[#allocation8 + $0x278] sm:$0xff]
    %v184 = vld [vmem:[#allocation8 + $0x280] sm:$0xff]
    %v185 = vld [vmem:[#allocation8 + $0x288] sm:$0xff]
    %v186 = vld [vmem:[#allocation8 + $0x290] sm:$0xff]
    %v187 = vld [vmem:[#allocation8 + $0x298] sm:$0xff]
    %v188 = vld [vmem:[#allocation8 + $0x2a0] sm:$0xff]
    %v189 = vld [vmem:[#allocation8 + $0x2a8] sm:$0xff]
    %v190 = vld [vmem:[#allocation8 + $0x2b0] sm:$0xff]
    %v191 = vld [vmem:[#allocation8 + $0x2b8] sm:$0xff]
    %v192 = vld [vmem:[#allocation8 + $0x2c0] sm:$0xff]
    %v193 = vld [vmem:[#allocation8 + $0x2c8] sm:$0xff]
    %v194 = vld [vmem:[#allocation8 + $0x2d0] sm:$0xff]
    %v195 = vld [vmem:[#allocation8 + $0x2d8] sm:$0xff]
    %v196 = vld [vmem:[#allocation8 + $0x2e0] sm:$0xff]
    %v197 = vld [vmem:[#allocation8 + $0x2e8] sm:$0xff]
    %v198 = vld [vmem:[#allocation8 + $0x2f0] sm:$0xff]
    %v199 = vld [vmem:[#allocation8 + $0x2f8] sm:$0xff]
    %v200 = vld [vmem:[%s3] sm:$0x3f]
    %v202 = vperm.slane %v200, 0
    %v203 = vperm.slane %v200, 1
    %v204 = vperm.slane %v200, 2
    %v205 = vperm.slane %v200, 3
    %v206 = vperm.slane %v200, 4
    %v207 = vperm.slane %v200, 5
    %214 = vmatpush.msra.mxu0 %v194
    %215 = vmatpush.msra.mxu0 %v188
    %216 = vmatpush.msra.mxu0 %v182
    %217 = vmatpush.msra.mxu0 %v176
    %218 = vmatpush.msra.mxu0 %v170
    %219 = vmatpush.msra.mxu0 %v164
    %220 = vmatpush.msra.mxu0 %v158
    %221 = vmatpush.msra.mxu0 %v152
    %222 = vmatpush.msra.mxu0 %v146
    %223 = vmatpush.msra.mxu0 %v140
    %224 = vmatpush.msra.mxu0 %v134
    %225 = vmatpush.msra.mxu0 %v128
    %226 = vmatpush.msra.mxu0 %v122
    %227 = vmatpush.msra.mxu0 %v116
    %228 = vmatpush.msra.mxu0 %v110
    %229 = vmatpush.msra.mxu0 %v104
    %230 = vmatmul.f32.gmra.mxu0 %v96
    %v231 = vpop.f32.mrf.mxu0
    %v232 = vadd.f32 %v202, %v231
    %233 = vmatmul.f32.gmra.mxu0 %v97
    %v234 = vpop.f32.mrf.mxu0
    %v235 = vadd.f32 %v202, %v234
    %236 = vmatmul.f32.gmra.mxu0 %v98
    %v237 = vpop.f32.mrf.mxu0
    %v238 = vadd.f32 %v202, %v237
    %239 = vmatmul.f32.gmra.mxu0 %v99
    %v240 = vpop.f32.mrf.mxu0
    %v241 = vadd.f32 %v202, %v240
    %242 = vmatmul.f32.gmra.mxu0 %v100
    %v243 = vpop.f32.mrf.mxu0
    %v244 = vadd.f32 %v202, %v243
    %245 = vmatmul.f32.gmra.mxu0 %v101
    %v246 = vpop.f32.mrf.mxu0
    %v247 = vadd.f32 %v202, %v246
    %248 = vmatmul.f32.gmra.mxu0 %v102
    %v249 = vpop.f32.mrf.mxu0
    %v250 = vadd.f32 %v202, %v249
    %251 = vmatmul.f32.gmra.mxu0 %v103
    %v252 = vpop.f32.mrf.mxu0
    %v253 = vadd.f32 %v202, %v252
    %254 = vdwg.mxu0
    %255 = vmatpush.msra.mxu0 %v195
    %256 = vmatpush.msra.mxu0 %v189
    %257 = vmatpush.msra.mxu0 %v183
    %258 = vmatpush.msra.mxu0 %v177
    %259 = vmatpush.msra.mxu0 %v171
    %260 = vmatpush.msra.mxu0 %v165
    %261 = vmatpush.msra.mxu0 %v159
    %262 = vmatpush.msra.mxu0 %v153
    %263 = vmatpush.msra.mxu0 %v147
    %264 = vmatpush.msra.mxu0 %v141
    %265 = vmatpush.msra.mxu0 %v135
    %266 = vmatpush.msra.mxu0 %v129
    %267 = vmatpush.msra.mxu0 %v123
    %268 = vmatpush.msra.mxu0 %v117
    %269 = vmatpush.msra.mxu0 %v111
    %270 = vmatpush.msra.mxu0 %v105
    %271 = vmatmul.f32.gmra.mxu0 %v96
    %v272 = vpop.f32.mrf.mxu0
    %v273 = vadd.f32 %v203, %v272
    %274 = vmatmul.f32.gmra.mxu0 %v97
    %v275 = vpop.f32.mrf.mxu0
    %v276 = vadd.f32 %v203, %v275
    %277 = vmatmul.f32.gmra.mxu0 %v98
    %v278 = vpop.f32.mrf.mxu0
    %v279 = vadd.f32 %v203, %v278
    %280 = vmatmul.f32.gmra.mxu0 %v99
    %v281 = vpop.f32.mrf.mxu0
    %v282 = vadd.f32 %v203, %v281
    %283 = vmatmul.f32.gmra.mxu0 %v100
    %v284 = vpop.f32.mrf.mxu0
    %v285 = vadd.f32 %v203, %v284
    %286 = vmatmul.f32.gmra.mxu0 %v101
    %v287 = vpop.f32.mrf.mxu0
    %v288 = vadd.f32 %v203, %v287
    %289 = vmatmul.f32.gmra.mxu0 %v102
    %v290 = vpop.f32.mrf.mxu0
    %v291 = vadd.f32 %v203, %v290
    %292 = vmatmul.f32.gmra.mxu0 %v103
    %v293 = vpop.f32.mrf.mxu0
    %v294 = vadd.f32 %v203, %v293
    %295 = vdwg.mxu0
    %296 = vmatpush.msra.mxu0 %v196
    %297 = vmatpush.msra.mxu0 %v190
    %298 = vmatpush.msra.mxu0 %v184
    %299 = vmatpush.msra.mxu0 %v178
    %300 = vmatpush.msra.mxu0 %v172
    %301 = vmatpush.msra.mxu0 %v166
    %302 = vmatpush.msra.mxu0 %v160
    %303 = vmatpush.msra.mxu0 %v154
    %304 = vmatpush.msra.mxu0 %v148
    %305 = vmatpush.msra.mxu0 %v142
    %306 = vmatpush.msra.mxu0 %v136
    %307 = vmatpush.msra.mxu0 %v130
    %308 = vmatpush.msra.mxu0 %v124
    %309 = vmatpush.msra.mxu0 %v118
    %310 = vmatpush.msra.mxu0 %v112
    %311 = vmatpush.msra.mxu0 %v106
    %312 = vmatmul.f32.gmra.mxu0 %v96
    %v313 = vpop.f32.mrf.mxu0
    %v314 = vadd.f32 %v204, %v313
    %315 = vmatmul.f32.gmra.mxu0 %v97
    %v316 = vpop.f32.mrf.mxu0
    %v317 = vadd.f32 %v204, %v316
    %318 = vmatmul.f32.gmra.mxu0 %v98
    %v319 = vpop.f32.mrf.mxu0
    %v320 = vadd.f32 %v204, %v319
    %321 = vmatmul.f32.gmra.mxu0 %v99
    %v322 = vpop.f32.mrf.mxu0
    %v323 = vadd.f32 %v204, %v322
    %324 = vmatmul.f32.gmra.mxu0 %v100
    %v325 = vpop.f32.mrf.mxu0
    %v326 = vadd.f32 %v204, %v325
    %327 = vmatmul.f32.gmra.mxu0 %v101
    %v328 = vpop.f32.mrf.mxu0
    %v329 = vadd.f32 %v204, %v328
    %330 = vmatmul.f32.gmra.mxu0 %v102
    %v331 = vpop.f32.mrf.mxu0
    %v332 = vadd.f32 %v204, %v331
    %333 = vmatmul.f32.gmra.mxu0 %v103
    %v334 = vpop.f32.mrf.mxu0
    %v335 = vadd.f32 %v204, %v334
    %336 = vdwg.mxu0
    %337 = vmatpush.msra.mxu0 %v197
    %338 = vmatpush.msra.mxu0 %v191
    %339 = vmatpush.msra.mxu0 %v185
    %340 = vmatpush.msra.mxu0 %v179
    %341 = vmatpush.msra.mxu0 %v173
    %342 = vmatpush.msra.mxu0 %v167
    %343 = vmatpush.msra.mxu0 %v161
    %344 = vmatpush.msra.mxu0 %v155
    %345 = vmatpush.msra.mxu0 %v149
    %346 = vmatpush.msra.mxu0 %v143
    %347 = vmatpush.msra.mxu0 %v137
    %348 = vmatpush.msra.mxu0 %v131
    %349 = vmatpush.msra.mxu0 %v125
    %350 = vmatpush.msra.mxu0 %v119
    %351 = vmatpush.msra.mxu0 %v113
    %352 = vmatpush.msra.mxu0 %v107
    %353 = vmatmul.f32.gmra.mxu0 %v96
    %v354 = vpop.f32.mrf.mxu0
    %v355 = vadd.f32 %v205, %v354
    %356 = vmatmul.f32.gmra.mxu0 %v97
    %v357 = vpop.f32.mrf.mxu0
    %v358 = vadd.f32 %v205, %v357
    %359 = vmatmul.f32.gmra.mxu0 %v98
    %v360 = vpop.f32.mrf.mxu0
    %v361 = vadd.f32 %v205, %v360
    %362 = vmatmul.f32.gmra.mxu0 %v99
    %v363 = vpop.f32.mrf.mxu0
    %v364 = vadd.f32 %v205, %v363
    %365 = vmatmul.f32.gmra.mxu0 %v100
    %v366 = vpop.f32.mrf.mxu0
    %v367 = vadd.f32 %v205, %v366
    %368 = vmatmul.f32.gmra.mxu0 %v101
    %v369 = vpop.f32.mrf.mxu0
    %v370 = vadd.f32 %v205, %v369
    %371 = vmatmul.f32.gmra.mxu0 %v102
    %v372 = vpop.f32.mrf.mxu0
    %v373 = vadd.f32 %v205, %v372
    %374 = vmatmul.f32.gmra.mxu0 %v103
    %v375 = vpop.f32.mrf.mxu0
    %v376 = vadd.f32 %v205, %v375
    %377 = vdwg.mxu0
    %378 = vmatpush.msra.mxu0 %v198
    %379 = vmatpush.msra.mxu0 %v192
    %380 = vmatpush.msra.mxu0 %v186
    %381 = vmatpush.msra.mxu0 %v180
    %382 = vmatpush.msra.mxu0 %v174
    %383 = vmatpush.msra.mxu0 %v168
    %384 = vmatpush.msra.mxu0 %v162
    %385 = vmatpush.msra.mxu0 %v156
    %386 = vmatpush.msra.mxu0 %v150
    %387 = vmatpush.msra.mxu0 %v144
    %388 = vmatpush.msra.mxu0 %v138
    %389 = vmatpush.msra.mxu0 %v132
    %390 = vmatpush.msra.mxu0 %v126
    %391 = vmatpush.msra.mxu0 %v120
    %392 = vmatpush.msra.mxu0 %v114
    %393 = vmatpush.msra.mxu0 %v108
    %394 = vmatmul.f32.gmra.mxu0 %v96
    %v395 = vpop.f32.mrf.mxu0
    %v396 = vadd.f32 %v206, %v395
    %397 = vmatmul.f32.gmra.mxu0 %v97
    %v398 = vpop.f32.mrf.mxu0
    %v399 = vadd.f32 %v206, %v398
    %400 = vmatmul.f32.gmra.mxu0 %v98
    %v401 = vpop.f32.mrf.mxu0
    %v402 = vadd.f32 %v206, %v401
    %403 = vmatmul.f32.gmra.mxu0 %v99
    %v404 = vpop.f32.mrf.mxu0
    %v405 = vadd.f32 %v206, %v404
    %406 = vmatmul.f32.gmra.mxu0 %v100
    %v407 = vpop.f32.mrf.mxu0
    %v408 = vadd.f32 %v206, %v407
    %409 = vmatmul.f32.gmra.mxu0 %v101
    %v410 = vpop.f32.mrf.mxu0
    %v411 = vadd.f32 %v206, %v410
    %412 = vmatmul.f32.gmra.mxu0 %v102
    %v413 = vpop.f32.mrf.mxu0
    %v414 = vadd.f32 %v206, %v413
    %415 = vmatmul.f32.gmra.mxu0 %v103
    %v416 = vpop.f32.mrf.mxu0
    %v417 = vadd.f32 %v206, %v416
    %418 = vdwg.mxu0
    %419 = vmatpush.msra.mxu0 %v199
    %420 = vmatpush.msra.mxu0 %v193
    %421 = vmatpush.msra.mxu0 %v187
    %422 = vmatpush.msra.mxu0 %v181
    %423 = vmatpush.msra.mxu0 %v175
    %424 = vmatpush.msra.mxu0 %v169
    %425 = vmatpush.msra.mxu0 %v163
    %426 = vmatpush.msra.mxu0 %v157
    %427 = vmatpush.msra.mxu0 %v151
    %428 = vmatpush.msra.mxu0 %v145
    %429 = vmatpush.msra.mxu0 %v139
    %430 = vmatpush.msra.mxu0 %v133
    %431 = vmatpush.msra.mxu0 %v127
    %432 = vmatpush.msra.mxu0 %v121
    %433 = vmatpush.msra.mxu0 %v115
    %434 = vmatpush.msra.mxu0 %v109
    %435 = vmatmul.f32.gmra.mxu0 %v96
    %v436 = vpop.f32.mrf.mxu0
    %v437 = vadd.f32 %v207, %v436
    %438 = vmatmul.f32.gmra.mxu0 %v97
    %v439 = vpop.f32.mrf.mxu0
    %v440 = vadd.f32 %v207, %v439
    %441 = vmatmul.f32.gmra.mxu0 %v98
    %v442 = vpop.f32.mrf.mxu0
    %v443 = vadd.f32 %v207, %v442
    %444 = vmatmul.f32.gmra.mxu0 %v99
    %v445 = vpop.f32.mrf.mxu0
    %v446 = vadd.f32 %v207, %v445
    %447 = vmatmul.f32.gmra.mxu0 %v100
    %v448 = vpop.f32.mrf.mxu0
    %v449 = vadd.f32 %v207, %v448
    %450 = vmatmul.f32.gmra.mxu0 %v101
    %v451 = vpop.f32.mrf.mxu0
    %v452 = vadd.f32 %v207, %v451
    %453 = vmatmul.f32.gmra.mxu0 %v102
    %v454 = vpop.f32.mrf.mxu0
    %v455 = vadd.f32 %v207, %v454
    %456 = vmatmul.f32.gmra.mxu0 %v103
    %v457 = vpop.f32.mrf.mxu0
    %v458 = vadd.f32 %v207, %v457
    %459 = vdwg.mxu0
    %460 = vst [vmem:[#allocation2] sm:$0xff] %v232
    %461 = vst [vmem:[#allocation2 + $0x8] sm:$0xff] %v273
    %462 = vst [vmem:[#allocation2 + $0x10] sm:$0xff] %v314
    %463 = vst [vmem:[#allocation2 + $0x18] sm:$0xff] %v235
    %464 = vst [vmem:[#allocation2 + $0x20] sm:$0xff] %v276
    %465 = vst [vmem:[#allocation2 + $0x28] sm:$0xff] %v317
    %466 = vst [vmem:[#allocation2 + $0x30] sm:$0xff] %v238
    %467 = vst [vmem:[#allocation2 + $0x38] sm:$0xff] %v279
    %468 = vst [vmem:[#allocation2 + $0x40] sm:$0xff] %v320
    %469 = vst [vmem:[#allocation2 + $0x48] sm:$0xff] %v241
    %470 = vst [vmem:[#allocation2 + $0x50] sm:$0xff] %v282
    %471 = vst [vmem:[#allocation2 + $0x58] sm:$0xff] %v323
    %472 = vst [vmem:[#allocation2 + $0x60] sm:$0xff] %v244
    %473 = vst [vmem:[#allocation2 + $0x68] sm:$0xff] %v285
    %474 = vst [vmem:[#allocation2 + $0x70] sm:$0xff] %v326
    %475 = vst [vmem:[#allocation2 + $0x78] sm:$0xff] %v247
    %476 = vst [vmem:[#allocation2 + $0x80] sm:$0xff] %v288
    %477 = vst [vmem:[#allocation2 + $0x88] sm:$0xff] %v329
    %478 = vst [vmem:[#allocation2 + $0x90] sm:$0xff] %v250
    %479 = vst [vmem:[#allocation2 + $0x98] sm:$0xff] %v291
    %480 = vst [vmem:[#allocation2 + $0xa0] sm:$0xff] %v332
    %481 = vst [vmem:[#allocation2 + $0xa8] sm:$0xff] %v253
    %482 = vst [vmem:[#allocation2 + $0xb0] sm:$0xff] %v294
    %483 = vst [vmem:[#allocation2 + $0xb8] sm:$0xff] %v335
    %484 = vst [vmem:[#allocation3] sm:$0xff] %v355
    %485 = vst [vmem:[#allocation3 + $0x8] sm:$0xff] %v396
    %486 = vst [vmem:[#allocation3 + $0x10] sm:$0xff] %v437
    %487 = vst [vmem:[#allocation3 + $0x18] sm:$0xff] %v358
    %488 = vst [vmem:[#allocation3 + $0x20] sm:$0xff] %v399
    %489 = vst [vmem:[#allocation3 + $0x28] sm:$0xff] %v440
    %490 = vst [vmem:[#allocation3 + $0x30] sm:$0xff] %v361
    %491 = vst [vmem:[#allocation3 + $0x38] sm:$0xff] %v402
    %492 = vst [vmem:[#allocation3 + $0x40] sm:$0xff] %v443
    %493 = vst [vmem:[#allocation3 + $0x48] sm:$0xff] %v364
    %494 = vst [vmem:[#allocation3 + $0x50] sm:$0xff] %v405
    %495 = vst [vmem:[#allocation3 + $0x58] sm:$0xff] %v446
    %496 = vst [vmem:[#allocation3 + $0x60] sm:$0xff] %v367
    %497 = vst [vmem:[#allocation3 + $0x68] sm:$0xff] %v408
    %498 = vst [vmem:[#allocation3 + $0x70] sm:$0xff] %v449
    %499 = vst [vmem:[#allocation3 + $0x78] sm:$0xff] %v370
    %500 = vst [vmem:[#allocation3 + $0x80] sm:$0xff] %v411
    %501 = vst [vmem:[#allocation3 + $0x88] sm:$0xff] %v452
    %502 = vst [vmem:[#allocation3 + $0x90] sm:$0xff] %v373
    %503 = vst [vmem:[#allocation3 + $0x98] sm:$0xff] %v414
    %504 = vst [vmem:[#allocation3 + $0xa0] sm:$0xff] %v455
    %505 = vst [vmem:[#allocation3 + $0xa8] sm:$0xff] %v376
    %506 = vst [vmem:[#allocation3 + $0xb0] sm:$0xff] %v417
    %507 = vst [vmem:[#allocation3 + $0xb8] sm:$0xff] %v458
    %v508 = vld [vmem:[%s0] sm:$0xff]
    %vm509 = vcmp.gt.s32.totalorder %v508, 0
    %v510 = vld [vmem:[#allocation2] sm:$0xff]
    %v511 = vld [vmem:[#allocation2 + $0x8] sm:$0xff]
    %v512 = vld [vmem:[#allocation2 + $0x10] sm:$0xff]
    %v513 = vld [vmem:[#allocation10] sm:$0xff]
    %v514 = vld [vmem:[#allocation10 + $0x8] sm:$0xff]
    %v515 = vld [vmem:[#allocation10 + $0x10] sm:$0xff]
    %v516 = vld [vmem:[#allocation10 + $0x18] sm:$0xff]
    %v517 = vld [vmem:[#allocation10 + $0x20] sm:$0xff]
    %v518 = vld [vmem:[#allocation10 + $0x28] sm:$0xff]
    %v519 = vld [vmem:[#allocation10 + $0x30] sm:$0xff]
    %v520 = vld [vmem:[#allocation10 + $0x38] sm:$0xff]
    %v521 = vld [vmem:[#allocation10 + $0x40] sm:$0xff]
    %v522 = vld [vmem:[#allocation10 + $0x48] sm:$0xff]
    %v523 = vld [vmem:[#allocation10 + $0x50] sm:$0xff]
    %v524 = vld [vmem:[#allocation10 + $0x58] sm:$0xff]
    %v525 = vld [vmem:[#allocation10 + $0x60] sm:$0xff]
    %v526 = vld [vmem:[#allocation10 + $0x68] sm:$0xff]
    %v527 = vld [vmem:[#allocation10 + $0x70] sm:$0xff]
    %v528 = vld [vmem:[#allocation10 + $0x78] sm:$0xff]
    %v529 = vld [vmem:[#allocation10 + $0x80] sm:$0xff]
    %v530 = vld [vmem:[#allocation10 + $0x88] sm:$0xff]
    %v531 = vld [vmem:[#allocation10 + $0x90] sm:$0xff]
    %v532 = vld [vmem:[#allocation10 + $0x98] sm:$0xff]
    %v533 = vld [vmem:[#allocation10 + $0xa0] sm:$0xff]
    %v534 = vld [vmem:[#allocation10 + $0xa8] sm:$0xff]
    %v535 = vld [vmem:[#allocation10 + $0xb0] sm:$0xff]
    %v536 = vld [vmem:[#allocation10 + $0xb8] sm:$0xff]
    %v537 = vld [vmem:[#allocation10 + $0xc0] sm:$0xff]
    %v538 = vld [vmem:[#allocation10 + $0xc8] sm:$0xff]
    %v539 = vld [vmem:[#allocation10 + $0xd0] sm:$0xff]
    %v540 = vld [vmem:[#allocation10 + $0xd8] sm:$0xff]
    %v541 = vld [vmem:[#allocation10 + $0xe0] sm:$0xff]
    %v542 = vld [vmem:[#allocation10 + $0xe8] sm:$0xff]
    %v543 = vld [vmem:[#allocation10 + $0xf0] sm:$0xff]
    %v544 = vld [vmem:[#allocation10 + $0xf8] sm:$0xff]
    %v545 = vld [vmem:[#allocation10 + $0x100] sm:$0xff]
    %v546 = vld [vmem:[#allocation10 + $0x108] sm:$0xff]
    %v547 = vld [vmem:[#allocation10 + $0x110] sm:$0xff]
    %v548 = vld [vmem:[#allocation10 + $0x118] sm:$0xff]
    %v549 = vld [vmem:[#allocation10 + $0x120] sm:$0xff]
    %v550 = vld [vmem:[#allocation10 + $0x128] sm:$0xff]
    %v551 = vld [vmem:[#allocation10 + $0x130] sm:$0xff]
    %v552 = vld [vmem:[#allocation10 + $0x138] sm:$0xff]
    %v553 = vld [vmem:[#allocation10 + $0x140] sm:$0xff]
    %v554 = vld [vmem:[#allocation10 + $0x148] sm:$0xff]
    %v555 = vld [vmem:[#allocation10 + $0x150] sm:$0xff]
    %v556 = vld [vmem:[#allocation10 + $0x158] sm:$0xff]
    %v557 = vld [vmem:[#allocation10 + $0x160] sm:$0xff]
    %v558 = vld [vmem:[#allocation10 + $0x168] sm:$0xff]
    %v559 = vld [vmem:[#allocation10 + $0x170] sm:$0xff]
    %v560 = vld [vmem:[#allocation10 + $0x178] sm:$0xff]
    %v561 = vld [vmem:[%s5] sm:$0x7]
    %v563 = vperm.slane %v561, 0
    %v564 = vperm.slane %v561, 1
    %v565 = vperm.slane %v561, 2
    %569 = vmatpush.msra.mxu0 %v558
    %570 = vmatpush.msra.mxu0 %v555
    %571 = vmatpush.msra.mxu0 %v552
    %572 = vmatpush.msra.mxu0 %v549
    %573 = vmatpush.msra.mxu0 %v546
    %574 = vmatpush.msra.mxu0 %v543
    %575 = vmatpush.msra.mxu0 %v540
    %576 = vmatpush.msra.mxu0 %v537
    %577 = vmatpush.msra.mxu0 %v534
    %578 = vmatpush.msra.mxu0 %v531
    %579 = vmatpush.msra.mxu0 %v528
    %580 = vmatpush.msra.mxu0 %v525
    %581 = vmatpush.msra.mxu0 %v522
    %582 = vmatpush.msra.mxu0 %v519
    %583 = vmatpush.msra.mxu0 %v516
    %584 = vmatpush.msra.mxu0 %v513
    %585 = vmatmul.f32.gmra.mxu0 0.0
    %v586 = vpop.f32.mrf.mxu0
    %v587 = vadd.f32 %v563, %v586
    %588 = vdwg.mxu0
    %589 = vmatpush.msra.mxu0 %v559
    %590 = vmatpush.msra.mxu0 %v556
    %591 = vmatpush.msra.mxu0 %v553
    %592 = vmatpush.msra.mxu0 %v550
    %593 = vmatpush.msra.mxu0 %v547
    %594 = vmatpush.msra.mxu0 %v544
    %595 = vmatpush.msra.mxu0 %v541
    %596 = vmatpush.msra.mxu0 %v538
    %597 = vmatpush.msra.mxu0 %v535
    %598 = vmatpush.msra.mxu0 %v532
    %599 = vmatpush.msra.mxu0 %v529
    %600 = vmatpush.msra.mxu0 %v526
    %601 = vmatpush.msra.mxu0 %v523
    %602 = vmatpush.msra.mxu0 %v520
    %603 = vmatpush.msra.mxu0 %v517
    %604 = vmatpush.msra.mxu0 %v514
    %605 = vmatmul.f32.gmra.mxu0 0.0
    %v606 = vpop.f32.mrf.mxu0
    %v607 = vadd.f32 %v564, %v606
    %608 = vdwg.mxu0
    %609 = vmatpush.msra.mxu0 %v560
    %610 = vmatpush.msra.mxu0 %v557
    %611 = vmatpush.msra.mxu0 %v554
    %612 = vmatpush.msra.mxu0 %v551
    %613 = vmatpush.msra.mxu0 %v548
    %614 = vmatpush.msra.mxu0 %v545
    %615 = vmatpush.msra.mxu0 %v542
    %616 = vmatpush.msra.mxu0 %v539
    %617 = vmatpush.msra.mxu0 %v536
    %618 = vmatpush.msra.mxu0 %v533
    %619 = vmatpush.msra.mxu0 %v530
    %620 = vmatpush.msra.mxu0 %v527
    %621 = vmatpush.msra.mxu0 %v524
    %622 = vmatpush.msra.mxu0 %v521
    %623 = vmatpush.msra.mxu0 %v518
    %624 = vmatpush.msra.mxu0 %v515
    %625 = vmatmul.f32.gmra.mxu0 0.0
    %v626 = vpop.f32.mrf.mxu0
    %v627 = vadd.f32 %v565, %v626
    %628 = vdwg.mxu0
    %v629 = vadd.f32 %v510, %v587
    %v630 = vxor.u32 %v629, 2147483648
    %v631 = vmul.f32 %v630, 1.442695
    %v632 = vpow.pop %v631
    %v633 = vadd.f32 %v632, 1.0
    %v634 = vrcp.pop %v633
    %v635 = vmul.f32 %v633, %v634
    %v636 = vsub.f32 1.0, %v635
    %v637 = vmul.f32 %v634, %v636
    %v638 = vadd.f32 %v634, %v637
    %vm639 = vweird.f32 %v633
    %vm640 = vweird.f32 %v634
    %vm641 = vmor %vm639, %vm640
    %v642 = vsel %vm641, %v634, %v638
    %v643 = vand.u32 2147483647, %v633
    %vm644 = vcmp.eq.f32.partialorder %v643, 8.507059e+37
    %v645 = vand.u32 %v633, 2147483648
    %v646 = vor.u32 1.1754944e-38, %v645
    %v647 = vsel %vm644, %v646, %v642
    %v648 = vmul.f32 1.0, %v647
    %v649 = vadd.f32 %v511, %v607
    %v650 = vxor.u32 %v649, 2147483648
    %v651 = vmul.f32 %v650, 1.442695
    %v652 = vpow.pop %v651
    %v653 = vadd.f32 %v652, 1.0
    %v654 = vrcp.pop %v653
    %v655 = vmul.f32 %v653, %v654
    %v656 = vsub.f32 1.0, %v655
    %v657 = vmul.f32 %v654, %v656
    %v658 = vadd.f32 %v654, %v657
    %vm659 = vweird.f32 %v653
    %vm660 = vweird.f32 %v654
    %vm661 = vmor %vm659, %vm660
    %v662 = vsel %vm661, %v654, %v658
    %v663 = vand.u32 2147483647, %v653
    %vm664 = vcmp.eq.f32.partialorder %v663, 8.507059e+37
    %v665 = vand.u32 %v653, 2147483648
    %v666 = vor.u32 1.1754944e-38, %v665
    %v667 = vsel %vm664, %v666, %v662
    %v668 = vmul.f32 1.0, %v667
    %v669 = vmul.f32 %v648, %v627
    %v670 = vadd.f32 %v512, %v669
    %v671 = vtanh.pop %v670
    %v672 = vsub.f32 1.0, %v668
    %v673 = vmul.f32 %v672, %v671
    %v674 = vmul.f32 %v668, 0.0
    %v675 = vadd.f32 %v673, %v674
    %v676 = vsel %vm509, 1, 0
    %677 = vset.pattern.permute.xlu0 0
    %678 = vperm.xlu0 %677, %v676
    %v679 = vpop.permute.xlu0 %678
    %vm680 = vcmp.eq.s32.totalorder %v679, 1
    %v681 = vsel %vm680, %v675, 0.0
    %682 = vst [vmem:[#allocation13] sm:$0xff] %v681
    %vm683 = vcmp.gt.s32.totalorder %v508, 7
    %s684 = scalar_lea.vmem [#allocation3], 168
    %v685 = vld [vmem:[%s684] sm:$0xff]
    %v686 = vld [vmem:[%s684 + $0x8] sm:$0xff]
    %v687 = vld [vmem:[%s684 + $0x10] sm:$0xff]
    %v688 = vld [vmem:[#allocation11] sm:$0xff]
    %v689 = vld [vmem:[#allocation11 + $0x8] sm:$0xff]
    %v690 = vld [vmem:[#allocation11 + $0x10] sm:$0xff]
    %v691 = vld [vmem:[#allocation11 + $0x18] sm:$0xff]
    %v692 = vld [vmem:[#allocation11 + $0x20] sm:$0xff]
    %v693 = vld [vmem:[#allocation11 + $0x28] sm:$0xff]
    %v694 = vld [vmem:[#allocation11 + $0x30] sm:$0xff]
    %v695 = vld [vmem:[#allocation11 + $0x38] sm:$0xff]
    %v696 = vld [vmem:[#allocation11 + $0x40] sm:$0xff]
    %v697 = vld [vmem:[#allocation11 + $0x48] sm:$0xff]
    %v698 = vld [vmem:[#allocation11 + $0x50] sm:$0xff]
    %v699 = vld [vmem:[#allocation11 + $0x58] sm:$0xff]
    %v700 = vld [vmem:[#allocation11 + $0x60] sm:$0xff]
    %v701 = vld [vmem:[#allocation11 + $0x68] sm:$0xff]
    %v702 = vld [vmem:[#allocation11 + $0x70] sm:$0xff]
    %v703 = vld [vmem:[#allocation11 + $0x78] sm:$0xff]
    %v704 = vld [vmem:[#allocation11 + $0x80] sm:$0xff]
    %v705 = vld [vmem:[#allocation11 + $0x88] sm:$0xff]
    %v706 = vld [vmem:[#allocation11 + $0x90] sm:$0xff]
    %v707 = vld [vmem:[#allocation11 + $0x98] sm:$0xff]
    %v708 = vld [vmem:[#allocation11 + $0xa0] sm:$0xff]
    %v709 = vld [vmem:[#allocation11 + $0xa8] sm:$0xff]
    %v710 = vld [vmem:[#allocation11 + $0xb0] sm:$0xff]
    %v711 = vld [vmem:[#allocation11 + $0xb8] sm:$0xff]
    %v712 = vld [vmem:[#allocation11 + $0xc0] sm:$0xff]
    %v713 = vld [vmem:[#allocation11 + $0xc8] sm:$0xff]
    %v714 = vld [vmem:[#allocation11 + $0xd0] sm:$0xff]
    %v715 = vld [vmem:[#allocation11 + $0xd8] sm:$0xff]
    %v716 = vld [vmem:[#allocation11 + $0xe0] sm:$0xff]
    %v717 = vld [vmem:[#allocation11 + $0xe8] sm:$0xff]
    %v718 = vld [vmem:[#allocation11 + $0xf0] sm:$0xff]
    %v719 = vld [vmem:[#allocation11 + $0xf8] sm:$0xff]
    %v720 = vld [vmem:[#allocation11 + $0x100] sm:$0xff]
    %v721 = vld [vmem:[#allocation11 + $0x108] sm:$0xff]
    %v722 = vld [vmem:[#allocation11 + $0x110] sm:$0xff]
    %v723 = vld [vmem:[#allocation11 + $0x118] sm:$0xff]
    %v724 = vld [vmem:[#allocation11 + $0x120] sm:$0xff]
    %v725 = vld [vmem:[#allocation11 + $0x128] sm:$0xff]
    %v726 = vld [vmem:[#allocation11 + $0x130] sm:$0xff]
    %v727 = vld [vmem:[#allocation11 + $0x138] sm:$0xff]
    %v728 = vld [vmem:[#allocation11 + $0x140] sm:$0xff]
    %v729 = vld [vmem:[#allocation11 + $0x148] sm:$0xff]
    %v730 = vld [vmem:[#allocation11 + $0x150] sm:$0xff]
    %v731 = vld [vmem:[#allocation11 + $0x158] sm:$0xff]
    %v732 = vld [vmem:[#allocation11 + $0x160] sm:$0xff]
    %v733 = vld [vmem:[#allocation11 + $0x168] sm:$0xff]
    %v734 = vld [vmem:[#allocation11 + $0x170] sm:$0xff]
    %v735 = vld [vmem:[#allocation11 + $0x178] sm:$0xff]
    %v736 = vld [vmem:[%s7] sm:$0x7]
    %v738 = vperm.slane %v736, 0
    %v739 = vperm.slane %v736, 1
    %v740 = vperm.slane %v736, 2
    %744 = vmatpush.msra.mxu0 %v733
    %745 = vmatpush.msra.mxu0 %v730
    %746 = vmatpush.msra.mxu0 %v727
    %747 = vmatpush.msra.mxu0 %v724
    %748 = vmatpush.msra.mxu0 %v721
    %749 = vmatpush.msra.mxu0 %v718
    %750 = vmatpush.msra.mxu0 %v715
    %751 = vmatpush.msra.mxu0 %v712
    %752 = vmatpush.msra.mxu0 %v709
    %753 = vmatpush.msra.mxu0 %v706
    %754 = vmatpush.msra.mxu0 %v703
    %755 = vmatpush.msra.mxu0 %v700
    %756 = vmatpush.msra.mxu0 %v697
    %757 = vmatpush.msra.mxu0 %v694
    %758 = vmatpush.msra.mxu0 %v691
    %759 = vmatpush.msra.mxu0 %v688
    %760 = vmatmul.f32.gmra.mxu0 0.0
    %v761 = vpop.f32.mrf.mxu0
    %v762 = vadd.f32 %v738, %v761
    %763 = vdwg.mxu0
    %764 = vmatpush.msra.mxu0 %v734
    %765 = vmatpush.msra.mxu0 %v731
    %766 = vmatpush.msra.mxu0 %v728
    %767 = vmatpush.msra.mxu0 %v725
    %768 = vmatpush.msra.mxu0 %v722
    %769 = vmatpush.msra.mxu0 %v719
    %770 = vmatpush.msra.mxu0 %v716
    %771 = vmatpush.msra.mxu0 %v713
    %772 = vmatpush.msra.mxu0 %v710
    %773 = vmatpush.msra.mxu0 %v707
    %774 = vmatpush.msra.mxu0 %v704
    %775 = vmatpush.msra.mxu0 %v701
    %776 = vmatpush.msra.mxu0 %v698
    %777 = vmatpush.msra.mxu0 %v695
    %778 = vmatpush.msra.mxu0 %v692
    %779 = vmatpush.msra.mxu0 %v689
    %780 = vmatmul.f32.gmra.mxu0 0.0
    %v781 = vpop.f32.mrf.mxu0
    %v782 = vadd.f32 %v739, %v781
    %783 = vdwg.mxu0
    %784 = vmatpush.msra.mxu0 %v735
    %785 = vmatpush.msra.mxu0 %v732
    %786 = vmatpush.msra.mxu0 %v729
    %787 = vmatpush.msra.mxu0 %v726
    %788 = vmatpush.msra.mxu0 %v723
    %789 = vmatpush.msra.mxu0 %v720
    %790 = vmatpush.msra.mxu0 %v717
    %791 = vmatpush.msra.mxu0 %v714
    %792 = vmatpush.msra.mxu0 %v711
    %793 = vmatpush.msra.mxu0 %v708
    %794 = vmatpush.msra.mxu0 %v705
    %795 = vmatpush.msra.mxu0 %v702
    %796 = vmatpush.msra.mxu0 %v699
    %797 = vmatpush.msra.mxu0 %v696
    %798 = vmatpush.msra.mxu0 %v693
    %799 = vmatpush.msra.mxu0 %v690
    %800 = vmatmul.f32.gmra.mxu0 0.0
    %v801 = vpop.f32.mrf.mxu0
    %v802 = vadd.f32 %v740, %v801
    %803 = vdwg.mxu0
    %v804 = vadd.f32 %v685, %v762
    %v805 = vxor.u32 %v804, 2147483648
    %v806 = vmul.f32 %v805, 1.442695
    %v807 = vpow.pop %v806
    %v808 = vadd.f32 %v807, 1.0
    %v809 = vrcp.pop %v808
    %v810 = vmul.f32 %v808, %v809
    %v811 = vsub.f32 1.0, %v810
    %v812 = vmul.f32 %v809, %v811
    %v813 = vadd.f32 %v809, %v812
    %vm814 = vweird.f32 %v808
    %vm815 = vweird.f32 %v809
    %vm816 = vmor %vm814, %vm815
    %v817 = vsel %vm816, %v809, %v813
    %v818 = vand.u32 2147483647, %v808
    %vm819 = vcmp.eq.f32.partialorder %v818, 8.507059e+37
    %v820 = vand.u32 %v808, 2147483648
    %v821 = vor.u32 1.1754944e-38, %v820
    %v822 = vsel %vm819, %v821, %v817
    %v823 = vmul.f32 1.0, %v822
    %v824 = vadd.f32 %v686, %v782
    %v825 = vxor.u32 %v824, 2147483648
    %v826 = vmul.f32 %v825, 1.442695
    %v827 = vpow.pop %v826
    %v828 = vadd.f32 %v827, 1.0
    %v829 = vrcp.pop %v828
    %v830 = vmul.f32 %v828, %v829
    %v831 = vsub.f32 1.0, %v830
    %v832 = vmul.f32 %v829, %v831
    %v833 = vadd.f32 %v829, %v832
    %vm834 = vweird.f32 %v828
    %vm835 = vweird.f32 %v829
    %vm836 = vmor %vm834, %vm835
    %v837 = vsel %vm836, %v829, %v833
    %v838 = vand.u32 2147483647, %v828
    %vm839 = vcmp.eq.f32.partialorder %v838, 8.507059e+37
    %v840 = vand.u32 %v828, 2147483648
    %v841 = vor.u32 1.1754944e-38, %v840
    %v842 = vsel %vm839, %v841, %v837
    %v843 = vmul.f32 1.0, %v842
    %v844 = vmul.f32 %v823, %v802
    %v845 = vadd.f32 %v687, %v844
    %v846 = vtanh.pop %v845
    %v847 = vsub.f32 1.0, %v843
    %v848 = vmul.f32 %v847, %v846
    %v849 = vmul.f32 %v843, 0.0
    %v850 = vadd.f32 %v848, %v849
    %v851 = vsel %vm683, 1, 0
    %852 = vset.pattern.permute.xlu0 0
    %853 = vperm.xlu0 %852, %v851
    %v854 = vpop.permute.xlu0 %853
    %vm855 = vcmp.eq.s32.totalorder %v854, 1
    %v856 = vsel %vm855, %v850, 0.0
    %s857 = scalar_lea.vmem [#allocation4], 56
    %858 = vst [vmem:[%s857] sm:$0xff] %v856
    %vm859 = vcmp.gt.s32.totalorder %v508, 1
    %s860 = scalar_lea.vmem [#allocation2], 24
    %v861 = vld [vmem:[%s860] sm:$0xff]
    %v862 = vld [vmem:[%s860 + $0x8] sm:$0xff]
    %v863 = vld [vmem:[%s860 + $0x10] sm:$0xff]
    %v864 = vld [vmem:[#allocation10] sm:$0xff]
    %v865 = vld [vmem:[#allocation10 + $0x8] sm:$0xff]
    %v866 = vld [vmem:[#allocation10 + $0x10] sm:$0xff]
    %v867 = vld [vmem:[#allocation10 + $0x18] sm:$0xff]
    %v868 = vld [vmem:[#allocation10 + $0x20] sm:$0xff]
    %v869 = vld [vmem:[#allocation10 + $0x28] sm:$0xff]
    %v870 = vld [vmem:[#allocation10 + $0x30] sm:$0xff]
    %v871 = vld [vmem:[#allocation10 + $0x38] sm:$0xff]
    %v872 = vld [vmem:[#allocation10 + $0x40] sm:$0xff]
    %v873 = vld [vmem:[#allocation10 + $0x48] sm:$0xff]
    %v874 = vld [vmem:[#allocation10 + $0x50] sm:$0xff]
    %v875 = vld [vmem:[#allocation10 + $0x58] sm:$0xff]
    %v876 = vld [vmem:[#allocation10 + $0x60] sm:$0xff]
    %v877 = vld [vmem:[#allocation10 + $0x68] sm:$0xff]
    %v878 = vld [vmem:[#allocation10 + $0x70] sm:$0xff]
    %v879 = vld [vmem:[#allocation10 + $0x78] sm:$0xff]
    %v880 = vld [vmem:[#allocation10 + $0x80] sm:$0xff]
    %v881 = vld [vmem:[#allocation10 + $0x88] sm:$0xff]
    %v882 = vld [vmem:[#allocation10 + $0x90] sm:$0xff]
    %v883 = vld [vmem:[#allocation10 + $0x98] sm:$0xff]
    %v884 = vld [vmem:[#allocation10 + $0xa0] sm:$0xff]
    %v885 = vld [vmem:[#allocation10 + $0xa8] sm:$0xff]
    %v886 = vld [vmem:[#allocation10 + $0xb0] sm:$0xff]
    %v887 = vld [vmem:[#allocation10 + $0xb8] sm:$0xff]
    %v888 = vld [vmem:[#allocation10 + $0xc0] sm:$0xff]
    %v889 = vld [vmem:[#allocation10 + $0xc8] sm:$0xff]
    %v890 = vld [vmem:[#allocation10 + $0xd0] sm:$0xff]
    %v891 = vld [vmem:[#allocation10 + $0xd8] sm:$0xff]
    %v892 = vld [vmem:[#allocation10 + $0xe0] sm:$0xff]
    %v893 = vld [vmem:[#allocation10 + $0xe8] sm:$0xff]
    %v894 = vld [vmem:[#allocation10 + $0xf0] sm:$0xff]
    %v895 = vld [vmem:[#allocation10 + $0xf8] sm:$0xff]
    %v896 = vld [vmem:[#allocation10 + $0x100] sm:$0xff]
    %v897 = vld [vmem:[#allocation10 + $0x108] sm:$0xff]
    %v898 = vld [vmem:[#allocation10 + $0x110] sm:$0xff]
    %v899 = vld [vmem:[#allocation10 + $0x118] sm:$0xff]
    %v900 = vld [vmem:[#allocation10 + $0x120] sm:$0xff]
    %v901 = vld [vmem:[#allocation10 + $0x128] sm:$0xff]
    %v902 = vld [vmem:[#allocation10 + $0x130] sm:$0xff]
    %v903 = vld [vmem:[#allocation10 + $0x138] sm:$0xff]
    %v904 = vld [vmem:[#allocation10 + $0x140] sm:$0xff]
    %v905 = vld [vmem:[#allocation10 + $0x148] sm:$0xff]
    %v906 = vld [vmem:[#allocation10 + $0x150] sm:$0xff]
    %v907 = vld [vmem:[#allocation10 + $0x158] sm:$0xff]
    %v908 = vld [vmem:[#allocation10 + $0x160] sm:$0xff]
    %v909 = vld [vmem:[#allocation10 + $0x168] sm:$0xff]
    %v910 = vld [vmem:[#allocation10 + $0x170] sm:$0xff]
    %v911 = vld [vmem:[#allocation10 + $0x178] sm:$0xff]
    %v912 = vld [vmem:[%s5] sm:$0x7]
    %v914 = vperm.slane %v912, 0
    %v915 = vperm.slane %v912, 1
    %v916 = vperm.slane %v912, 2
    %920 = vmatpush.msra.mxu0 %v909
    %921 = vmatpush.msra.mxu0 %v906
    %922 = vmatpush.msra.mxu0 %v903
    %923 = vmatpush.msra.mxu0 %v900
    %924 = vmatpush.msra.mxu0 %v897
    %925 = vmatpush.msra.mxu0 %v894
    %926 = vmatpush.msra.mxu0 %v891
    %927 = vmatpush.msra.mxu0 %v888
    %928 = vmatpush.msra.mxu0 %v885
    %929 = vmatpush.msra.mxu0 %v882
    %930 = vmatpush.msra.mxu0 %v879
    %931 = vmatpush.msra.mxu0 %v876
    %932 = vmatpush.msra.mxu0 %v873
    %933 = vmatpush.msra.mxu0 %v870
    %934 = vmatpush.msra.mxu0 %v867
    %935 = vmatpush.msra.mxu0 %v864
    %936 = vmatmul.f32.gmra.mxu0 %v681
    %v937 = vpop.f32.mrf.mxu0
    %v938 = vadd.f32 %v914, %v937
    %939 = vdwg.mxu0
    %940 = vmatpush.msra.mxu0 %v910
    %941 = vmatpush.msra.mxu0 %v907
    %942 = vmatpush.msra.mxu0 %v904
    %943 = vmatpush.msra.mxu0 %v901
    %944 = vmatpush.msra.mxu0 %v898
    %945 = vmatpush.msra.mxu0 %v895
    %946 = vmatpush.msra.mxu0 %v892
    %947 = vmatpush.msra.mxu0 %v889
    %948 = vmatpush.msra.mxu0 %v886
    %949 = vmatpush.msra.mxu0 %v883
    %950 = vmatpush.msra.mxu0 %v880
    %951 = vmatpush.msra.mxu0 %v877
    %952 = vmatpush.msra.mxu0 %v874
    %953 = vmatpush.msra.mxu0 %v871
    %954 = vmatpush.msra.mxu0 %v868
    %955 = vmatpush.msra.mxu0 %v865
    %956 = vmatmul.f32.gmra.mxu0 %v681
    %v957 = vpop.f32.mrf.mxu0
    %v958 = vadd.f32 %v915, %v957
    %959 = vdwg.mxu0
    %960 = vmatpush.msra.mxu0 %v911
    %961 = vmatpush.msra.mxu0 %v908
    %962 = vmatpush.msra.mxu0 %v905
    %963 = vmatpush.msra.mxu0 %v902
    %964 = vmatpush.msra.mxu0 %v899
    %965 = vmatpush.msra.mxu0 %v896
    %966 = vmatpush.msra.mxu0 %v893
    %967 = vmatpush.msra.mxu0 %v890
    %968 = vmatpush.msra.mxu0 %v887
    %969 = vmatpush.msra.mxu0 %v884
    %970 = vmatpush.msra.mxu0 %v881
    %971 = vmatpush.msra.mxu0 %v878
    %972 = vmatpush.msra.mxu0 %v875
    %973 = vmatpush.msra.mxu0 %v872
    %974 = vmatpush.msra.mxu0 %v869
    %975 = vmatpush.msra.mxu0 %v866
    %976 = vmatmul.f32.gmra.mxu0 %v681
    %v977 = vpop.f32.mrf.mxu0
    %v978 = vadd.f32 %v916, %v977
    %979 = vdwg.mxu0
    %v980 = vadd.f32 %v861, %v938
    %v981 = vxor.u32 %v980, 2147483648
    %v982 = vmul.f32 %v981, 1.442695
    %v983 = vpow.pop %v982
    %v984 = vadd.f32 %v983, 1.0
    %v985 = vrcp.pop %v984
    %v986 = vmul.f32 %v984, %v985
    %v987 = vsub.f32 1.0, %v986
    %v988 = vmul.f32 %v985, %v987
    %v989 = vadd.f32 %v985, %v988
    %vm990 = vweird.f32 %v984
    %vm991 = vweird.f32 %v985
    %vm992 = vmor %vm990, %vm991
    %v993 = vsel %vm992, %v985, %v989
    %v994 = vand.u32 2147483647, %v984
    %vm995 = vcmp.eq.f32.partialorder %v994, 8.507059e+37
    %v996 = vand.u32 %v984, 2147483648
    %v997 = vor.u32 1.1754944e-38, %v996
    %v998 = vsel %vm995, %v997, %v993
    %v999 = vmul.f32 1.0, %v998
    %v1000 = vadd.f32 %v862, %v958
    %v1001 = vxor.u32 %v1000, 2147483648
    %v1002 = vmul.f32 %v1001, 1.442695
    %v1003 = vpow.pop %v1002
    %v1004 = vadd.f32 %v1003, 1.0
    %v1005 = vrcp.pop %v1004
    %v1006 = vmul.f32 %v1004, %v1005
    %v1007 = vsub.f32 1.0, %v1006
    %v1008 = vmul.f32 %v1005, %v1007
    %v1009 = vadd.f32 %v1005, %v1008
    %vm1010 = vweird.f32 %v1004
    %vm1011 = vweird.f32 %v1005
    %vm1012 = vmor %vm1010, %vm1011
    %v1013 = vsel %vm1012, %v1005, %v1009
    %v1014 = vand.u32 2147483647, %v1004
    %vm1015 = vcmp.eq.f32.partialorder %v1014, 8.507059e+37
    %v1016 = vand.u32 %v1004, 2147483648
    %v1017 = vor.u32 1.1754944e-38, %v1016
    %v1018 = vsel %vm1015, %v1017, %v1013
    %v1019 = vmul.f32 1.0, %v1018
    %v1020 = vmul.f32 %v999, %v978
    %v1021 = vadd.f32 %v863, %v1020
    %v1022 = vtanh.pop %v1021
    %v1023 = vsub.f32 1.0, %v1019
    %v1024 = vmul.f32 %v1023, %v1022
    %v1025 = vmul.f32 %v1019, %v681
    %v1026 = vadd.f32 %v1024, %v1025
    %v1027 = vsel %vm859, 1, 0
    %1028 = vset.pattern.permute.xlu0 0
    %1029 = vperm.xlu0 %1028, %v1027
    %v1030 = vpop.permute.xlu0 %1029
    %vm1031 = vcmp.eq.s32.totalorder %v1030, 1
    %v1032 = vsel %vm1031, %v1026, %v681
    %v1033 = vsel %vm1031, %v1026, 0.0
    %s1034 = scalar_lea.vmem [#allocation13], 8
    %1035 = vst [vmem:[%s1034] sm:$0xff] %v1033
    %vm1036 = vcmp.gt.s32.totalorder %v508, 6
    %s1037 = scalar_lea.vmem [#allocation3], 144
    %v1038 = vld [vmem:[%s1037] sm:$0xff]
    %v1039 = vld [vmem:[%s1037 + $0x8] sm:$0xff]
    %v1040 = vld [vmem:[%s1037 + $0x10] sm:$0xff]
    %v1041 = vld [vmem:[#allocation11] sm:$0xff]
    %v1042 = vld [vmem:[#allocation11 + $0x8] sm:$0xff]
    %v1043 = vld [vmem:[#allocation11 + $0x10] sm:$0xff]
    %v1044 = vld [vmem:[#allocation11 + $0x18] sm:$0xff]
    %v1045 = vld [vmem:[#allocation11 + $0x20] sm:$0xff]
    %v1046 = vld [vmem:[#allocation11 + $0x28] sm:$0xff]
    %v1047 = vld [vmem:[#allocation11 + $0x30] sm:$0xff]
    %v1048 = vld [vmem:[#allocation11 + $0x38] sm:$0xff]
    %v1049 = vld [vmem:[#allocation11 + $0x40] sm:$0xff]
    %v1050 = vld [vmem:[#allocation11 + $0x48] sm:$0xff]
    %v1051 = vld [vmem:[#allocation11 + $0x50] sm:$0xff]
    %v1052 = vld [vmem:[#allocation11 + $0x58] sm:$0xff]
    %v1053 = vld [vmem:[#allocation11 + $0x60] sm:$0xff]
    %v1054 = vld [vmem:[#allocation11 + $0x68] sm:$0xff]
    %v1055 = vld [vmem:[#allocation11 + $0x70] sm:$0xff]
    %v1056 = vld [vmem:[#allocation11 + $0x78] sm:$0xff]
    %v1057 = vld [vmem:[#allocation11 + $0x80] sm:$0xff]
    %v1058 = vld [vmem:[#allocation11 + $0x88] sm:$0xff]
    %v1059 = vld [vmem:[#allocation11 + $0x90] sm:$0xff]
    %v1060 = vld [vmem:[#allocation11 + $0x98] sm:$0xff]
    %v1061 = vld [vmem:[#allocation11 + $0xa0] sm:$0xff]
    %v1062 = vld [vmem:[#allocation11 + $0xa8] sm:$0xff]
    %v1063 = vld [vmem:[#allocation11 + $0xb0] sm:$0xff]
    %v1064 = vld [vmem:[#allocation11 + $0xb8] sm:$0xff]
    %v1065 = vld [vmem:[#allocation11 + $0xc0] sm:$0xff]
    %v1066 = vld [vmem:[#allocation11 + $0xc8] sm:$0xff]
    %v1067 = vld [vmem:[#allocation11 + $0xd0] sm:$0xff]
    %v1068 = vld [vmem:[#allocation11 + $0xd8] sm:$0xff]
    %v1069 = vld [vmem:[#allocation11 + $0xe0] sm:$0xff]
    %v1070 = vld [vmem:[#allocation11 + $0xe8] sm:$0xff]
    %v1071 = vld [vmem:[#allocation11 + $0xf0] sm:$0xff]
    %v1072 = vld [vmem:[#allocation11 + $0xf8] sm:$0xff]
    %v1073 = vld [vmem:[#allocation11 + $0x100] sm:$0xff]
    %v1074 = vld [vmem:[#allocation11 + $0x108] sm:$0xff]
    %v1075 = vld [vmem:[#allocation11 + $0x110] sm:$0xff]
    %v1076 = vld [vmem:[#allocation11 + $0x118] sm:$0xff]
    %v1077 = vld [vmem:[#allocation11 + $0x120] sm:$0xff]
    %v1078 = vld [vmem:[#allocation11 + $0x128] sm:$0xff]
    %v1079 = vld [vmem:[#allocation11 + $0x130] sm:$0xff]
    %v1080 = vld [vmem:[#allocation11 + $0x138] sm:$0xff]
    %v1081 = vld [vmem:[#allocation11 + $0x140] sm:$0xff]
    %v1082 = vld [vmem:[#allocation11 + $0x148] sm:$0xff]
    %v1083 = vld [vmem:[#allocation11 + $0x150] sm:$0xff]
    %v1084 = vld [vmem:[#allocation11 + $0x158] sm:$0xff]
    %v1085 = vld [vmem:[#allocation11 + $0x160] sm:$0xff]
    %v1086 = vld [vmem:[#allocation11 + $0x168] sm:$0xff]
    %v1087 = vld [vmem:[#allocation11 + $0x170] sm:$0xff]
    %v1088 = vld [vmem:[#allocation11 + $0x178] sm:$0xff]
    %v1089 = vld [vmem:[%s7] sm:$0x7]
    %v1091 = vperm.slane %v1089, 0
    %v1092 = vperm.slane %v1089, 1
    %v1093 = vperm.slane %v1089, 2
    %1097 = vmatpush.msra.mxu0 %v1086
    %1098 = vmatpush.msra.mxu0 %v1083
    %1099 = vmatpush.msra.mxu0 %v1080
    %1100 = vmatpush.msra.mxu0 %v1077
    %1101 = vmatpush.msra.mxu0 %v1074
    %1102 = vmatpush.msra.mxu0 %v1071
    %1103 = vmatpush.msra.mxu0 %v1068
    %1104 = vmatpush.msra.mxu0 %v1065
    %1105 = vmatpush.msra.mxu0 %v1062
    %1106 = vmatpush.msra.mxu0 %v1059
    %1107 = vmatpush.msra.mxu0 %v1056
    %1108 = vmatpush.msra.mxu0 %v1053
    %1109 = vmatpush.msra.mxu0 %v1050
    %1110 = vmatpush.msra.mxu0 %v1047
    %1111 = vmatpush.msra.mxu0 %v1044
    %1112 = vmatpush.msra.mxu0 %v1041
    %1113 = vmatmul.f32.gmra.mxu0 %v856
    %v1114 = vpop.f32.mrf.mxu0
    %v1115 = vadd.f32 %v1091, %v1114
    %1116 = vdwg.mxu0
    %1117 = vmatpush.msra.mxu0 %v1087
    %1118 = vmatpush.msra.mxu0 %v1084
    %1119 = vmatpush.msra.mxu0 %v1081
    %1120 = vmatpush.msra.mxu0 %v1078
    %1121 = vmatpush.msra.mxu0 %v1075
    %1122 = vmatpush.msra.mxu0 %v1072
    %1123 = vmatpush.msra.mxu0 %v1069
    %1124 = vmatpush.msra.mxu0 %v1066
    %1125 = vmatpush.msra.mxu0 %v1063
    %1126 = vmatpush.msra.mxu0 %v1060
    %1127 = vmatpush.msra.mxu0 %v1057
    %1128 = vmatpush.msra.mxu0 %v1054
    %1129 = vmatpush.msra.mxu0 %v1051
    %1130 = vmatpush.msra.mxu0 %v1048
    %1131 = vmatpush.msra.mxu0 %v1045
    %1132 = vmatpush.msra.mxu0 %v1042
    %1133 = vmatmul.f32.gmra.mxu0 %v856
    %v1134 = vpop.f32.mrf.mxu0
    %v1135 = vadd.f32 %v1092, %v1134
    %1136 = vdwg.mxu0
    %1137 = vmatpush.msra.mxu0 %v1088
    %1138 = vmatpush.msra.mxu0 %v1085
    %1139 = vmatpush.msra.mxu0 %v1082
    %1140 = vmatpush.msra.mxu0 %v1079
    %1141 = vmatpush.msra.mxu0 %v1076
    %1142 = vmatpush.msra.mxu0 %v1073
    %1143 = vmatpush.msra.mxu0 %v1070
    %1144 = vmatpush.msra.mxu0 %v1067
    %1145 = vmatpush.msra.mxu0 %v1064
    %1146 = vmatpush.msra.mxu0 %v1061
    %1147 = vmatpush.msra.mxu0 %v1058
    %1148 = vmatpush.msra.mxu0 %v1055
    %1149 = vmatpush.msra.mxu0 %v1052
    %1150 = vmatpush.msra.mxu0 %v1049
    %1151 = vmatpush.msra.mxu0 %v1046
    %1152 = vmatpush.msra.mxu0 %v1043
    %1153 = vmatmul.f32.gmra.mxu0 %v856
    %v1154 = vpop.f32.mrf.mxu0
    %v1155 = vadd.f32 %v1093, %v1154
    %1156 = vdwg.mxu0
    %v1157 = vadd.f32 %v1038, %v1115
    %v1158 = vxor.u32 %v1157, 2147483648
    %v1159 = vmul.f32 %v1158, 1.442695
    %v1160 = vpow.pop %v1159
    %v1161 = vadd.f32 %v1160, 1.0
    %v1162 = vrcp.pop %v1161
    %v1163 = vmul.f32 %v1161, %v1162
    %v1164 = vsub.f32 1.0, %v1163
    %v1165 = vmul.f32 %v1162, %v1164
    %v1166 = vadd.f32 %v1162, %v1165
    %vm1167 = vweird.f32 %v1161
    %vm1168 = vweird.f32 %v1162
    %vm1169 = vmor %vm1167, %vm1168
    %v1170 = vsel %vm1169, %v1162, %v1166
    %v1171 = vand.u32 2147483647, %v1161
    %vm1172 = vcmp.eq.f32.partialorder %v1171, 8.507059e+37
    %v1173 = vand.u32 %v1161, 2147483648
    %v1174 = vor.u32 1.1754944e-38, %v1173
    %v1175 = vsel %vm1172, %v1174, %v1170
    %v1176 = vmul.f32 1.0, %v1175
    %v1177 = vadd.f32 %v1039, %v1135
    %v1178 = vxor.u32 %v1177, 2147483648
    %v1179 = vmul.f32 %v1178, 1.442695
    %v1180 = vpow.pop %v1179
    %v1181 = vadd.f32 %v1180, 1.0
    %v1182 = vrcp.pop %v1181
    %v1183 = vmul.f32 %v1181, %v1182
    %v1184 = vsub.f32 1.0, %v1183
    %v1185 = vmul.f32 %v1182, %v1184
    %v1186 = vadd.f32 %v1182, %v1185
    %vm1187 = vweird.f32 %v1181
    %vm1188 = vweird.f32 %v1182
    %vm1189 = vmor %vm1187, %vm1188
    %v1190 = vsel %vm1189, %v1182, %v1186
    %v1191 = vand.u32 2147483647, %v1181
    %vm1192 = vcmp.eq.f32.partialorder %v1191, 8.507059e+37
    %v1193 = vand.u32 %v1181, 2147483648
    %v1194 = vor.u32 1.1754944e-38, %v1193
    %v1195 = vsel %vm1192, %v1194, %v1190
    %v1196 = vmul.f32 1.0, %v1195
    %v1197 = vmul.f32 %v1176, %v1155
    %v1198 = vadd.f32 %v1040, %v1197
    %v1199 = vtanh.pop %v1198
    %v1200 = vsub.f32 1.0, %v1196
    %v1201 = vmul.f32 %v1200, %v1199
    %v1202 = vmul.f32 %v1196, %v856
    %v1203 = vadd.f32 %v1201, %v1202
    %v1204 = vsel %vm1036, 1, 0
    %1205 = vset.pattern.permute.xlu0 0
    %1206 = vperm.xlu0 %1205, %v1204
    %v1207 = vpop.permute.xlu0 %1206
    %vm1208 = vcmp.eq.s32.totalorder %v1207, 1
    %v1209 = vsel %vm1208, %v1203, %v856
    %v1210 = vsel %vm1208, %v1203, 0.0
    %s1211 = scalar_lea.vmem [#allocation4], 48
    %1212 = vst [vmem:[%s1211] sm:$0xff] %v1210
    %vm1213 = vcmp.gt.s32.totalorder %v508, 2
    %s1214 = scalar_lea.vmem [#allocation2], 48
    %v1215 = vld [vmem:[%s1214] sm:$0xff]
    %v1216 = vld [vmem:[%s1214 + $0x8] sm:$0xff]
    %v1217 = vld [vmem:[%s1214 + $0x10] sm:$0xff]
    %v1218 = vld [vmem:[#allocation10] sm:$0xff]
    %v1219 = vld [vmem:[#allocation10 + $0x8] sm:$0xff]
    %v1220 = vld [vmem:[#allocation10 + $0x10] sm:$0xff]
    %v1221 = vld [vmem:[#allocation10 + $0x18] sm:$0xff]
    %v1222 = vld [vmem:[#allocation10 + $0x20] sm:$0xff]
    %v1223 = vld [vmem:[#allocation10 + $0x28] sm:$0xff]
    %v1224 = vld [vmem:[#allocation10 + $0x30] sm:$0xff]
    %v1225 = vld [vmem:[#allocation10 + $0x38] sm:$0xff]
    %v1226 = vld [vmem:[#allocation10 + $0x40] sm:$0xff]
    %v1227 = vld [vmem:[#allocation10 + $0x48] sm:$0xff]
    %v1228 = vld [vmem:[#allocation10 + $0x50] sm:$0xff]
    %v1229 = vld [vmem:[#allocation10 + $0x58] sm:$0xff]
    %v1230 = vld [vmem:[#allocation10 + $0x60] sm:$0xff]
    %v1231 = vld [vmem:[#allocation10 + $0x68] sm:$0xff]
    %v1232 = vld [vmem:[#allocation10 + $0x70] sm:$0xff]
    %v1233 = vld [vmem:[#allocation10 + $0x78] sm:$0xff]
    %v1234 = vld [vmem:[#allocation10 + $0x80] sm:$0xff]
    %v1235 = vld [vmem:[#allocation10 + $0x88] sm:$0xff]
    %v1236 = vld [vmem:[#allocation10 + $0x90] sm:$0xff]
    %v1237 = vld [vmem:[#allocation10 + $0x98] sm:$0xff]
    %v1238 = vld [vmem:[#allocation10 + $0xa0] sm:$0xff]
    %v1239 = vld [vmem:[#allocation10 + $0xa8] sm:$0xff]
    %v1240 = vld [vmem:[#allocation10 + $0xb0] sm:$0xff]
    %v1241 = vld [vmem:[#allocation10 + $0xb8] sm:$0xff]
    %v1242 = vld [vmem:[#allocation10 + $0xc0] sm:$0xff]
    %v1243 = vld [vmem:[#allocation10 + $0xc8] sm:$0xff]
    %v1244 = vld [vmem:[#allocation10 + $0xd0] sm:$0xff]
    %v1245 = vld [vmem:[#allocation10 + $0xd8] sm:$0xff]
    %v1246 = vld [vmem:[#allocation10 + $0xe0] sm:$0xff]
    %v1247 = vld [vmem:[#allocation10 + $0xe8] sm:$0xff]
    %v1248 = vld [vmem:[#allocation10 + $0xf0] sm:$0xff]
    %v1249 = vld [vmem:[#allocation10 + $0xf8] sm:$0xff]
    %v1250 = vld [vmem:[#allocation10 + $0x100] sm:$0xff]
    %v1251 = vld [vmem:[#allocation10 + $0x108] sm:$0xff]
    %v1252 = vld [vmem:[#allocation10 + $0x110] sm:$0xff]
    %v1253 = vld [vmem:[#allocation10 + $0x118] sm:$0xff]
    %v1254 = vld [vmem:[#allocation10 + $0x120] sm:$0xff]
    %v1255 = vld [vmem:[#allocation10 + $0x128] sm:$0xff]
    %v1256 = vld [vmem:[#allocation10 + $0x130] sm:$0xff]
    %v1257 = vld [vmem:[#allocation10 + $0x138] sm:$0xff]
    %v1258 = vld [vmem:[#allocation10 + $0x140] sm:$0xff]
    %v1259 = vld [vmem:[#allocation10 + $0x148] sm:$0xff]
    %v1260 = vld [vmem:[#allocation10 + $0x150] sm:$0xff]
    %v1261 = vld [vmem:[#allocation10 + $0x158] sm:$0xff]
    %v1262 = vld [vmem:[#allocation10 + $0x160] sm:$0xff]
    %v1263 = vld [vmem:[#allocation10 + $0x168] sm:$0xff]
    %v1264 = vld [vmem:[#allocation10 + $0x170] sm:$0xff]
    %v1265 = vld [vmem:[#allocation10 + $0x178] sm:$0xff]
    %v1266 = vld [vmem:[%s5] sm:$0x7]
    %v1268 = vperm.slane %v1266, 0
    %v1269 = vperm.slane %v1266, 1
    %v1270 = vperm.slane %v1266, 2
    %1274 = vmatpush.msra.mxu0 %v1263
    %1275 = vmatpush.msra.mxu0 %v1260
    %1276 = vmatpush.msra.mxu0 %v1257
    %1277 = vmatpush.msra.mxu0 %v1254
    %1278 = vmatpush.msra.mxu0 %v1251
    %1279 = vmatpush.msra.mxu0 %v1248
    %1280 = vmatpush.msra.mxu0 %v1245
    %1281 = vmatpush.msra.mxu0 %v1242
    %1282 = vmatpush.msra.mxu0 %v1239
    %1283 = vmatpush.msra.mxu0 %v1236
    %1284 = vmatpush.msra.mxu0 %v1233
    %1285 = vmatpush.msra.mxu0 %v1230
    %1286 = vmatpush.msra.mxu0 %v1227
    %1287 = vmatpush.msra.mxu0 %v1224
    %1288 = vmatpush.msra.mxu0 %v1221
    %1289 = vmatpush.msra.mxu0 %v1218
    %1290 = vmatmul.f32.gmra.mxu0 %v1032
    %v1291 = vpop.f32.mrf.mxu0
    %v1292 = vadd.f32 %v1268, %v1291
    %1293 = vdwg.mxu0
    %1294 = vmatpush.msra.mxu0 %v1264
    %1295 = vmatpush.msra.mxu0 %v1261
    %1296 = vmatpush.msra.mxu0 %v1258
    %1297 = vmatpush.msra.mxu0 %v1255
    %1298 = vmatpush.msra.mxu0 %v1252
    %1299 = vmatpush.msra.mxu0 %v1249
    %1300 = vmatpush.msra.mxu0 %v1246
    %1301 = vmatpush.msra.mxu0 %v1243
    %1302 = vmatpush.msra.mxu0 %v1240
    %1303 = vmatpush.msra.mxu0 %v1237
    %1304 = vmatpush.msra.mxu0 %v1234
    %1305 = vmatpush.msra.mxu0 %v1231
    %1306 = vmatpush.msra.mxu0 %v1228
    %1307 = vmatpush.msra.mxu0 %v1225
    %1308 = vmatpush.msra.mxu0 %v1222
    %1309 = vmatpush.msra.mxu0 %v1219
    %1310 = vmatmul.f32.gmra.mxu0 %v1032
    %v1311 = vpop.f32.mrf.mxu0
    %v1312 = vadd.f32 %v1269, %v1311
    %1313 = vdwg.mxu0
    %1314 = vmatpush.msra.mxu0 %v1265
    %1315 = vmatpush.msra.mxu0 %v1262
    %1316 = vmatpush.msra.mxu0 %v1259
    %1317 = vmatpush.msra.mxu0 %v1256
    %1318 = vmatpush.msra.mxu0 %v1253
    %1319 = vmatpush.msra.mxu0 %v1250
    %1320 = vmatpush.msra.mxu0 %v1247
    %1321 = vmatpush.msra.mxu0 %v1244
    %1322 = vmatpush.msra.mxu0 %v1241
    %1323 = vmatpush.msra.mxu0 %v1238
    %1324 = vmatpush.msra.mxu0 %v1235
    %1325 = vmatpush.msra.mxu0 %v1232
    %1326 = vmatpush.msra.mxu0 %v1229
    %1327 = vmatpush.msra.mxu0 %v1226
    %1328 = vmatpush.msra.mxu0 %v1223
    %1329 = vmatpush.msra.mxu0 %v1220
    %1330 = vmatmul.f32.gmra.mxu0 %v1032
    %v1331 = vpop.f32.mrf.mxu0
    %v1332 = vadd.f32 %v1270, %v1331
    %1333 = vdwg.mxu0
    %v1334 = vadd.f32 %v1215, %v1292
    %v1335 = vxor.u32 %v1334, 2147483648
    %v1336 = vmul.f32 %v1335, 1.442695
    %v1337 = vpow.pop %v1336
    %v1338 = vadd.f32 %v1337, 1.0
    %v1339 = vrcp.pop %v1338
    %v1340 = vmul.f32 %v1338, %v1339
    %v1341 = vsub.f32 1.0, %v1340
    %v1342 = vmul.f32 %v1339, %v1341
    %v1343 = vadd.f32 %v1339, %v1342
    %vm1344 = vweird.f32 %v1338
    %vm1345 = vweird.f32 %v1339
    %vm1346 = vmor %vm1344, %vm1345
    %v1347 = vsel %vm1346, %v1339, %v1343
    %v1348 = vand.u32 2147483647, %v1338
    %vm1349 = vcmp.eq.f32.partialorder %v1348, 8.507059e+37
    %v1350 = vand.u32 %v1338, 2147483648
    %v1351 = vor.u32 1.1754944e-38, %v1350
    %v1352 = vsel %vm1349, %v1351, %v1347
    %v1353 = vmul.f32 1.0, %v1352
    %v1354 = vadd.f32 %v1216, %v1312
    %v1355 = vxor.u32 %v1354, 2147483648
    %v1356 = vmul.f32 %v1355, 1.442695
    %v1357 = vpow.pop %v1356
    %v1358 = vadd.f32 %v1357, 1.0
    %v1359 = vrcp.pop %v1358
    %v1360 = vmul.f32 %v1358, %v1359
    %v1361 = vsub.f32 1.0, %v1360
    %v1362 = vmul.f32 %v1359, %v1361
    %v1363 = vadd.f32 %v1359, %v1362
    %vm1364 = vweird.f32 %v1358
    %vm1365 = vweird.f32 %v1359
    %vm1366 = vmor %vm1364, %vm1365
    %v1367 = vsel %vm1366, %v1359, %v1363
    %v1368 = vand.u32 2147483647, %v1358
    %vm1369 = vcmp.eq.f32.partialorder %v1368, 8.507059e+37
    %v1370 = vand.u32 %v1358, 2147483648
    %v1371 = vor.u32 1.1754944e-38, %v1370
    %v1372 = vsel %vm1369, %v1371, %v1367
    %v1373 = vmul.f32 1.0, %v1372
    %v1374 = vmul.f32 %v1353, %v1332
    %v1375 = vadd.f32 %v1217, %v1374
    %v1376 = vtanh.pop %v1375
    %v1377 = vsub.f32 1.0, %v1373
    %v1378 = vmul.f32 %v1377, %v1376
    %v1379 = vmul.f32 %v1373, %v1032
    %v1380 = vadd.f32 %v1378, %v1379
    %v1381 = vsel %vm1213, 1, 0
    %1382 = vset.pattern.permute.xlu0 0
    %1383 = vperm.xlu0 %1382, %v1381
    %v1384 = vpop.permute.xlu0 %1383
    %vm1385 = vcmp.eq.s32.totalorder %v1384, 1
    %v1386 = vsel %vm1385, %v1380, %v1032
    %v1387 = vsel %vm1385, %v1380, 0.0
    %s1388 = scalar_lea.vmem [#allocation13], 16
    %1389 = vst [vmem:[%s1388] sm:$0xff] %v1387
    %vm1390 = vcmp.gt.s32.totalorder %v508, 5
    %s1391 = scalar_lea.vmem [#allocation3], 120
    %v1392 = vld [vmem:[%s1391] sm:$0xff]
    %v1393 = vld [vmem:[%s1391 + $0x8] sm:$0xff]
    %v1394 = vld [vmem:[%s1391 + $0x10] sm:$0xff]
    %v1395 = vld [vmem:[#allocation11] sm:$0xff]
    %v1396 = vld [vmem:[#allocation11 + $0x8] sm:$0xff]
    %v1397 = vld [vmem:[#allocation11 + $0x10] sm:$0xff]
    %v1398 = vld [vmem:[#allocation11 + $0x18] sm:$0xff]
    %v1399 = vld [vmem:[#allocation11 + $0x20] sm:$0xff]
    %v1400 = vld [vmem:[#allocation11 + $0x28] sm:$0xff]
    %v1401 = vld [vmem:[#allocation11 + $0x30] sm:$0xff]
    %v1402 = vld [vmem:[#allocation11 + $0x38] sm:$0xff]
    %v1403 = vld [vmem:[#allocation11 + $0x40] sm:$0xff]
    %v1404 = vld [vmem:[#allocation11 + $0x48] sm:$0xff]
    %v1405 = vld [vmem:[#allocation11 + $0x50] sm:$0xff]
    %v1406 = vld [vmem:[#allocation11 + $0x58] sm:$0xff]
    %v1407 = vld [vmem:[#allocation11 + $0x60] sm:$0xff]
    %v1408 = vld [vmem:[#allocation11 + $0x68] sm:$0xff]
    %v1409 = vld [vmem:[#allocation11 + $0x70] sm:$0xff]
    %v1410 = vld [vmem:[#allocation11 + $0x78] sm:$0xff]
    %v1411 = vld [vmem:[#allocation11 + $0x80] sm:$0xff]
    %v1412 = vld [vmem:[#allocation11 + $0x88] sm:$0xff]
    %v1413 = vld [vmem:[#allocation11 + $0x90] sm:$0xff]
    %v1414 = vld [vmem:[#allocation11 + $0x98] sm:$0xff]
    %v1415 = vld [vmem:[#allocation11 + $0xa0] sm:$0xff]
    %v1416 = vld [vmem:[#allocation11 + $0xa8] sm:$0xff]
    %v1417 = vld [vmem:[#allocation11 + $0xb0] sm:$0xff]
    %v1418 = vld [vmem:[#allocation11 + $0xb8] sm:$0xff]
    %v1419 = vld [vmem:[#allocation11 + $0xc0] sm:$0xff]
    %v1420 = vld [vmem:[#allocation11 + $0xc8] sm:$0xff]
    %v1421 = vld [vmem:[#allocation11 + $0xd0] sm:$0xff]
    %v1422 = vld [vmem:[#allocation11 + $0xd8] sm:$0xff]
    %v1423 = vld [vmem:[#allocation11 + $0xe0] sm:$0xff]
    %v1424 = vld [vmem:[#allocation11 + $0xe8] sm:$0xff]
    %v1425 = vld [vmem:[#allocation11 + $0xf0] sm:$0xff]
    %v1426 = vld [vmem:[#allocation11 + $0xf8] sm:$0xff]
    %v1427 = vld [vmem:[#allocation11 + $0x100] sm:$0xff]
    %v1428 = vld [vmem:[#allocation11 + $0x108] sm:$0xff]
    %v1429 = vld [vmem:[#allocation11 + $0x110] sm:$0xff]
    %v1430 = vld [vmem:[#allocation11 + $0x118] sm:$0xff]
    %v1431 = vld [vmem:[#allocation11 + $0x120] sm:$0xff]
    %v1432 = vld [vmem:[#allocation11 + $0x128] sm:$0xff]
    %v1433 = vld [vmem:[#allocation11 + $0x130] sm:$0xff]
    %v1434 = vld [vmem:[#allocation11 + $0x138] sm:$0xff]
    %v1435 = vld [vmem:[#allocation11 + $0x140] sm:$0xff]
    %v1436 = vld [vmem:[#allocation11 + $0x148] sm:$0xff]
    %v1437 = vld [vmem:[#allocation11 + $0x150] sm:$0xff]
    %v1438 = vld [vmem:[#allocation11 + $0x158] sm:$0xff]
    %v1439 = vld [vmem:[#allocation11 + $0x160] sm:$0xff]
    %v1440 = vld [vmem:[#allocation11 + $0x168] sm:$0xff]
    %v1441 = vld [vmem:[#allocation11 + $0x170] sm:$0xff]
    %v1442 = vld [vmem:[#allocation11 + $0x178] sm:$0xff]
    %v1443 = vld [vmem:[%s7] sm:$0x7]
    %v1445 = vperm.slane %v1443, 0
    %v1446 = vperm.slane %v1443, 1
    %v1447 = vperm.slane %v1443, 2
    %1451 = vmatpush.msra.mxu0 %v1440
    %1452 = vmatpush.msra.mxu0 %v1437
    %1453 = vmatpush.msra.mxu0 %v1434
    %1454 = vmatpush.msra.mxu0 %v1431
    %1455 = vmatpush.msra.mxu0 %v1428
    %1456 = vmatpush.msra.mxu0 %v1425
    %1457 = vmatpush.msra.mxu0 %v1422
    %1458 = vmatpush.msra.mxu0 %v1419
    %1459 = vmatpush.msra.mxu0 %v1416
    %1460 = vmatpush.msra.mxu0 %v1413
    %1461 = vmatpush.msra.mxu0 %v1410
    %1462 = vmatpush.msra.mxu0 %v1407
    %1463 = vmatpush.msra.mxu0 %v1404
    %1464 = vmatpush.msra.mxu0 %v1401
    %1465 = vmatpush.msra.mxu0 %v1398
    %1466 = vmatpush.msra.mxu0 %v1395
    %1467 = vmatmul.f32.gmra.mxu0 %v1209
    %v1468 = vpop.f32.mrf.mxu0
    %v1469 = vadd.f32 %v1445, %v1468
    %1470 = vdwg.mxu0
    %1471 = vmatpush.msra.mxu0 %v1441
    %1472 = vmatpush.msra.mxu0 %v1438
    %1473 = vmatpush.msra.mxu0 %v1435
    %1474 = vmatpush.msra.mxu0 %v1432
    %1475 = vmatpush.msra.mxu0 %v1429
    %1476 = vmatpush.msra.mxu0 %v1426
    %1477 = vmatpush.msra.mxu0 %v1423
    %1478 = vmatpush.msra.mxu0 %v1420
    %1479 = vmatpush.msra.mxu0 %v1417
    %1480 = vmatpush.msra.mxu0 %v1414
    %1481 = vmatpush.msra.mxu0 %v1411
    %1482 = vmatpush.msra.mxu0 %v1408
    %1483 = vmatpush.msra.mxu0 %v1405
    %1484 = vmatpush.msra.mxu0 %v1402
    %1485 = vmatpush.msra.mxu0 %v1399
    %1486 = vmatpush.msra.mxu0 %v1396
    %1487 = vmatmul.f32.gmra.mxu0 %v1209
    %v1488 = vpop.f32.mrf.mxu0
    %v1489 = vadd.f32 %v1446, %v1488
    %1490 = vdwg.mxu0
    %1491 = vmatpush.msra.mxu0 %v1442
    %1492 = vmatpush.msra.mxu0 %v1439
    %1493 = vmatpush.msra.mxu0 %v1436
    %1494 = vmatpush.msra.mxu0 %v1433
    %1495 = vmatpush.msra.mxu0 %v1430
    %1496 = vmatpush.msra.mxu0 %v1427
    %1497 = vmatpush.msra.mxu0 %v1424
    %1498 = vmatpush.msra.mxu0 %v1421
    %1499 = vmatpush.msra.mxu0 %v1418
    %1500 = vmatpush.msra.mxu0 %v1415
    %1501 = vmatpush.msra.mxu0 %v1412
    %1502 = vmatpush.msra.mxu0 %v1409
    %1503 = vmatpush.msra.mxu0 %v1406
    %1504 = vmatpush.msra.mxu0 %v1403
    %1505 = vmatpush.msra.mxu0 %v1400
    %1506 = vmatpush.msra.mxu0 %v1397
    %1507 = vmatmul.f32.gmra.mxu0 %v1209
    %v1508 = vpop.f32.mrf.mxu0
    %v1509 = vadd.f32 %v1447, %v1508
    %1510 = vdwg.mxu0
    %v1511 = vadd.f32 %v1392, %v1469
    %v1512 = vxor.u32 %v1511, 2147483648
    %v1513 = vmul.f32 %v1512, 1.442695
    %v1514 = vpow.pop %v1513
    %v1515 = vadd.f32 %v1514, 1.0
    %v1516 = vrcp.pop %v1515
    %v1517 = vmul.f32 %v1515, %v1516
    %v1518 = vsub.f32 1.0, %v1517
    %v1519 = vmul.f32 %v1516, %v1518
    %v1520 = vadd.f32 %v1516, %v1519
    %vm1521 = vweird.f32 %v1515
    %vm1522 = vweird.f32 %v1516
    %vm1523 = vmor %vm1521, %vm1522
    %v1524 = vsel %vm1523, %v1516, %v1520
    %v1525 = vand.u32 2147483647, %v1515
    %vm1526 = vcmp.eq.f32.partialorder %v1525, 8.507059e+37
    %v1527 = vand.u32 %v1515, 2147483648
    %v1528 = vor.u32 1.1754944e-38, %v1527
    %v1529 = vsel %vm1526, %v1528, %v1524
    %v1530 = vmul.f32 1.0, %v1529
    %v1531 = vadd.f32 %v1393, %v1489
    %v1532 = vxor.u32 %v1531, 2147483648
    %v1533 = vmul.f32 %v1532, 1.442695
    %v1534 = vpow.pop %v1533
    %v1535 = vadd.f32 %v1534, 1.0
    %v1536 = vrcp.pop %v1535
    %v1537 = vmul.f32 %v1535, %v1536
    %v1538 = vsub.f32 1.0, %v1537
    %v1539 = vmul.f32 %v1536, %v1538
    %v1540 = vadd.f32 %v1536, %v1539
    %vm1541 = vweird.f32 %v1535
    %vm1542 = vweird.f32 %v1536
    %vm1543 = vmor %vm1541, %vm1542
    %v1544 = vsel %vm1543, %v1536, %v1540
    %v1545 = vand.u32 2147483647, %v1535
    %vm1546 = vcmp.eq.f32.partialorder %v1545, 8.507059e+37
    %v1547 = vand.u32 %v1535, 2147483648
    %v1548 = vor.u32 1.1754944e-38, %v1547
    %v1549 = vsel %vm1546, %v1548, %v1544
    %v1550 = vmul.f32 1.0, %v1549
    %v1551 = vmul.f32 %v1530, %v1509
    %v1552 = vadd.f32 %v1394, %v1551
    %v1553 = vtanh.pop %v1552
    %v1554 = vsub.f32 1.0, %v1550
    %v1555 = vmul.f32 %v1554, %v1553
    %v1556 = vmul.f32 %v1550, %v1209
    %v1557 = vadd.f32 %v1555, %v1556
    %v1558 = vsel %vm1390, 1, 0
    %1559 = vset.pattern.permute.xlu0 0
    %1560 = vperm.xlu0 %1559, %v1558
    %v1561 = vpop.permute.xlu0 %1560
    %vm1562 = vcmp.eq.s32.totalorder %v1561, 1
    %v1563 = vsel %vm1562, %v1557, %v1209
    %v1564 = vsel %vm1562, %v1557, 0.0
    %s1565 = scalar_lea.vmem [#allocation4], 40
    %1566 = vst [vmem:[%s1565] sm:$0xff] %v1564
    %vm1567 = vcmp.gt.s32.totalorder %v508, 3
    %s1568 = scalar_lea.vmem [#allocation2], 72
    %v1569 = vld [vmem:[%s1568] sm:$0xff]
    %v1570 = vld [vmem:[%s1568 + $0x8] sm:$0xff]
    %v1571 = vld [vmem:[%s1568 + $0x10] sm:$0xff]
    %v1572 = vld [vmem:[#allocation10] sm:$0xff]
    %v1573 = vld [vmem:[#allocation10 + $0x8] sm:$0xff]
    %v1574 = vld [vmem:[#allocation10 + $0x10] sm:$0xff]
    %v1575 = vld [vmem:[#allocation10 + $0x18] sm:$0xff]
    %v1576 = vld [vmem:[#allocation10 + $0x20] sm:$0xff]
    %v1577 = vld [vmem:[#allocation10 + $0x28] sm:$0xff]
    %v1578 = vld [vmem:[#allocation10 + $0x30] sm:$0xff]
    %v1579 = vld [vmem:[#allocation10 + $0x38] sm:$0xff]
    %v1580 = vld [vmem:[#allocation10 + $0x40] sm:$0xff]
    %v1581 = vld [vmem:[#allocation10 + $0x48] sm:$0xff]
    %v1582 = vld [vmem:[#allocation10 + $0x50] sm:$0xff]
    %v1583 = vld [vmem:[#allocation10 + $0x58] sm:$0xff]
    %v1584 = vld [vmem:[#allocation10 + $0x60] sm:$0xff]
    %v1585 = vld [vmem:[#allocation10 + $0x68] sm:$0xff]
    %v1586 = vld [vmem:[#allocation10 + $0x70] sm:$0xff]
    %v1587 = vld [vmem:[#allocation10 + $0x78] sm:$0xff]
    %v1588 = vld [vmem:[#allocation10 + $0x80] sm:$0xff]
    %v1589 = vld [vmem:[#allocation10 + $0x88] sm:$0xff]
    %v1590 = vld [vmem:[#allocation10 + $0x90] sm:$0xff]
    %v1591 = vld [vmem:[#allocation10 + $0x98] sm:$0xff]
    %v1592 = vld [vmem:[#allocation10 + $0xa0] sm:$0xff]
    %v1593 = vld [vmem:[#allocation10 + $0xa8] sm:$0xff]
    %v1594 = vld [vmem:[#allocation10 + $0xb0] sm:$0xff]
    %v1595 = vld [vmem:[#allocation10 + $0xb8] sm:$0xff]
    %v1596 = vld [vmem:[#allocation10 + $0xc0] sm:$0xff]
    %v1597 = vld [vmem:[#allocation10 + $0xc8] sm:$0xff]
    %v1598 = vld [vmem:[#allocation10 + $0xd0] sm:$0xff]
    %v1599 = vld [vmem:[#allocation10 + $0xd8] sm:$0xff]
    %v1600 = vld [vmem:[#allocation10 + $0xe0] sm:$0xff]
    %v1601 = vld [vmem:[#allocation10 + $0xe8] sm:$0xff]
    %v1602 = vld [vmem:[#allocation10 + $0xf0] sm:$0xff]
    %v1603 = vld [vmem:[#allocation10 + $0xf8] sm:$0xff]
    %v1604 = vld [vmem:[#allocation10 + $0x100] sm:$0xff]
    %v1605 = vld [vmem:[#allocation10 + $0x108] sm:$0xff]
    %v1606 = vld [vmem:[#allocation10 + $0x110] sm:$0xff]
    %v1607 = vld [vmem:[#allocation10 + $0x118] sm:$0xff]
    %v1608 = vld [vmem:[#allocation10 + $0x120] sm:$0xff]
    %v1609 = vld [vmem:[#allocation10 + $0x128] sm:$0xff]
    %v1610 = vld [vmem:[#allocation10 + $0x130] sm:$0xff]
    %v1611 = vld [vmem:[#allocation10 + $0x138] sm:$0xff]
    %v1612 = vld [vmem:[#allocation10 + $0x140] sm:$0xff]
    %v1613 = vld [vmem:[#allocation10 + $0x148] sm:$0xff]
    %v1614 = vld [vmem:[#allocation10 + $0x150] sm:$0xff]
    %v1615 = vld [vmem:[#allocation10 + $0x158] sm:$0xff]
    %v1616 = vld [vmem:[#allocation10 + $0x160] sm:$0xff]
    %v1617 = vld [vmem:[#allocation10 + $0x168] sm:$0xff]
    %v1618 = vld [vmem:[#allocation10 + $0x170] sm:$0xff]
    %v1619 = vld [vmem:[#allocation10 + $0x178] sm:$0xff]
    %v1620 = vld [vmem:[%s5] sm:$0x7]
    %v1622 = vperm.slane %v1620, 0
    %v1623 = vperm.slane %v1620, 1
    %v1624 = vperm.slane %v1620, 2
    %1628 = vmatpush.msra.mxu0 %v1617
    %1629 = vmatpush.msra.mxu0 %v1614
    %1630 = vmatpush.msra.mxu0 %v1611
    %1631 = vmatpush.msra.mxu0 %v1608
    %1632 = vmatpush.msra.mxu0 %v1605
    %1633 = vmatpush.msra.mxu0 %v1602
    %1634 = vmatpush.msra.mxu0 %v1599
    %1635 = vmatpush.msra.mxu0 %v1596
    %1636 = vmatpush.msra.mxu0 %v1593
    %1637 = vmatpush.msra.mxu0 %v1590
    %1638 = vmatpush.msra.mxu0 %v1587
    %1639 = vmatpush.msra.mxu0 %v1584
    %1640 = vmatpush.msra.mxu0 %v1581
    %1641 = vmatpush.msra.mxu0 %v1578
    %1642 = vmatpush.msra.mxu0 %v1575
    %1643 = vmatpush.msra.mxu0 %v1572
    %1644 = vmatmul.f32.gmra.mxu0 %v1386
    %v1645 = vpop.f32.mrf.mxu0
    %v1646 = vadd.f32 %v1622, %v1645
    %1647 = vdwg.mxu0
    %1648 = vmatpush.msra.mxu0 %v1618
    %1649 = vmatpush.msra.mxu0 %v1615
    %1650 = vmatpush.msra.mxu0 %v1612
    %1651 = vmatpush.msra.mxu0 %v1609
    %1652 = vmatpush.msra.mxu0 %v1606
    %1653 = vmatpush.msra.mxu0 %v1603
    %1654 = vmatpush.msra.mxu0 %v1600
    %1655 = vmatpush.msra.mxu0 %v1597
    %1656 = vmatpush.msra.mxu0 %v1594
    %1657 = vmatpush.msra.mxu0 %v1591
    %1658 = vmatpush.msra.mxu0 %v1588
    %1659 = vmatpush.msra.mxu0 %v1585
    %1660 = vmatpush.msra.mxu0 %v1582
    %1661 = vmatpush.msra.mxu0 %v1579
    %1662 = vmatpush.msra.mxu0 %v1576
    %1663 = vmatpush.msra.mxu0 %v1573
    %1664 = vmatmul.f32.gmra.mxu0 %v1386
    %v1665 = vpop.f32.mrf.mxu0
    %v1666 = vadd.f32 %v1623, %v1665
    %1667 = vdwg.mxu0
    %1668 = vmatpush.msra.mxu0 %v1619
    %1669 = vmatpush.msra.mxu0 %v1616
    %1670 = vmatpush.msra.mxu0 %v1613
    %1671 = vmatpush.msra.mxu0 %v1610
    %1672 = vmatpush.msra.mxu0 %v1607
    %1673 = vmatpush.msra.mxu0 %v1604
    %1674 = vmatpush.msra.mxu0 %v1601
    %1675 = vmatpush.msra.mxu0 %v1598
    %1676 = vmatpush.msra.mxu0 %v1595
    %1677 = vmatpush.msra.mxu0 %v1592
    %1678 = vmatpush.msra.mxu0 %v1589
    %1679 = vmatpush.msra.mxu0 %v1586
    %1680 = vmatpush.msra.mxu0 %v1583
    %1681 = vmatpush.msra.mxu0 %v1580
    %1682 = vmatpush.msra.mxu0 %v1577
    %1683 = vmatpush.msra.mxu0 %v1574
    %1684 = vmatmul.f32.gmra.mxu0 %v1386
    %v1685 = vpop.f32.mrf.mxu0
    %v1686 = vadd.f32 %v1624, %v1685
    %1687 = vdwg.mxu0
    %v1688 = vadd.f32 %v1569, %v1646
    %v1689 = vxor.u32 %v1688, 2147483648
    %v1690 = vmul.f32 %v1689, 1.442695
    %v1691 = vpow.pop %v1690
    %v1692 = vadd.f32 %v1691, 1.0
    %v1693 = vrcp.pop %v1692
    %v1694 = vmul.f32 %v1692, %v1693
    %v1695 = vsub.f32 1.0, %v1694
    %v1696 = vmul.f32 %v1693, %v1695
    %v1697 = vadd.f32 %v1693, %v1696
    %vm1698 = vweird.f32 %v1692
    %vm1699 = vweird.f32 %v1693
    %vm1700 = vmor %vm1698, %vm1699
    %v1701 = vsel %vm1700, %v1693, %v1697
    %v1702 = vand.u32 2147483647, %v1692
    %vm1703 = vcmp.eq.f32.partialorder %v1702, 8.507059e+37
    %v1704 = vand.u32 %v1692, 2147483648
    %v1705 = vor.u32 1.1754944e-38, %v1704
    %v1706 = vsel %vm1703, %v1705, %v1701
    %v1707 = vmul.f32 1.0, %v1706
    %v1708 = vadd.f32 %v1570, %v1666
    %v1709 = vxor.u32 %v1708, 2147483648
    %v1710 = vmul.f32 %v1709, 1.442695
    %v1711 = vpow.pop %v1710
    %v1712 = vadd.f32 %v1711, 1.0
    %v1713 = vrcp.pop %v1712
    %v1714 = vmul.f32 %v1712, %v1713
    %v1715 = vsub.f32 1.0, %v1714
    %v1716 = vmul.f32 %v1713, %v1715
    %v1717 = vadd.f32 %v1713, %v1716
    %vm1718 = vweird.f32 %v1712
    %vm1719 = vweird.f32 %v1713
    %vm1720 = vmor %vm1718, %vm1719
    %v1721 = vsel %vm1720, %v1713, %v1717
    %v1722 = vand.u32 2147483647, %v1712
    %vm1723 = vcmp.eq.f32.partialorder %v1722, 8.507059e+37
    %v1724 = vand.u32 %v1712, 2147483648
    %v1725 = vor.u32 1.1754944e-38, %v1724
    %v1726 = vsel %vm1723, %v1725, %v1721
    %v1727 = vmul.f32 1.0, %v1726
    %v1728 = vmul.f32 %v1707, %v1686
    %v1729 = vadd.f32 %v1571, %v1728
    %v1730 = vtanh.pop %v1729
    %v1731 = vsub.f32 1.0, %v1727
    %v1732 = vmul.f32 %v1731, %v1730
    %v1733 = vmul.f32 %v1727, %v1386
    %v1734 = vadd.f32 %v1732, %v1733
    %v1735 = vsel %vm1567, 1, 0
    %1736 = vset.pattern.permute.xlu0 0
    %1737 = vperm.xlu0 %1736, %v1735
    %v1738 = vpop.permute.xlu0 %1737
    %vm1739 = vcmp.eq.s32.totalorder %v1738, 1
    %v1740 = vsel %vm1739, %v1734, %v1386
    %v1741 = vsel %vm1739, %v1734, 0.0
    %s1742 = scalar_lea.vmem [#allocation13], 24
    %1743 = vst [vmem:[%s1742] sm:$0xff] %v1741
    %vm1744 = vcmp.gt.s32.totalorder %v508, 4
    %s1745 = scalar_lea.vmem [#allocation3], 96
    %v1746 = vld [vmem:[%s1745] sm:$0xff]
    %v1747 = vld [vmem:[%s1745 + $0x8] sm:$0xff]
    %v1748 = vld [vmem:[%s1745 + $0x10] sm:$0xff]
    %v1749 = vld [vmem:[#allocation11] sm:$0xff]
    %v1750 = vld [vmem:[#allocation11 + $0x8] sm:$0xff]
    %v1751 = vld [vmem:[#allocation11 + $0x10] sm:$0xff]
    %v1752 = vld [vmem:[#allocation11 + $0x18] sm:$0xff]
    %v1753 = vld [vmem:[#allocation11 + $0x20] sm:$0xff]
    %v1754 = vld [vmem:[#allocation11 + $0x28] sm:$0xff]
    %v1755 = vld [vmem:[#allocation11 + $0x30] sm:$0xff]
    %v1756 = vld [vmem:[#allocation11 + $0x38] sm:$0xff]
    %v1757 = vld [vmem:[#allocation11 + $0x40] sm:$0xff]
    %v1758 = vld [vmem:[#allocation11 + $0x48] sm:$0xff]
    %v1759 = vld [vmem:[#allocation11 + $0x50] sm:$0xff]
    %v1760 = vld [vmem:[#allocation11 + $0x58] sm:$0xff]
    %v1761 = vld [vmem:[#allocation11 + $0x60] sm:$0xff]
    %v1762 = vld [vmem:[#allocation11 + $0x68] sm:$0xff]
    %v1763 = vld [vmem:[#allocation11 + $0x70] sm:$0xff]
    %v1764 = vld [vmem:[#allocation11 + $0x78] sm:$0xff]
    %v1765 = vld [vmem:[#allocation11 + $0x80] sm:$0xff]
    %v1766 = vld [vmem:[#allocation11 + $0x88] sm:$0xff]
    %v1767 = vld [vmem:[#allocation11 + $0x90] sm:$0xff]
    %v1768 = vld [vmem:[#allocation11 + $0x98] sm:$0xff]
    %v1769 = vld [vmem:[#allocation11 + $0xa0] sm:$0xff]
    %v1770 = vld [vmem:[#allocation11 + $0xa8] sm:$0xff]
    %v1771 = vld [vmem:[#allocation11 + $0xb0] sm:$0xff]
    %v1772 = vld [vmem:[#allocation11 + $0xb8] sm:$0xff]
    %v1773 = vld [vmem:[#allocation11 + $0xc0] sm:$0xff]
    %v1774 = vld [vmem:[#allocation11 + $0xc8] sm:$0xff]
    %v1775 = vld [vmem:[#allocation11 + $0xd0] sm:$0xff]
    %v1776 = vld [vmem:[#allocation11 + $0xd8] sm:$0xff]
    %v1777 = vld [vmem:[#allocation11 + $0xe0] sm:$0xff]
    %v1778 = vld [vmem:[#allocation11 + $0xe8] sm:$0xff]
    %v1779 = vld [vmem:[#allocation11 + $0xf0] sm:$0xff]
    %v1780 = vld [vmem:[#allocation11 + $0xf8] sm:$0xff]
    %v1781 = vld [vmem:[#allocation11 + $0x100] sm:$0xff]
    %v1782 = vld [vmem:[#allocation11 + $0x108] sm:$0xff]
    %v1783 = vld [vmem:[#allocation11 + $0x110] sm:$0xff]
    %v1784 = vld [vmem:[#allocation11 + $0x118] sm:$0xff]
    %v1785 = vld [vmem:[#allocation11 + $0x120] sm:$0xff]
    %v1786 = vld [vmem:[#allocation11 + $0x128] sm:$0xff]
    %v1787 = vld [vmem:[#allocation11 + $0x130] sm:$0xff]
    %v1788 = vld [vmem:[#allocation11 + $0x138] sm:$0xff]
    %v1789 = vld [vmem:[#allocation11 + $0x140] sm:$0xff]
    %v1790 = vld [vmem:[#allocation11 + $0x148] sm:$0xff]
    %v1791 = vld [vmem:[#allocation11 + $0x150] sm:$0xff]
    %v1792 = vld [vmem:[#allocation11 + $0x158] sm:$0xff]
    %v1793 = vld [vmem:[#allocation11 + $0x160] sm:$0xff]
    %v1794 = vld [vmem:[#allocation11 + $0x168] sm:$0xff]
    %v1795 = vld [vmem:[#allocation11 + $0x170] sm:$0xff]
    %v1796 = vld [vmem:[#allocation11 + $0x178] sm:$0xff]
    %v1797 = vld [vmem:[%s7] sm:$0x7]
    %v1799 = vperm.slane %v1797, 0
    %v1800 = vperm.slane %v1797, 1
    %v1801 = vperm.slane %v1797, 2
    %1805 = vmatpush.msra.mxu0 %v1794
    %1806 = vmatpush.msra.mxu0 %v1791
    %1807 = vmatpush.msra.mxu0 %v1788
    %1808 = vmatpush.msra.mxu0 %v1785
    %1809 = vmatpush.msra.mxu0 %v1782
    %1810 = vmatpush.msra.mxu0 %v1779
    %1811 = vmatpush.msra.mxu0 %v1776
    %1812 = vmatpush.msra.mxu0 %v1773
    %1813 = vmatpush.msra.mxu0 %v1770
    %1814 = vmatpush.msra.mxu0 %v1767
    %1815 = vmatpush.msra.mxu0 %v1764
    %1816 = vmatpush.msra.mxu0 %v1761
    %1817 = vmatpush.msra.mxu0 %v1758
    %1818 = vmatpush.msra.mxu0 %v1755
    %1819 = vmatpush.msra.mxu0 %v1752
    %1820 = vmatpush.msra.mxu0 %v1749
    %1821 = vmatmul.f32.gmra.mxu0 %v1563
    %v1822 = vpop.f32.mrf.mxu0
    %v1823 = vadd.f32 %v1799, %v1822
    %1824 = vdwg.mxu0
    %1825 = vmatpush.msra.mxu0 %v1795
    %1826 = vmatpush.msra.mxu0 %v1792
    %1827 = vmatpush.msra.mxu0 %v1789
    %1828 = vmatpush.msra.mxu0 %v1786
    %1829 = vmatpush.msra.mxu0 %v1783
    %1830 = vmatpush.msra.mxu0 %v1780
    %1831 = vmatpush.msra.mxu0 %v1777
    %1832 = vmatpush.msra.mxu0 %v1774
    %1833 = vmatpush.msra.mxu0 %v1771
    %1834 = vmatpush.msra.mxu0 %v1768
    %1835 = vmatpush.msra.mxu0 %v1765
    %1836 = vmatpush.msra.mxu0 %v1762
    %1837 = vmatpush.msra.mxu0 %v1759
    %1838 = vmatpush.msra.mxu0 %v1756
    %1839 = vmatpush.msra.mxu0 %v1753
    %1840 = vmatpush.msra.mxu0 %v1750
    %1841 = vmatmul.f32.gmra.mxu0 %v1563
    %v1842 = vpop.f32.mrf.mxu0
    %v1843 = vadd.f32 %v1800, %v1842
    %1844 = vdwg.mxu0
    %1845 = vmatpush.msra.mxu0 %v1796
    %1846 = vmatpush.msra.mxu0 %v1793
    %1847 = vmatpush.msra.mxu0 %v1790
    %1848 = vmatpush.msra.mxu0 %v1787
    %1849 = vmatpush.msra.mxu0 %v1784
    %1850 = vmatpush.msra.mxu0 %v1781
    %1851 = vmatpush.msra.mxu0 %v1778
    %1852 = vmatpush.msra.mxu0 %v1775
    %1853 = vmatpush.msra.mxu0 %v1772
    %1854 = vmatpush.msra.mxu0 %v1769
    %1855 = vmatpush.msra.mxu0 %v1766
    %1856 = vmatpush.msra.mxu0 %v1763
    %1857 = vmatpush.msra.mxu0 %v1760
    %1858 = vmatpush.msra.mxu0 %v1757
    %1859 = vmatpush.msra.mxu0 %v1754
    %1860 = vmatpush.msra.mxu0 %v1751
    %1861 = vmatmul.f32.gmra.mxu0 %v1563
    %v1862 = vpop.f32.mrf.mxu0
    %v1863 = vadd.f32 %v1801, %v1862
    %1864 = vdwg.mxu0
    %v1865 = vadd.f32 %v1746, %v1823
    %v1866 = vxor.u32 %v1865, 2147483648
    %v1867 = vmul.f32 %v1866, 1.442695
    %v1868 = vpow.pop %v1867
    %v1869 = vadd.f32 %v1868, 1.0
    %v1870 = vrcp.pop %v1869
    %v1871 = vmul.f32 %v1869, %v1870
    %v1872 = vsub.f32 1.0, %v1871
    %v1873 = vmul.f32 %v1870, %v1872
    %v1874 = vadd.f32 %v1870, %v1873
    %vm1875 = vweird.f32 %v1869
    %vm1876 = vweird.f32 %v1870
    %vm1877 = vmor %vm1875, %vm1876
    %v1878 = vsel %vm1877, %v1870, %v1874
    %v1879 = vand.u32 2147483647, %v1869
    %vm1880 = vcmp.eq.f32.partialorder %v1879, 8.507059e+37
    %v1881 = vand.u32 %v1869, 2147483648
    %v1882 = vor.u32 1.1754944e-38, %v1881
    %v1883 = vsel %vm1880, %v1882, %v1878
    %v1884 = vmul.f32 1.0, %v1883
    %v1885 = vadd.f32 %v1747, %v1843
    %v1886 = vxor.u32 %v1885, 2147483648
    %v1887 = vmul.f32 %v1886, 1.442695
    %v1888 = vpow.pop %v1887
    %v1889 = vadd.f32 %v1888, 1.0
    %v1890 = vrcp.pop %v1889
    %v1891 = vmul.f32 %v1889, %v1890
    %v1892 = vsub.f32 1.0, %v1891
    %v1893 = vmul.f32 %v1890, %v1892
    %v1894 = vadd.f32 %v1890, %v1893
    %vm1895 = vweird.f32 %v1889
    %vm1896 = vweird.f32 %v1890
    %vm1897 = vmor %vm1895, %vm1896
    %v1898 = vsel %vm1897, %v1890, %v1894
    %v1899 = vand.u32 2147483647, %v1889
    %vm1900 = vcmp.eq.f32.partialorder %v1899, 8.507059e+37
    %v1901 = vand.u32 %v1889, 2147483648
    %v1902 = vor.u32 1.1754944e-38, %v1901
    %v1903 = vsel %vm1900, %v1902, %v1898
    %v1904 = vmul.f32 1.0, %v1903
    %v1905 = vmul.f32 %v1884, %v1863
    %v1906 = vadd.f32 %v1748, %v1905
    %v1907 = vtanh.pop %v1906
    %v1908 = vsub.f32 1.0, %v1904
    %v1909 = vmul.f32 %v1908, %v1907
    %v1910 = vmul.f32 %v1904, %v1563
    %v1911 = vadd.f32 %v1909, %v1910
    %v1912 = vsel %vm1744, 1, 0
    %1913 = vset.pattern.permute.xlu0 0
    %1914 = vperm.xlu0 %1913, %v1912
    %v1915 = vpop.permute.xlu0 %1914
    %vm1916 = vcmp.eq.s32.totalorder %v1915, 1
    %v1917 = vsel %vm1916, %v1911, %v1563
    %v1918 = vsel %vm1916, %v1911, 0.0
    %s1919 = scalar_lea.vmem [#allocation4], 32
    %1920 = vst [vmem:[%s1919] sm:$0xff] %v1918
    %s1921 = scalar_lea.vmem [#allocation2], 96
    %v1922 = vld [vmem:[%s1921] sm:$0xff]
    %v1923 = vld [vmem:[%s1921 + $0x8] sm:$0xff]
    %v1924 = vld [vmem:[%s1921 + $0x10] sm:$0xff]
    %v1925 = vld [vmem:[#allocation10] sm:$0xff]
    %v1926 = vld [vmem:[#allocation10 + $0x8] sm:$0xff]
    %v1927 = vld [vmem:[#allocation10 + $0x10] sm:$0xff]
    %v1928 = vld [vmem:[#allocation10 + $0x18] sm:$0xff]
    %v1929 = vld [vmem:[#allocation10 + $0x20] sm:$0xff]
    %v1930 = vld [vmem:[#allocation10 + $0x28] sm:$0xff]
    %v1931 = vld [vmem:[#allocation10 + $0x30] sm:$0xff]
    %v1932 = vld [vmem:[#allocation10 + $0x38] sm:$0xff]
    %v1933 = vld [vmem:[#allocation10 + $0x40] sm:$0xff]
    %v1934 = vld [vmem:[#allocation10 + $0x48] sm:$0xff]
    %v1935 = vld [vmem:[#allocation10 + $0x50] sm:$0xff]
    %v1936 = vld [vmem:[#allocation10 + $0x58] sm:$0xff]
    %v1937 = vld [vmem:[#allocation10 + $0x60] sm:$0xff]
    %v1938 = vld [vmem:[#allocation10 + $0x68] sm:$0xff]
    %v1939 = vld [vmem:[#allocation10 + $0x70] sm:$0xff]
    %v1940 = vld [vmem:[#allocation10 + $0x78] sm:$0xff]
    %v1941 = vld [vmem:[#allocation10 + $0x80] sm:$0xff]
    %v1942 = vld [vmem:[#allocation10 + $0x88] sm:$0xff]
    %v1943 = vld [vmem:[#allocation10 + $0x90] sm:$0xff]
    %v1944 = vld [vmem:[#allocation10 + $0x98] sm:$0xff]
    %v1945 = vld [vmem:[#allocation10 + $0xa0] sm:$0xff]
    %v1946 = vld [vmem:[#allocation10 + $0xa8] sm:$0xff]
    %v1947 = vld [vmem:[#allocation10 + $0xb0] sm:$0xff]
    %v1948 = vld [vmem:[#allocation10 + $0xb8] sm:$0xff]
    %v1949 = vld [vmem:[#allocation10 + $0xc0] sm:$0xff]
    %v1950 = vld [vmem:[#allocation10 + $0xc8] sm:$0xff]
    %v1951 = vld [vmem:[#allocation10 + $0xd0] sm:$0xff]
    %v1952 = vld [vmem:[#allocation10 + $0xd8] sm:$0xff]
    %v1953 = vld [vmem:[#allocation10 + $0xe0] sm:$0xff]
    %v1954 = vld [vmem:[#allocation10 + $0xe8] sm:$0xff]
    %v1955 = vld [vmem:[#allocation10 + $0xf0] sm:$0xff]
    %v1956 = vld [vmem:[#allocation10 + $0xf8] sm:$0xff]
    %v1957 = vld [vmem:[#allocation10 + $0x100] sm:$0xff]
    %v1958 = vld [vmem:[#allocation10 + $0x108] sm:$0xff]
    %v1959 = vld [vmem:[#allocation10 + $0x110] sm:$0xff]
    %v1960 = vld [vmem:[#allocation10 + $0x118] sm:$0xff]
    %v1961 = vld [vmem:[#allocation10 + $0x120] sm:$0xff]
    %v1962 = vld [vmem:[#allocation10 + $0x128] sm:$0xff]
    %v1963 = vld [vmem:[#allocation10 + $0x130] sm:$0xff]
    %v1964 = vld [vmem:[#allocation10 + $0x138] sm:$0xff]
    %v1965 = vld [vmem:[#allocation10 + $0x140] sm:$0xff]
    %v1966 = vld [vmem:[#allocation10 + $0x148] sm:$0xff]
    %v1967 = vld [vmem:[#allocation10 + $0x150] sm:$0xff]
    %v1968 = vld [vmem:[#allocation10 + $0x158] sm:$0xff]
    %v1969 = vld [vmem:[#allocation10 + $0x160] sm:$0xff]
    %v1970 = vld [vmem:[#allocation10 + $0x168] sm:$0xff]
    %v1971 = vld [vmem:[#allocation10 + $0x170] sm:$0xff]
    %v1972 = vld [vmem:[#allocation10 + $0x178] sm:$0xff]
    %v1973 = vld [vmem:[%s5] sm:$0x7]
    %v1975 = vperm.slane %v1973, 0
    %v1976 = vperm.slane %v1973, 1
    %v1977 = vperm.slane %v1973, 2
    %1981 = vmatpush.msra.mxu0 %v1970
    %1982 = vmatpush.msra.mxu0 %v1967
    %1983 = vmatpush.msra.mxu0 %v1964
    %1984 = vmatpush.msra.mxu0 %v1961
    %1985 = vmatpush.msra.mxu0 %v1958
    %1986 = vmatpush.msra.mxu0 %v1955
    %1987 = vmatpush.msra.mxu0 %v1952
    %1988 = vmatpush.msra.mxu0 %v1949
    %1989 = vmatpush.msra.mxu0 %v1946
    %1990 = vmatpush.msra.mxu0 %v1943
    %1991 = vmatpush.msra.mxu0 %v1940
    %1992 = vmatpush.msra.mxu0 %v1937
    %1993 = vmatpush.msra.mxu0 %v1934
    %1994 = vmatpush.msra.mxu0 %v1931
    %1995 = vmatpush.msra.mxu0 %v1928
    %1996 = vmatpush.msra.mxu0 %v1925
    %1997 = vmatmul.f32.gmra.mxu0 %v1740
    %v1998 = vpop.f32.mrf.mxu0
    %v1999 = vadd.f32 %v1975, %v1998
    %2000 = vdwg.mxu0
    %2001 = vmatpush.msra.mxu0 %v1971
    %2002 = vmatpush.msra.mxu0 %v1968
    %2003 = vmatpush.msra.mxu0 %v1965
    %2004 = vmatpush.msra.mxu0 %v1962
    %2005 = vmatpush.msra.mxu0 %v1959
    %2006 = vmatpush.msra.mxu0 %v1956
    %2007 = vmatpush.msra.mxu0 %v1953
    %2008 = vmatpush.msra.mxu0 %v1950
    %2009 = vmatpush.msra.mxu0 %v1947
    %2010 = vmatpush.msra.mxu0 %v1944
    %2011 = vmatpush.msra.mxu0 %v1941
    %2012 = vmatpush.msra.mxu0 %v1938
    %2013 = vmatpush.msra.mxu0 %v1935
    %2014 = vmatpush.msra.mxu0 %v1932
    %2015 = vmatpush.msra.mxu0 %v1929
    %2016 = vmatpush.msra.mxu0 %v1926
    %2017 = vmatmul.f32.gmra.mxu0 %v1740
    %v2018 = vpop.f32.mrf.mxu0
    %v2019 = vadd.f32 %v1976, %v2018
    %2020 = vdwg.mxu0
    %2021 = vmatpush.msra.mxu0 %v1972
    %2022 = vmatpush.msra.mxu0 %v1969
    %2023 = vmatpush.msra.mxu0 %v1966
    %2024 = vmatpush.msra.mxu0 %v1963
    %2025 = vmatpush.msra.mxu0 %v1960
    %2026 = vmatpush.msra.mxu0 %v1957
    %2027 = vmatpush.msra.mxu0 %v1954
    %2028 = vmatpush.msra.mxu0 %v1951
    %2029 = vmatpush.msra.mxu0 %v1948
    %2030 = vmatpush.msra.mxu0 %v1945
    %2031 = vmatpush.msra.mxu0 %v1942
    %2032 = vmatpush.msra.mxu0 %v1939
    %2033 = vmatpush.msra.mxu0 %v1936
    %2034 = vmatpush.msra.mxu0 %v1933
    %2035 = vmatpush.msra.mxu0 %v1930
    %2036 = vmatpush.msra.mxu0 %v1927
    %2037 = vmatmul.f32.gmra.mxu0 %v1740
    %v2038 = vpop.f32.mrf.mxu0
    %v2039 = vadd.f32 %v1977, %v2038
    %2040 = vdwg.mxu0
    %v2041 = vadd.f32 %v1922, %v1999
    %v2042 = vxor.u32 %v2041, 2147483648
    %v2043 = vmul.f32 %v2042, 1.442695
    %v2044 = vpow.pop %v2043
    %v2045 = vadd.f32 %v2044, 1.0
    %v2046 = vrcp.pop %v2045
    %v2047 = vmul.f32 %v2045, %v2046
    %v2048 = vsub.f32 1.0, %v2047
    %v2049 = vmul.f32 %v2046, %v2048
    %v2050 = vadd.f32 %v2046, %v2049
    %vm2051 = vweird.f32 %v2045
    %vm2052 = vweird.f32 %v2046
    %vm2053 = vmor %vm2051, %vm2052
    %v2054 = vsel %vm2053, %v2046, %v2050
    %v2055 = vand.u32 2147483647, %v2045
    %vm2056 = vcmp.eq.f32.partialorder %v2055, 8.507059e+37
    %v2057 = vand.u32 %v2045, 2147483648
    %v2058 = vor.u32 1.1754944e-38, %v2057
    %v2059 = vsel %vm2056, %v2058, %v2054
    %v2060 = vmul.f32 1.0, %v2059
    %v2061 = vadd.f32 %v1923, %v2019
    %v2062 = vxor.u32 %v2061, 2147483648
    %v2063 = vmul.f32 %v2062, 1.442695
    %v2064 = vpow.pop %v2063
    %v2065 = vadd.f32 %v2064, 1.0
    %v2066 = vrcp.pop %v2065
    %v2067 = vmul.f32 %v2065, %v2066
    %v2068 = vsub.f32 1.0, %v2067
    %v2069 = vmul.f32 %v2066, %v2068
    %v2070 = vadd.f32 %v2066, %v2069
    %vm2071 = vweird.f32 %v2065
    %vm2072 = vweird.f32 %v2066
    %vm2073 = vmor %vm2071, %vm2072
    %v2074 = vsel %vm2073, %v2066, %v2070
    %v2075 = vand.u32 2147483647, %v2065
    %vm2076 = vcmp.eq.f32.partialorder %v2075, 8.507059e+37
    %v2077 = vand.u32 %v2065, 2147483648
    %v2078 = vor.u32 1.1754944e-38, %v2077
    %v2079 = vsel %vm2076, %v2078, %v2074
    %v2080 = vmul.f32 1.0, %v2079
    %v2081 = vmul.f32 %v2060, %v2039
    %v2082 = vadd.f32 %v1924, %v2081
    %v2083 = vtanh.pop %v2082
    %v2084 = vsub.f32 1.0, %v2080
    %v2085 = vmul.f32 %v2084, %v2083
    %v2086 = vmul.f32 %v2080, %v1740
    %v2087 = vadd.f32 %v2085, %v2086
    %v2088 = vsel %vm1916, %v2087, %v1740
    %v2089 = vsel %vm1916, %v2087, 0.0
    %s2090 = scalar_lea.vmem [#allocation13], 32
    %2091 = vst [vmem:[%s2090] sm:$0xff] %v2089
    %s2092 = scalar_lea.vmem [#allocation3], 72
    %v2093 = vld [vmem:[%s2092] sm:$0xff]
    %v2094 = vld [vmem:[%s2092 + $0x8] sm:$0xff]
    %v2095 = vld [vmem:[%s2092 + $0x10] sm:$0xff]
    %v2096 = vld [vmem:[#allocation11] sm:$0xff]
    %v2097 = vld [vmem:[#allocation11 + $0x8] sm:$0xff]
    %v2098 = vld [vmem:[#allocation11 + $0x10] sm:$0xff]
    %v2099 = vld [vmem:[#allocation11 + $0x18] sm:$0xff]
    %v2100 = vld [vmem:[#allocation11 + $0x20] sm:$0xff]
    %v2101 = vld [vmem:[#allocation11 + $0x28] sm:$0xff]
    %v2102 = vld [vmem:[#allocation11 + $0x30] sm:$0xff]
    %v2103 = vld [vmem:[#allocation11 + $0x38] sm:$0xff]
    %v2104 = vld [vmem:[#allocation11 + $0x40] sm:$0xff]
    %v2105 = vld [vmem:[#allocation11 + $0x48] sm:$0xff]
    %v2106 = vld [vmem:[#allocation11 + $0x50] sm:$0xff]
    %v2107 = vld [vmem:[#allocation11 + $0x58] sm:$0xff]
    %v2108 = vld [vmem:[#allocation11 + $0x60] sm:$0xff]
    %v2109 = vld [vmem:[#allocation11 + $0x68] sm:$0xff]
    %v2110 = vld [vmem:[#allocation11 + $0x70] sm:$0xff]
    %v2111 = vld [vmem:[#allocation11 + $0x78] sm:$0xff]
    %v2112 = vld [vmem:[#allocation11 + $0x80] sm:$0xff]
    %v2113 = vld [vmem:[#allocation11 + $0x88] sm:$0xff]
    %v2114 = vld [vmem:[#allocation11 + $0x90] sm:$0xff]
    %v2115 = vld [vmem:[#allocation11 + $0x98] sm:$0xff]
    %v2116 = vld [vmem:[#allocation11 + $0xa0] sm:$0xff]
    %v2117 = vld [vmem:[#allocation11 + $0xa8] sm:$0xff]
    %v2118 = vld [vmem:[#allocation11 + $0xb0] sm:$0xff]
    %v2119 = vld [vmem:[#allocation11 + $0xb8] sm:$0xff]
    %v2120 = vld [vmem:[#allocation11 + $0xc0] sm:$0xff]
    %v2121 = vld [vmem:[#allocation11 + $0xc8] sm:$0xff]
    %v2122 = vld [vmem:[#allocation11 + $0xd0] sm:$0xff]
    %v2123 = vld [vmem:[#allocation11 + $0xd8] sm:$0xff]
    %v2124 = vld [vmem:[#allocation11 + $0xe0] sm:$0xff]
    %v2125 = vld [vmem:[#allocation11 + $0xe8] sm:$0xff]
    %v2126 = vld [vmem:[#allocation11 + $0xf0] sm:$0xff]
    %v2127 = vld [vmem:[#allocation11 + $0xf8] sm:$0xff]
    %v2128 = vld [vmem:[#allocation11 + $0x100] sm:$0xff]
    %v2129 = vld [vmem:[#allocation11 + $0x108] sm:$0xff]
    %v2130 = vld [vmem:[#allocation11 + $0x110] sm:$0xff]
    %v2131 = vld [vmem:[#allocation11 + $0x118] sm:$0xff]
    %v2132 = vld [vmem:[#allocation11 + $0x120] sm:$0xff]
    %v2133 = vld [vmem:[#allocation11 + $0x128] sm:$0xff]
    %v2134 = vld [vmem:[#allocation11 + $0x130] sm:$0xff]
    %v2135 = vld [vmem:[#allocation11 + $0x138] sm:$0xff]
    %v2136 = vld [vmem:[#allocation11 + $0x140] sm:$0xff]
    %v2137 = vld [vmem:[#allocation11 + $0x148] sm:$0xff]
    %v2138 = vld [vmem:[#allocation11 + $0x150] sm:$0xff]
    %v2139 = vld [vmem:[#allocation11 + $0x158] sm:$0xff]
    %v2140 = vld [vmem:[#allocation11 + $0x160] sm:$0xff]
    %v2141 = vld [vmem:[#allocation11 + $0x168] sm:$0xff]
    %v2142 = vld [vmem:[#allocation11 + $0x170] sm:$0xff]
    %v2143 = vld [vmem:[#allocation11 + $0x178] sm:$0xff]
    %v2144 = vld [vmem:[%s7] sm:$0x7]
    %v2146 = vperm.slane %v2144, 0
    %v2147 = vperm.slane %v2144, 1
    %v2148 = vperm.slane %v2144, 2
    %2152 = vmatpush.msra.mxu0 %v2141
    %2153 = vmatpush.msra.mxu0 %v2138
    %2154 = vmatpush.msra.mxu0 %v2135
    %2155 = vmatpush.msra.mxu0 %v2132
    %2156 = vmatpush.msra.mxu0 %v2129
    %2157 = vmatpush.msra.mxu0 %v2126
    %2158 = vmatpush.msra.mxu0 %v2123
    %2159 = vmatpush.msra.mxu0 %v2120
    %2160 = vmatpush.msra.mxu0 %v2117
    %2161 = vmatpush.msra.mxu0 %v2114
    %2162 = vmatpush.msra.mxu0 %v2111
    %2163 = vmatpush.msra.mxu0 %v2108
    %2164 = vmatpush.msra.mxu0 %v2105
    %2165 = vmatpush.msra.mxu0 %v2102
    %2166 = vmatpush.msra.mxu0 %v2099
    %2167 = vmatpush.msra.mxu0 %v2096
    %2168 = vmatmul.f32.gmra.mxu0 %v1917
    %v2169 = vpop.f32.mrf.mxu0
    %v2170 = vadd.f32 %v2146, %v2169
    %2171 = vdwg.mxu0
    %2172 = vmatpush.msra.mxu0 %v2142
    %2173 = vmatpush.msra.mxu0 %v2139
    %2174 = vmatpush.msra.mxu0 %v2136
    %2175 = vmatpush.msra.mxu0 %v2133
    %2176 = vmatpush.msra.mxu0 %v2130
    %2177 = vmatpush.msra.mxu0 %v2127
    %2178 = vmatpush.msra.mxu0 %v2124
    %2179 = vmatpush.msra.mxu0 %v2121
    %2180 = vmatpush.msra.mxu0 %v2118
    %2181 = vmatpush.msra.mxu0 %v2115
    %2182 = vmatpush.msra.mxu0 %v2112
    %2183 = vmatpush.msra.mxu0 %v2109
    %2184 = vmatpush.msra.mxu0 %v2106
    %2185 = vmatpush.msra.mxu0 %v2103
    %2186 = vmatpush.msra.mxu0 %v2100
    %2187 = vmatpush.msra.mxu0 %v2097
    %2188 = vmatmul.f32.gmra.mxu0 %v1917
    %v2189 = vpop.f32.mrf.mxu0
    %v2190 = vadd.f32 %v2147, %v2189
    %2191 = vdwg.mxu0
    %2192 = vmatpush.msra.mxu0 %v2143
    %2193 = vmatpush.msra.mxu0 %v2140
    %2194 = vmatpush.msra.mxu0 %v2137
    %2195 = vmatpush.msra.mxu0 %v2134
    %2196 = vmatpush.msra.mxu0 %v2131
    %2197 = vmatpush.msra.mxu0 %v2128
    %2198 = vmatpush.msra.mxu0 %v2125
    %2199 = vmatpush.msra.mxu0 %v2122
    %2200 = vmatpush.msra.mxu0 %v2119
    %2201 = vmatpush.msra.mxu0 %v2116
    %2202 = vmatpush.msra.mxu0 %v2113
    %2203 = vmatpush.msra.mxu0 %v2110
    %2204 = vmatpush.msra.mxu0 %v2107
    %2205 = vmatpush.msra.mxu0 %v2104
    %2206 = vmatpush.msra.mxu0 %v2101
    %2207 = vmatpush.msra.mxu0 %v2098
    %2208 = vmatmul.f32.gmra.mxu0 %v1917
    %v2209 = vpop.f32.mrf.mxu0
    %v2210 = vadd.f32 %v2148, %v2209
    %2211 = vdwg.mxu0
    %v2212 = vadd.f32 %v2093, %v2170
    %v2213 = vxor.u32 %v2212, 2147483648
    %v2214 = vmul.f32 %v2213, 1.442695
    %v2215 = vpow.pop %v2214
    %v2216 = vadd.f32 %v2215, 1.0
    %v2217 = vrcp.pop %v2216
    %v2218 = vmul.f32 %v2216, %v2217
    %v2219 = vsub.f32 1.0, %v2218
    %v2220 = vmul.f32 %v2217, %v2219
    %v2221 = vadd.f32 %v2217, %v2220
    %vm2222 = vweird.f32 %v2216
    %vm2223 = vweird.f32 %v2217
    %vm2224 = vmor %vm2222, %vm2223
    %v2225 = vsel %vm2224, %v2217, %v2221
    %v2226 = vand.u32 2147483647, %v2216
    %vm2227 = vcmp.eq.f32.partialorder %v2226, 8.507059e+37
    %v2228 = vand.u32 %v2216, 2147483648
    %v2229 = vor.u32 1.1754944e-38, %v2228
    %v2230 = vsel %vm2227, %v2229, %v2225
    %v2231 = vmul.f32 1.0, %v2230
    %v2232 = vadd.f32 %v2094, %v2190
    %v2233 = vxor.u32 %v2232, 2147483648
    %v2234 = vmul.f32 %v2233, 1.442695
    %v2235 = vpow.pop %v2234
    %v2236 = vadd.f32 %v2235, 1.0
    %v2237 = vrcp.pop %v2236
    %v2238 = vmul.f32 %v2236, %v2237
    %v2239 = vsub.f32 1.0, %v2238
    %v2240 = vmul.f32 %v2237, %v2239
    %v2241 = vadd.f32 %v2237, %v2240
    %vm2242 = vweird.f32 %v2236
    %vm2243 = vweird.f32 %v2237
    %vm2244 = vmor %vm2242, %vm2243
    %v2245 = vsel %vm2244, %v2237, %v2241
    %v2246 = vand.u32 2147483647, %v2236
    %vm2247 = vcmp.eq.f32.partialorder %v2246, 8.507059e+37
    %v2248 = vand.u32 %v2236, 2147483648
    %v2249 = vor.u32 1.1754944e-38, %v2248
    %v2250 = vsel %vm2247, %v2249, %v2245
    %v2251 = vmul.f32 1.0, %v2250
    %v2252 = vmul.f32 %v2231, %v2210
    %v2253 = vadd.f32 %v2095, %v2252
    %v2254 = vtanh.pop %v2253
    %v2255 = vsub.f32 1.0, %v2251
    %v2256 = vmul.f32 %v2255, %v2254
    %v2257 = vmul.f32 %v2251, %v1917
    %v2258 = vadd.f32 %v2256, %v2257
    %v2259 = vsel %vm1739, %v2258, %v1917
    %v2260 = vsel %vm1739, %v2258, 0.0
    %s2261 = scalar_lea.vmem [#allocation4], 24
    %2262 = vst [vmem:[%s2261] sm:$0xff] %v2260
    %s2263 = scalar_lea.vmem [#allocation2], 120
    %v2264 = vld [vmem:[%s2263] sm:$0xff]
    %v2265 = vld [vmem:[%s2263 + $0x8] sm:$0xff]
    %v2266 = vld [vmem:[%s2263 + $0x10] sm:$0xff]
    %v2267 = vld [vmem:[#allocation10] sm:$0xff]
    %v2268 = vld [vmem:[#allocation10 + $0x8] sm:$0xff]
    %v2269 = vld [vmem:[#allocation10 + $0x10] sm:$0xff]
    %v2270 = vld [vmem:[#allocation10 + $0x18] sm:$0xff]
    %v2271 = vld [vmem:[#allocation10 + $0x20] sm:$0xff]
    %v2272 = vld [vmem:[#allocation10 + $0x28] sm:$0xff]
    %v2273 = vld [vmem:[#allocation10 + $0x30] sm:$0xff]
    %v2274 = vld [vmem:[#allocation10 + $0x38] sm:$0xff]
    %v2275 = vld [vmem:[#allocation10 + $0x40] sm:$0xff]
    %v2276 = vld [vmem:[#allocation10 + $0x48] sm:$0xff]
    %v2277 = vld [vmem:[#allocation10 + $0x50] sm:$0xff]
    %v2278 = vld [vmem:[#allocation10 + $0x58] sm:$0xff]
    %v2279 = vld [vmem:[#allocation10 + $0x60] sm:$0xff]
    %v2280 = vld [vmem:[#allocation10 + $0x68] sm:$0xff]
    %v2281 = vld [vmem:[#allocation10 + $0x70] sm:$0xff]
    %v2282 = vld [vmem:[#allocation10 + $0x78] sm:$0xff]
    %v2283 = vld [vmem:[#allocation10 + $0x80] sm:$0xff]
    %v2284 = vld [vmem:[#allocation10 + $0x88] sm:$0xff]
    %v2285 = vld [vmem:[#allocation10 + $0x90] sm:$0xff]
    %v2286 = vld [vmem:[#allocation10 + $0x98] sm:$0xff]
    %v2287 = vld [vmem:[#allocation10 + $0xa0] sm:$0xff]
    %v2288 = vld [vmem:[#allocation10 + $0xa8] sm:$0xff]
    %v2289 = vld [vmem:[#allocation10 + $0xb0] sm:$0xff]
    %v2290 = vld [vmem:[#allocation10 + $0xb8] sm:$0xff]
    %v2291 = vld [vmem:[#allocation10 + $0xc0] sm:$0xff]
    %v2292 = vld [vmem:[#allocation10 + $0xc8] sm:$0xff]
    %v2293 = vld [vmem:[#allocation10 + $0xd0] sm:$0xff]
    %v2294 = vld [vmem:[#allocation10 + $0xd8] sm:$0xff]
    %v2295 = vld [vmem:[#allocation10 + $0xe0] sm:$0xff]
    %v2296 = vld [vmem:[#allocation10 + $0xe8] sm:$0xff]
    %v2297 = vld [vmem:[#allocation10 + $0xf0] sm:$0xff]
    %v2298 = vld [vmem:[#allocation10 + $0xf8] sm:$0xff]
    %v2299 = vld [vmem:[#allocation10 + $0x100] sm:$0xff]
    %v2300 = vld [vmem:[#allocation10 + $0x108] sm:$0xff]
    %v2301 = vld [vmem:[#allocation10 + $0x110] sm:$0xff]
    %v2302 = vld [vmem:[#allocation10 + $0x118] sm:$0xff]
    %v2303 = vld [vmem:[#allocation10 + $0x120] sm:$0xff]
    %v2304 = vld [vmem:[#allocation10 + $0x128] sm:$0xff]
    %v2305 = vld [vmem:[#allocation10 + $0x130] sm:$0xff]
    %v2306 = vld [vmem:[#allocation10 + $0x138] sm:$0xff]
    %v2307 = vld [vmem:[#allocation10 + $0x140] sm:$0xff]
    %v2308 = vld [vmem:[#allocation10 + $0x148] sm:$0xff]
    %v2309 = vld [vmem:[#allocation10 + $0x150] sm:$0xff]
    %v2310 = vld [vmem:[#allocation10 + $0x158] sm:$0xff]
    %v2311 = vld [vmem:[#allocation10 + $0x160] sm:$0xff]
    %v2312 = vld [vmem:[#allocation10 + $0x168] sm:$0xff]
    %v2313 = vld [vmem:[#allocation10 + $0x170] sm:$0xff]
    %v2314 = vld [vmem:[#allocation10 + $0x178] sm:$0xff]
    %v2315 = vld [vmem:[%s5] sm:$0x7]
    %v2317 = vperm.slane %v2315, 0
    %v2318 = vperm.slane %v2315, 1
    %v2319 = vperm.slane %v2315, 2
    %2323 = vmatpush.msra.mxu0 %v2312
    %2324 = vmatpush.msra.mxu0 %v2309
    %2325 = vmatpush.msra.mxu0 %v2306
    %2326 = vmatpush.msra.mxu0 %v2303
    %2327 = vmatpush.msra.mxu0 %v2300
    %2328 = vmatpush.msra.mxu0 %v2297
    %2329 = vmatpush.msra.mxu0 %v2294
    %2330 = vmatpush.msra.mxu0 %v2291
    %2331 = vmatpush.msra.mxu0 %v2288
    %2332 = vmatpush.msra.mxu0 %v2285
    %2333 = vmatpush.msra.mxu0 %v2282
    %2334 = vmatpush.msra.mxu0 %v2279
    %2335 = vmatpush.msra.mxu0 %v2276
    %2336 = vmatpush.msra.mxu0 %v2273
    %2337 = vmatpush.msra.mxu0 %v2270
    %2338 = vmatpush.msra.mxu0 %v2267
    %2339 = vmatmul.f32.gmra.mxu0 %v2088
    %v2340 = vpop.f32.mrf.mxu0
    %v2341 = vadd.f32 %v2317, %v2340
    %2342 = vdwg.mxu0
    %2343 = vmatpush.msra.mxu0 %v2313
    %2344 = vmatpush.msra.mxu0 %v2310
    %2345 = vmatpush.msra.mxu0 %v2307
    %2346 = vmatpush.msra.mxu0 %v2304
    %2347 = vmatpush.msra.mxu0 %v2301
    %2348 = vmatpush.msra.mxu0 %v2298
    %2349 = vmatpush.msra.mxu0 %v2295
    %2350 = vmatpush.msra.mxu0 %v2292
    %2351 = vmatpush.msra.mxu0 %v2289
    %2352 = vmatpush.msra.mxu0 %v2286
    %2353 = vmatpush.msra.mxu0 %v2283
    %2354 = vmatpush.msra.mxu0 %v2280
    %2355 = vmatpush.msra.mxu0 %v2277
    %2356 = vmatpush.msra.mxu0 %v2274
    %2357 = vmatpush.msra.mxu0 %v2271
    %2358 = vmatpush.msra.mxu0 %v2268
    %2359 = vmatmul.f32.gmra.mxu0 %v2088
    %v2360 = vpop.f32.mrf.mxu0
    %v2361 = vadd.f32 %v2318, %v2360
    %2362 = vdwg.mxu0
    %2363 = vmatpush.msra.mxu0 %v2314
    %2364 = vmatpush.msra.mxu0 %v2311
    %2365 = vmatpush.msra.mxu0 %v2308
    %2366 = vmatpush.msra.mxu0 %v2305
    %2367 = vmatpush.msra.mxu0 %v2302
    %2368 = vmatpush.msra.mxu0 %v2299
    %2369 = vmatpush.msra.mxu0 %v2296
    %2370 = vmatpush.msra.mxu0 %v2293
    %2371 = vmatpush.msra.mxu0 %v2290
    %2372 = vmatpush.msra.mxu0 %v2287
    %2373 = vmatpush.msra.mxu0 %v2284
    %2374 = vmatpush.msra.mxu0 %v2281
    %2375 = vmatpush.msra.mxu0 %v2278
    %2376 = vmatpush.msra.mxu0 %v2275
    %2377 = vmatpush.msra.mxu0 %v2272
    %2378 = vmatpush.msra.mxu0 %v2269
    %2379 = vmatmul.f32.gmra.mxu0 %v2088
    %v2380 = vpop.f32.mrf.mxu0
    %v2381 = vadd.f32 %v2319, %v2380
    %2382 = vdwg.mxu0
    %v2383 = vadd.f32 %v2264, %v2341
    %v2384 = vxor.u32 %v2383, 2147483648
    %v2385 = vmul.f32 %v2384, 1.442695
    %v2386 = vpow.pop %v2385
    %v2387 = vadd.f32 %v2386, 1.0
    %v2388 = vrcp.pop %v2387
    %v2389 = vmul.f32 %v2387, %v2388
    %v2390 = vsub.f32 1.0, %v2389
    %v2391 = vmul.f32 %v2388, %v2390
    %v2392 = vadd.f32 %v2388, %v2391
    %vm2393 = vweird.f32 %v2387
    %vm2394 = vweird.f32 %v2388
    %vm2395 = vmor %vm2393, %vm2394
    %v2396 = vsel %vm2395, %v2388, %v2392
    %v2397 = vand.u32 2147483647, %v2387
    %vm2398 = vcmp.eq.f32.partialorder %v2397, 8.507059e+37
    %v2399 = vand.u32 %v2387, 2147483648
    %v2400 = vor.u32 1.1754944e-38, %v2399
    %v2401 = vsel %vm2398, %v2400, %v2396
    %v2402 = vmul.f32 1.0, %v2401
    %v2403 = vadd.f32 %v2265, %v2361
    %v2404 = vxor.u32 %v2403, 2147483648
    %v2405 = vmul.f32 %v2404, 1.442695
    %v2406 = vpow.pop %v2405
    %v2407 = vadd.f32 %v2406, 1.0
    %v2408 = vrcp.pop %v2407
    %v2409 = vmul.f32 %v2407, %v2408
    %v2410 = vsub.f32 1.0, %v2409
    %v2411 = vmul.f32 %v2408, %v2410
    %v2412 = vadd.f32 %v2408, %v2411
    %vm2413 = vweird.f32 %v2407
    %vm2414 = vweird.f32 %v2408
    %vm2415 = vmor %vm2413, %vm2414
    %v2416 = vsel %vm2415, %v2408, %v2412
    %v2417 = vand.u32 2147483647, %v2407
    %vm2418 = vcmp.eq.f32.partialorder %v2417, 8.507059e+37
    %v2419 = vand.u32 %v2407, 2147483648
    %v2420 = vor.u32 1.1754944e-38, %v2419
    %v2421 = vsel %vm2418, %v2420, %v2416
    %v2422 = vmul.f32 1.0, %v2421
    %v2423 = vmul.f32 %v2402, %v2381
    %v2424 = vadd.f32 %v2266, %v2423
    %v2425 = vtanh.pop %v2424
    %v2426 = vsub.f32 1.0, %v2422
    %v2427 = vmul.f32 %v2426, %v2425
    %v2428 = vmul.f32 %v2422, %v2088
    %v2429 = vadd.f32 %v2427, %v2428
    %v2430 = vsel %vm1562, %v2429, %v2088
    %v2431 = vsel %vm1562, %v2429, 0.0
    %s2432 = scalar_lea.vmem [#allocation13], 40
    %2433 = vst [vmem:[%s2432] sm:$0xff] %v2431
    %s2434 = scalar_lea.vmem [#allocation3], 48
    %v2435 = vld [vmem:[%s2434] sm:$0xff]
    %v2436 = vld [vmem:[%s2434 + $0x8] sm:$0xff]
    %v2437 = vld [vmem:[%s2434 + $0x10] sm:$0xff]
    %v2438 = vld [vmem:[#allocation11] sm:$0xff]
    %v2439 = vld [vmem:[#allocation11 + $0x8] sm:$0xff]
    %v2440 = vld [vmem:[#allocation11 + $0x10] sm:$0xff]
    %v2441 = vld [vmem:[#allocation11 + $0x18] sm:$0xff]
    %v2442 = vld [vmem:[#allocation11 + $0x20] sm:$0xff]
    %v2443 = vld [vmem:[#allocation11 + $0x28] sm:$0xff]
    %v2444 = vld [vmem:[#allocation11 + $0x30] sm:$0xff]
    %v2445 = vld [vmem:[#allocation11 + $0x38] sm:$0xff]
    %v2446 = vld [vmem:[#allocation11 + $0x40] sm:$0xff]
    %v2447 = vld [vmem:[#allocation11 + $0x48] sm:$0xff]
    %v2448 = vld [vmem:[#allocation11 + $0x50] sm:$0xff]
    %v2449 = vld [vmem:[#allocation11 + $0x58] sm:$0xff]
    %v2450 = vld [vmem:[#allocation11 + $0x60] sm:$0xff]
    %v2451 = vld [vmem:[#allocation11 + $0x68] sm:$0xff]
    %v2452 = vld [vmem:[#allocation11 + $0x70] sm:$0xff]
    %v2453 = vld [vmem:[#allocation11 + $0x78] sm:$0xff]
    %v2454 = vld [vmem:[#allocation11 + $0x80] sm:$0xff]
    %v2455 = vld [vmem:[#allocation11 + $0x88] sm:$0xff]
    %v2456 = vld [vmem:[#allocation11 + $0x90] sm:$0xff]
    %v2457 = vld [vmem:[#allocation11 + $0x98] sm:$0xff]
    %v2458 = vld [vmem:[#allocation11 + $0xa0] sm:$0xff]
    %v2459 = vld [vmem:[#allocation11 + $0xa8] sm:$0xff]
    %v2460 = vld [vmem:[#allocation11 + $0xb0] sm:$0xff]
    %v2461 = vld [vmem:[#allocation11 + $0xb8] sm:$0xff]
    %v2462 = vld [vmem:[#allocation11 + $0xc0] sm:$0xff]
    %v2463 = vld [vmem:[#allocation11 + $0xc8] sm:$0xff]
    %v2464 = vld [vmem:[#allocation11 + $0xd0] sm:$0xff]
    %v2465 = vld [vmem:[#allocation11 + $0xd8] sm:$0xff]
    %v2466 = vld [vmem:[#allocation11 + $0xe0] sm:$0xff]
    %v2467 = vld [vmem:[#allocation11 + $0xe8] sm:$0xff]
    %v2468 = vld [vmem:[#allocation11 + $0xf0] sm:$0xff]
    %v2469 = vld [vmem:[#allocation11 + $0xf8] sm:$0xff]
    %v2470 = vld [vmem:[#allocation11 + $0x100] sm:$0xff]
    %v2471 = vld [vmem:[#allocation11 + $0x108] sm:$0xff]
    %v2472 = vld [vmem:[#allocation11 + $0x110] sm:$0xff]
    %v2473 = vld [vmem:[#allocation11 + $0x118] sm:$0xff]
    %v2474 = vld [vmem:[#allocation11 + $0x120] sm:$0xff]
    %v2475 = vld [vmem:[#allocation11 + $0x128] sm:$0xff]
    %v2476 = vld [vmem:[#allocation11 + $0x130] sm:$0xff]
    %v2477 = vld [vmem:[#allocation11 + $0x138] sm:$0xff]
    %v2478 = vld [vmem:[#allocation11 + $0x140] sm:$0xff]
    %v2479 = vld [vmem:[#allocation11 + $0x148] sm:$0xff]
    %v2480 = vld [vmem:[#allocation11 + $0x150] sm:$0xff]
    %v2481 = vld [vmem:[#allocation11 + $0x158] sm:$0xff]
    %v2482 = vld [vmem:[#allocation11 + $0x160] sm:$0xff]
    %v2483 = vld [vmem:[#allocation11 + $0x168] sm:$0xff]
    %v2484 = vld [vmem:[#allocation11 + $0x170] sm:$0xff]
    %v2485 = vld [vmem:[#allocation11 + $0x178] sm:$0xff]
    %v2486 = vld [vmem:[%s7] sm:$0x7]
    %v2488 = vperm.slane %v2486, 0
    %v2489 = vperm.slane %v2486, 1
    %v2490 = vperm.slane %v2486, 2
    %2494 = vmatpush.msra.mxu0 %v2483
    %2495 = vmatpush.msra.mxu0 %v2480
    %2496 = vmatpush.msra.mxu0 %v2477
    %2497 = vmatpush.msra.mxu0 %v2474
    %2498 = vmatpush.msra.mxu0 %v2471
    %2499 = vmatpush.msra.mxu0 %v2468
    %2500 = vmatpush.msra.mxu0 %v2465
    %2501 = vmatpush.msra.mxu0 %v2462
    %2502 = vmatpush.msra.mxu0 %v2459
    %2503 = vmatpush.msra.mxu0 %v2456
    %2504 = vmatpush.msra.mxu0 %v2453
    %2505 = vmatpush.msra.mxu0 %v2450
    %2506 = vmatpush.msra.mxu0 %v2447
    %2507 = vmatpush.msra.mxu0 %v2444
    %2508 = vmatpush.msra.mxu0 %v2441
    %2509 = vmatpush.msra.mxu0 %v2438
    %2510 = vmatmul.f32.gmra.mxu0 %v2259
    %v2511 = vpop.f32.mrf.mxu0
    %v2512 = vadd.f32 %v2488, %v2511
    %2513 = vdwg.mxu0
    %2514 = vmatpush.msra.mxu0 %v2484
    %2515 = vmatpush.msra.mxu0 %v2481
    %2516 = vmatpush.msra.mxu0 %v2478
    %2517 = vmatpush.msra.mxu0 %v2475
    %2518 = vmatpush.msra.mxu0 %v2472
    %2519 = vmatpush.msra.mxu0 %v2469
    %2520 = vmatpush.msra.mxu0 %v2466
    %2521 = vmatpush.msra.mxu0 %v2463
    %2522 = vmatpush.msra.mxu0 %v2460
    %2523 = vmatpush.msra.mxu0 %v2457
    %2524 = vmatpush.msra.mxu0 %v2454
    %2525 = vmatpush.msra.mxu0 %v2451
    %2526 = vmatpush.msra.mxu0 %v2448
    %2527 = vmatpush.msra.mxu0 %v2445
    %2528 = vmatpush.msra.mxu0 %v2442
    %2529 = vmatpush.msra.mxu0 %v2439
    %2530 = vmatmul.f32.gmra.mxu0 %v2259
    %v2531 = vpop.f32.mrf.mxu0
    %v2532 = vadd.f32 %v2489, %v2531
    %2533 = vdwg.mxu0
    %2534 = vmatpush.msra.mxu0 %v2485
    %2535 = vmatpush.msra.mxu0 %v2482
    %2536 = vmatpush.msra.mxu0 %v2479
    %2537 = vmatpush.msra.mxu0 %v2476
    %2538 = vmatpush.msra.mxu0 %v2473
    %2539 = vmatpush.msra.mxu0 %v2470
    %2540 = vmatpush.msra.mxu0 %v2467
    %2541 = vmatpush.msra.mxu0 %v2464
    %2542 = vmatpush.msra.mxu0 %v2461
    %2543 = vmatpush.msra.mxu0 %v2458
    %2544 = vmatpush.msra.mxu0 %v2455
    %2545 = vmatpush.msra.mxu0 %v2452
    %2546 = vmatpush.msra.mxu0 %v2449
    %2547 = vmatpush.msra.mxu0 %v2446
    %2548 = vmatpush.msra.mxu0 %v2443
    %2549 = vmatpush.msra.mxu0 %v2440
    %2550 = vmatmul.f32.gmra.mxu0 %v2259
    %v2551 = vpop.f32.mrf.mxu0
    %v2552 = vadd.f32 %v2490, %v2551
    %2553 = vdwg.mxu0
    %v2554 = vadd.f32 %v2435, %v2512
    %v2555 = vxor.u32 %v2554, 2147483648
    %v2556 = vmul.f32 %v2555, 1.442695
    %v2557 = vpow.pop %v2556
    %v2558 = vadd.f32 %v2557, 1.0
    %v2559 = vrcp.pop %v2558
    %v2560 = vmul.f32 %v2558, %v2559
    %v2561 = vsub.f32 1.0, %v2560
    %v2562 = vmul.f32 %v2559, %v2561
    %v2563 = vadd.f32 %v2559, %v2562
    %vm2564 = vweird.f32 %v2558
    %vm2565 = vweird.f32 %v2559
    %vm2566 = vmor %vm2564, %vm2565
    %v2567 = vsel %vm2566, %v2559, %v2563
    %v2568 = vand.u32 2147483647, %v2558
    %vm2569 = vcmp.eq.f32.partialorder %v2568, 8.507059e+37
    %v2570 = vand.u32 %v2558, 2147483648
    %v2571 = vor.u32 1.1754944e-38, %v2570
    %v2572 = vsel %vm2569, %v2571, %v2567
    %v2573 = vmul.f32 1.0, %v2572
    %v2574 = vadd.f32 %v2436, %v2532
    %v2575 = vxor.u32 %v2574, 2147483648
    %v2576 = vmul.f32 %v2575, 1.442695
    %v2577 = vpow.pop %v2576
    %v2578 = vadd.f32 %v2577, 1.0
    %v2579 = vrcp.pop %v2578
    %v2580 = vmul.f32 %v2578, %v2579
    %v2581 = vsub.f32 1.0, %v2580
    %v2582 = vmul.f32 %v2579, %v2581
    %v2583 = vadd.f32 %v2579, %v2582
    %vm2584 = vweird.f32 %v2578
    %vm2585 = vweird.f32 %v2579
    %vm2586 = vmor %vm2584, %vm2585
    %v2587 = vsel %vm2586, %v2579, %v2583
    %v2588 = vand.u32 2147483647, %v2578
    %vm2589 = vcmp.eq.f32.partialorder %v2588, 8.507059e+37
    %v2590 = vand.u32 %v2578, 2147483648
    %v2591 = vor.u32 1.1754944e-38, %v2590
    %v2592 = vsel %vm2589, %v2591, %v2587
    %v2593 = vmul.f32 1.0, %v2592
    %v2594 = vmul.f32 %v2573, %v2552
    %v2595 = vadd.f32 %v2437, %v2594
    %v2596 = vtanh.pop %v2595
    %v2597 = vsub.f32 1.0, %v2593
    %v2598 = vmul.f32 %v2597, %v2596
    %v2599 = vmul.f32 %v2593, %v2259
    %v2600 = vadd.f32 %v2598, %v2599
    %v2601 = vsel %vm1385, %v2600, %v2259
    %v2602 = vsel %vm1385, %v2600, 0.0
    %s2603 = scalar_lea.vmem [#allocation4], 16
    %2604 = vst [vmem:[%s2603] sm:$0xff] %v2602
    %s2605 = scalar_lea.vmem [#allocation2], 144
    %v2606 = vld [vmem:[%s2605] sm:$0xff]
    %v2607 = vld [vmem:[%s2605 + $0x8] sm:$0xff]
    %v2608 = vld [vmem:[%s2605 + $0x10] sm:$0xff]
    %v2609 = vld [vmem:[#allocation10] sm:$0xff]
    %v2610 = vld [vmem:[#allocation10 + $0x8] sm:$0xff]
    %v2611 = vld [vmem:[#allocation10 + $0x10] sm:$0xff]
    %v2612 = vld [vmem:[#allocation10 + $0x18] sm:$0xff]
    %v2613 = vld [vmem:[#allocation10 + $0x20] sm:$0xff]
    %v2614 = vld [vmem:[#allocation10 + $0x28] sm:$0xff]
    %v2615 = vld [vmem:[#allocation10 + $0x30] sm:$0xff]
    %v2616 = vld [vmem:[#allocation10 + $0x38] sm:$0xff]
    %v2617 = vld [vmem:[#allocation10 + $0x40] sm:$0xff]
    %v2618 = vld [vmem:[#allocation10 + $0x48] sm:$0xff]
    %v2619 = vld [vmem:[#allocation10 + $0x50] sm:$0xff]
    %v2620 = vld [vmem:[#allocation10 + $0x58] sm:$0xff]
    %v2621 = vld [vmem:[#allocation10 + $0x60] sm:$0xff]
    %v2622 = vld [vmem:[#allocation10 + $0x68] sm:$0xff]
    %v2623 = vld [vmem:[#allocation10 + $0x70] sm:$0xff]
    %v2624 = vld [vmem:[#allocation10 + $0x78] sm:$0xff]
    %v2625 = vld [vmem:[#allocation10 + $0x80] sm:$0xff]
    %v2626 = vld [vmem:[#allocation10 + $0x88] sm:$0xff]
    %v2627 = vld [vmem:[#allocation10 + $0x90] sm:$0xff]
    %v2628 = vld [vmem:[#allocation10 + $0x98] sm:$0xff]
    %v2629 = vld [vmem:[#allocation10 + $0xa0] sm:$0xff]
    %v2630 = vld [vmem:[#allocation10 + $0xa8] sm:$0xff]
    %v2631 = vld [vmem:[#allocation10 + $0xb0] sm:$0xff]
    %v2632 = vld [vmem:[#allocation10 + $0xb8] sm:$0xff]
    %v2633 = vld [vmem:[#allocation10 + $0xc0] sm:$0xff]
    %v2634 = vld [vmem:[#allocation10 + $0xc8] sm:$0xff]
    %v2635 = vld [vmem:[#allocation10 + $0xd0] sm:$0xff]
    %v2636 = vld [vmem:[#allocation10 + $0xd8] sm:$0xff]
    %v2637 = vld [vmem:[#allocation10 + $0xe0] sm:$0xff]
    %v2638 = vld [vmem:[#allocation10 + $0xe8] sm:$0xff]
    %v2639 = vld [vmem:[#allocation10 + $0xf0] sm:$0xff]
    %v2640 = vld [vmem:[#allocation10 + $0xf8] sm:$0xff]
    %v2641 = vld [vmem:[#allocation10 + $0x100] sm:$0xff]
    %v2642 = vld [vmem:[#allocation10 + $0x108] sm:$0xff]
    %v2643 = vld [vmem:[#allocation10 + $0x110] sm:$0xff]
    %v2644 = vld [vmem:[#allocation10 + $0x118] sm:$0xff]
    %v2645 = vld [vmem:[#allocation10 + $0x120] sm:$0xff]
    %v2646 = vld [vmem:[#allocation10 + $0x128] sm:$0xff]
    %v2647 = vld [vmem:[#allocation10 + $0x130] sm:$0xff]
    %v2648 = vld [vmem:[#allocation10 + $0x138] sm:$0xff]
    %v2649 = vld [vmem:[#allocation10 + $0x140] sm:$0xff]
    %v2650 = vld [vmem:[#allocation10 + $0x148] sm:$0xff]
    %v2651 = vld [vmem:[#allocation10 + $0x150] sm:$0xff]
    %v2652 = vld [vmem:[#allocation10 + $0x158] sm:$0xff]
    %v2653 = vld [vmem:[#allocation10 + $0x160] sm:$0xff]
    %v2654 = vld [vmem:[#allocation10 + $0x168] sm:$0xff]
    %v2655 = vld [vmem:[#allocation10 + $0x170] sm:$0xff]
    %v2656 = vld [vmem:[#allocation10 + $0x178] sm:$0xff]
    %v2657 = vld [vmem:[%s5] sm:$0x7]
    %v2659 = vperm.slane %v2657, 0
    %v2660 = vperm.slane %v2657, 1
    %v2661 = vperm.slane %v2657, 2
    %2665 = vmatpush.msra.mxu0 %v2654
    %2666 = vmatpush.msra.mxu0 %v2651
    %2667 = vmatpush.msra.mxu0 %v2648
    %2668 = vmatpush.msra.mxu0 %v2645
    %2669 = vmatpush.msra.mxu0 %v2642
    %2670 = vmatpush.msra.mxu0 %v2639
    %2671 = vmatpush.msra.mxu0 %v2636
    %2672 = vmatpush.msra.mxu0 %v2633
    %2673 = vmatpush.msra.mxu0 %v2630
    %2674 = vmatpush.msra.mxu0 %v2627
    %2675 = vmatpush.msra.mxu0 %v2624
    %2676 = vmatpush.msra.mxu0 %v2621
    %2677 = vmatpush.msra.mxu0 %v2618
    %2678 = vmatpush.msra.mxu0 %v2615
    %2679 = vmatpush.msra.mxu0 %v2612
    %2680 = vmatpush.msra.mxu0 %v2609
    %2681 = vmatmul.f32.gmra.mxu0 %v2430
    %v2682 = vpop.f32.mrf.mxu0
    %v2683 = vadd.f32 %v2659, %v2682
    %2684 = vdwg.mxu0
    %2685 = vmatpush.msra.mxu0 %v2655
    %2686 = vmatpush.msra.mxu0 %v2652
    %2687 = vmatpush.msra.mxu0 %v2649
    %2688 = vmatpush.msra.mxu0 %v2646
    %2689 = vmatpush.msra.mxu0 %v2643
    %2690 = vmatpush.msra.mxu0 %v2640
    %2691 = vmatpush.msra.mxu0 %v2637
    %2692 = vmatpush.msra.mxu0 %v2634
    %2693 = vmatpush.msra.mxu0 %v2631
    %2694 = vmatpush.msra.mxu0 %v2628
    %2695 = vmatpush.msra.mxu0 %v2625
    %2696 = vmatpush.msra.mxu0 %v2622
    %2697 = vmatpush.msra.mxu0 %v2619
    %2698 = vmatpush.msra.mxu0 %v2616
    %2699 = vmatpush.msra.mxu0 %v2613
    %2700 = vmatpush.msra.mxu0 %v2610
    %2701 = vmatmul.f32.gmra.mxu0 %v2430
    %v2702 = vpop.f32.mrf.mxu0
    %v2703 = vadd.f32 %v2660, %v2702
    %2704 = vdwg.mxu0
    %2705 = vmatpush.msra.mxu0 %v2656
    %2706 = vmatpush.msra.mxu0 %v2653
    %2707 = vmatpush.msra.mxu0 %v2650
    %2708 = vmatpush.msra.mxu0 %v2647
    %2709 = vmatpush.msra.mxu0 %v2644
    %2710 = vmatpush.msra.mxu0 %v2641
    %2711 = vmatpush.msra.mxu0 %v2638
    %2712 = vmatpush.msra.mxu0 %v2635
    %2713 = vmatpush.msra.mxu0 %v2632
    %2714 = vmatpush.msra.mxu0 %v2629
    %2715 = vmatpush.msra.mxu0 %v2626
    %2716 = vmatpush.msra.mxu0 %v2623
    %2717 = vmatpush.msra.mxu0 %v2620
    %2718 = vmatpush.msra.mxu0 %v2617
    %2719 = vmatpush.msra.mxu0 %v2614
    %2720 = vmatpush.msra.mxu0 %v2611
    %2721 = vmatmul.f32.gmra.mxu0 %v2430
    %v2722 = vpop.f32.mrf.mxu0
    %v2723 = vadd.f32 %v2661, %v2722
    %2724 = vdwg.mxu0
    %v2725 = vadd.f32 %v2606, %v2683
    %v2726 = vxor.u32 %v2725, 2147483648
    %v2727 = vmul.f32 %v2726, 1.442695
    %v2728 = vpow.pop %v2727
    %v2729 = vadd.f32 %v2728, 1.0
    %v2730 = vrcp.pop %v2729
    %v2731 = vmul.f32 %v2729, %v2730
    %v2732 = vsub.f32 1.0, %v2731
    %v2733 = vmul.f32 %v2730, %v2732
    %v2734 = vadd.f32 %v2730, %v2733
    %vm2735 = vweird.f32 %v2729
    %vm2736 = vweird.f32 %v2730
    %vm2737 = vmor %vm2735, %vm2736
    %v2738 = vsel %vm2737, %v2730, %v2734
    %v2739 = vand.u32 2147483647, %v2729
    %vm2740 = vcmp.eq.f32.partialorder %v2739, 8.507059e+37
    %v2741 = vand.u32 %v2729, 2147483648
    %v2742 = vor.u32 1.1754944e-38, %v2741
    %v2743 = vsel %vm2740, %v2742, %v2738
    %v2744 = vmul.f32 1.0, %v2743
    %v2745 = vadd.f32 %v2607, %v2703
    %v2746 = vxor.u32 %v2745, 2147483648
    %v2747 = vmul.f32 %v2746, 1.442695
    %v2748 = vpow.pop %v2747
    %v2749 = vadd.f32 %v2748, 1.0
    %v2750 = vrcp.pop %v2749
    %v2751 = vmul.f32 %v2749, %v2750
    %v2752 = vsub.f32 1.0, %v2751
    %v2753 = vmul.f32 %v2750, %v2752
    %v2754 = vadd.f32 %v2750, %v2753
    %vm2755 = vweird.f32 %v2749
    %vm2756 = vweird.f32 %v2750
    %vm2757 = vmor %vm2755, %vm2756
    %v2758 = vsel %vm2757, %v2750, %v2754
    %v2759 = vand.u32 2147483647, %v2749
    %vm2760 = vcmp.eq.f32.partialorder %v2759, 8.507059e+37
    %v2761 = vand.u32 %v2749, 2147483648
    %v2762 = vor.u32 1.1754944e-38, %v2761
    %v2763 = vsel %vm2760, %v2762, %v2758
    %v2764 = vmul.f32 1.0, %v2763
    %v2765 = vmul.f32 %v2744, %v2723
    %v2766 = vadd.f32 %v2608, %v2765
    %v2767 = vtanh.pop %v2766
    %v2768 = vsub.f32 1.0, %v2764
    %v2769 = vmul.f32 %v2768, %v2767
    %v2770 = vmul.f32 %v2764, %v2430
    %v2771 = vadd.f32 %v2769, %v2770
    %v2772 = vsel %vm1208, %v2771, %v2430
    %v2773 = vsel %vm1208, %v2771, 0.0
    %s2774 = scalar_lea.vmem [#allocation13], 48
    %2775 = vst [vmem:[%s2774] sm:$0xff] %v2773
    %s2776 = scalar_lea.vmem [#allocation3], 24
    %v2777 = vld [vmem:[%s2776] sm:$0xff]
    %v2778 = vld [vmem:[%s2776 + $0x8] sm:$0xff]
    %v2779 = vld [vmem:[%s2776 + $0x10] sm:$0xff]
    %v2780 = vld [vmem:[#allocation11] sm:$0xff]
    %v2781 = vld [vmem:[#allocation11 + $0x8] sm:$0xff]
    %v2782 = vld [vmem:[#allocation11 + $0x10] sm:$0xff]
    %v2783 = vld [vmem:[#allocation11 + $0x18] sm:$0xff]
    %v2784 = vld [vmem:[#allocation11 + $0x20] sm:$0xff]
    %v2785 = vld [vmem:[#allocation11 + $0x28] sm:$0xff]
    %v2786 = vld [vmem:[#allocation11 + $0x30] sm:$0xff]
    %v2787 = vld [vmem:[#allocation11 + $0x38] sm:$0xff]
    %v2788 = vld [vmem:[#allocation11 + $0x40] sm:$0xff]
    %v2789 = vld [vmem:[#allocation11 + $0x48] sm:$0xff]
    %v2790 = vld [vmem:[#allocation11 + $0x50] sm:$0xff]
    %v2791 = vld [vmem:[#allocation11 + $0x58] sm:$0xff]
    %v2792 = vld [vmem:[#allocation11 + $0x60] sm:$0xff]
    %v2793 = vld [vmem:[#allocation11 + $0x68] sm:$0xff]
    %v2794 = vld [vmem:[#allocation11 + $0x70] sm:$0xff]
    %v2795 = vld [vmem:[#allocation11 + $0x78] sm:$0xff]
    %v2796 = vld [vmem:[#allocation11 + $0x80] sm:$0xff]
    %v2797 = vld [vmem:[#allocation11 + $0x88] sm:$0xff]
    %v2798 = vld [vmem:[#allocation11 + $0x90] sm:$0xff]
    %v2799 = vld [vmem:[#allocation11 + $0x98] sm:$0xff]
    %v2800 = vld [vmem:[#allocation11 + $0xa0] sm:$0xff]
    %v2801 = vld [vmem:[#allocation11 + $0xa8] sm:$0xff]
    %v2802 = vld [vmem:[#allocation11 + $0xb0] sm:$0xff]
    %v2803 = vld [vmem:[#allocation11 + $0xb8] sm:$0xff]
    %v2804 = vld [vmem:[#allocation11 + $0xc0] sm:$0xff]
    %v2805 = vld [vmem:[#allocation11 + $0xc8] sm:$0xff]
    %v2806 = vld [vmem:[#allocation11 + $0xd0] sm:$0xff]
    %v2807 = vld [vmem:[#allocation11 + $0xd8] sm:$0xff]
    %v2808 = vld [vmem:[#allocation11 + $0xe0] sm:$0xff]
    %v2809 = vld [vmem:[#allocation11 + $0xe8] sm:$0xff]
    %v2810 = vld [vmem:[#allocation11 + $0xf0] sm:$0xff]
    %v2811 = vld [vmem:[#allocation11 + $0xf8] sm:$0xff]
    %v2812 = vld [vmem:[#allocation11 + $0x100] sm:$0xff]
    %v2813 = vld [vmem:[#allocation11 + $0x108] sm:$0xff]
    %v2814 = vld [vmem:[#allocation11 + $0x110] sm:$0xff]
    %v2815 = vld [vmem:[#allocation11 + $0x118] sm:$0xff]
    %v2816 = vld [vmem:[#allocation11 + $0x120] sm:$0xff]
    %v2817 = vld [vmem:[#allocation11 + $0x128] sm:$0xff]
    %v2818 = vld [vmem:[#allocation11 + $0x130] sm:$0xff]
    %v2819 = vld [vmem:[#allocation11 + $0x138] sm:$0xff]
    %v2820 = vld [vmem:[#allocation11 + $0x140] sm:$0xff]
    %v2821 = vld [vmem:[#allocation11 + $0x148] sm:$0xff]
    %v2822 = vld [vmem:[#allocation11 + $0x150] sm:$0xff]
    %v2823 = vld [vmem:[#allocation11 + $0x158] sm:$0xff]
    %v2824 = vld [vmem:[#allocation11 + $0x160] sm:$0xff]
    %v2825 = vld [vmem:[#allocation11 + $0x168] sm:$0xff]
    %v2826 = vld [vmem:[#allocation11 + $0x170] sm:$0xff]
    %v2827 = vld [vmem:[#allocation11 + $0x178] sm:$0xff]
    %v2828 = vld [vmem:[%s7] sm:$0x7]
    %v2830 = vperm.slane %v2828, 0
    %v2831 = vperm.slane %v2828, 1
    %v2832 = vperm.slane %v2828, 2
    %2836 = vmatpush.msra.mxu0 %v2825
    %2837 = vmatpush.msra.mxu0 %v2822
    %2838 = vmatpush.msra.mxu0 %v2819
    %2839 = vmatpush.msra.mxu0 %v2816
    %2840 = vmatpush.msra.mxu0 %v2813
    %2841 = vmatpush.msra.mxu0 %v2810
    %2842 = vmatpush.msra.mxu0 %v2807
    %2843 = vmatpush.msra.mxu0 %v2804
    %2844 = vmatpush.msra.mxu0 %v2801
    %2845 = vmatpush.msra.mxu0 %v2798
    %2846 = vmatpush.msra.mxu0 %v2795
    %2847 = vmatpush.msra.mxu0 %v2792
    %2848 = vmatpush.msra.mxu0 %v2789
    %2849 = vmatpush.msra.mxu0 %v2786
    %2850 = vmatpush.msra.mxu0 %v2783
    %2851 = vmatpush.msra.mxu0 %v2780
    %2852 = vmatmul.f32.gmra.mxu0 %v2601
    %v2853 = vpop.f32.mrf.mxu0
    %v2854 = vadd.f32 %v2830, %v2853
    %2855 = vdwg.mxu0
    %2856 = vmatpush.msra.mxu0 %v2826
    %2857 = vmatpush.msra.mxu0 %v2823
    %2858 = vmatpush.msra.mxu0 %v2820
    %2859 = vmatpush.msra.mxu0 %v2817
    %2860 = vmatpush.msra.mxu0 %v2814
    %2861 = vmatpush.msra.mxu0 %v2811
    %2862 = vmatpush.msra.mxu0 %v2808
    %2863 = vmatpush.msra.mxu0 %v2805
    %2864 = vmatpush.msra.mxu0 %v2802
    %2865 = vmatpush.msra.mxu0 %v2799
    %2866 = vmatpush.msra.mxu0 %v2796
    %2867 = vmatpush.msra.mxu0 %v2793
    %2868 = vmatpush.msra.mxu0 %v2790
    %2869 = vmatpush.msra.mxu0 %v2787
    %2870 = vmatpush.msra.mxu0 %v2784
    %2871 = vmatpush.msra.mxu0 %v2781
    %2872 = vmatmul.f32.gmra.mxu0 %v2601
    %v2873 = vpop.f32.mrf.mxu0
    %v2874 = vadd.f32 %v2831, %v2873
    %2875 = vdwg.mxu0
    %2876 = vmatpush.msra.mxu0 %v2827
    %2877 = vmatpush.msra.mxu0 %v2824
    %2878 = vmatpush.msra.mxu0 %v2821
    %2879 = vmatpush.msra.mxu0 %v2818
    %2880 = vmatpush.msra.mxu0 %v2815
    %2881 = vmatpush.msra.mxu0 %v2812
    %2882 = vmatpush.msra.mxu0 %v2809
    %2883 = vmatpush.msra.mxu0 %v2806
    %2884 = vmatpush.msra.mxu0 %v2803
    %2885 = vmatpush.msra.mxu0 %v2800
    %2886 = vmatpush.msra.mxu0 %v2797
    %2887 = vmatpush.msra.mxu0 %v2794
    %2888 = vmatpush.msra.mxu0 %v2791
    %2889 = vmatpush.msra.mxu0 %v2788
    %2890 = vmatpush.msra.mxu0 %v2785
    %2891 = vmatpush.msra.mxu0 %v2782
    %2892 = vmatmul.f32.gmra.mxu0 %v2601
    %v2893 = vpop.f32.mrf.mxu0
    %v2894 = vadd.f32 %v2832, %v2893
    %2895 = vdwg.mxu0
    %v2896 = vadd.f32 %v2777, %v2854
    %v2897 = vxor.u32 %v2896, 2147483648
    %v2898 = vmul.f32 %v2897, 1.442695
    %v2899 = vpow.pop %v2898
    %v2900 = vadd.f32 %v2899, 1.0
    %v2901 = vrcp.pop %v2900
    %v2902 = vmul.f32 %v2900, %v2901
    %v2903 = vsub.f32 1.0, %v2902
    %v2904 = vmul.f32 %v2901, %v2903
    %v2905 = vadd.f32 %v2901, %v2904
    %vm2906 = vweird.f32 %v2900
    %vm2907 = vweird.f32 %v2901
    %vm2908 = vmor %vm2906, %vm2907
    %v2909 = vsel %vm2908, %v2901, %v2905
    %v2910 = vand.u32 2147483647, %v2900
    %vm2911 = vcmp.eq.f32.partialorder %v2910, 8.507059e+37
    %v2912 = vand.u32 %v2900, 2147483648
    %v2913 = vor.u32 1.1754944e-38, %v2912
    %v2914 = vsel %vm2911, %v2913, %v2909
    %v2915 = vmul.f32 1.0, %v2914
    %v2916 = vadd.f32 %v2778, %v2874
    %v2917 = vxor.u32 %v2916, 2147483648
    %v2918 = vmul.f32 %v2917, 1.442695
    %v2919 = vpow.pop %v2918
    %v2920 = vadd.f32 %v2919, 1.0
    %v2921 = vrcp.pop %v2920
    %v2922 = vmul.f32 %v2920, %v2921
    %v2923 = vsub.f32 1.0, %v2922
    %v2924 = vmul.f32 %v2921, %v2923
    %v2925 = vadd.f32 %v2921, %v2924
    %vm2926 = vweird.f32 %v2920
    %vm2927 = vweird.f32 %v2921
    %vm2928 = vmor %vm2926, %vm2927
    %v2929 = vsel %vm2928, %v2921, %v2925
    %v2930 = vand.u32 2147483647, %v2920
    %vm2931 = vcmp.eq.f32.partialorder %v2930, 8.507059e+37
    %v2932 = vand.u32 %v2920, 2147483648
    %v2933 = vor.u32 1.1754944e-38, %v2932
    %v2934 = vsel %vm2931, %v2933, %v2929
    %v2935 = vmul.f32 1.0, %v2934
    %v2936 = vmul.f32 %v2915, %v2894
    %v2937 = vadd.f32 %v2779, %v2936
    %v2938 = vtanh.pop %v2937
    %v2939 = vsub.f32 1.0, %v2935
    %v2940 = vmul.f32 %v2939, %v2938
    %v2941 = vmul.f32 %v2935, %v2601
    %v2942 = vadd.f32 %v2940, %v2941
    %v2943 = vsel %vm1031, %v2942, %v2601
    %v2944 = vsel %vm1031, %v2942, 0.0
    %s2945 = scalar_lea.vmem [#allocation4], 8
    %2946 = vst [vmem:[%s2945] sm:$0xff] %v2944
    %s2947 = scalar_lea.vmem [#allocation2], 168
    %v2948 = vld [vmem:[%s2947] sm:$0xff]
    %v2949 = vld [vmem:[%s2947 + $0x8] sm:$0xff]
    %v2950 = vld [vmem:[%s2947 + $0x10] sm:$0xff]
    %v2951 = vld [vmem:[#allocation10] sm:$0xff]
    %v2952 = vld [vmem:[#allocation10 + $0x8] sm:$0xff]
    %v2953 = vld [vmem:[#allocation10 + $0x10] sm:$0xff]
    %v2954 = vld [vmem:[#allocation10 + $0x18] sm:$0xff]
    %v2955 = vld [vmem:[#allocation10 + $0x20] sm:$0xff]
    %v2956 = vld [vmem:[#allocation10 + $0x28] sm:$0xff]
    %v2957 = vld [vmem:[#allocation10 + $0x30] sm:$0xff]
    %v2958 = vld [vmem:[#allocation10 + $0x38] sm:$0xff]
    %v2959 = vld [vmem:[#allocation10 + $0x40] sm:$0xff]
    %v2960 = vld [vmem:[#allocation10 + $0x48] sm:$0xff]
    %v2961 = vld [vmem:[#allocation10 + $0x50] sm:$0xff]
    %v2962 = vld [vmem:[#allocation10 + $0x58] sm:$0xff]
    %v2963 = vld [vmem:[#allocation10 + $0x60] sm:$0xff]
    %v2964 = vld [vmem:[#allocation10 + $0x68] sm:$0xff]
    %v2965 = vld [vmem:[#allocation10 + $0x70] sm:$0xff]
    %v2966 = vld [vmem:[#allocation10 + $0x78] sm:$0xff]
    %v2967 = vld [vmem:[#allocation10 + $0x80] sm:$0xff]
    %v2968 = vld [vmem:[#allocation10 + $0x88] sm:$0xff]
    %v2969 = vld [vmem:[#allocation10 + $0x90] sm:$0xff]
    %v2970 = vld [vmem:[#allocation10 + $0x98] sm:$0xff]
    %v2971 = vld [vmem:[#allocation10 + $0xa0] sm:$0xff]
    %v2972 = vld [vmem:[#allocation10 + $0xa8] sm:$0xff]
    %v2973 = vld [vmem:[#allocation10 + $0xb0] sm:$0xff]
    %v2974 = vld [vmem:[#allocation10 + $0xb8] sm:$0xff]
    %v2975 = vld [vmem:[#allocation10 + $0xc0] sm:$0xff]
    %v2976 = vld [vmem:[#allocation10 + $0xc8] sm:$0xff]
    %v2977 = vld [vmem:[#allocation10 + $0xd0] sm:$0xff]
    %v2978 = vld [vmem:[#allocation10 + $0xd8] sm:$0xff]
    %v2979 = vld [vmem:[#allocation10 + $0xe0] sm:$0xff]
    %v2980 = vld [vmem:[#allocation10 + $0xe8] sm:$0xff]
    %v2981 = vld [vmem:[#allocation10 + $0xf0] sm:$0xff]
    %v2982 = vld [vmem:[#allocation10 + $0xf8] sm:$0xff]
    %v2983 = vld [vmem:[#allocation10 + $0x100] sm:$0xff]
    %v2984 = vld [vmem:[#allocation10 + $0x108] sm:$0xff]
    %v2985 = vld [vmem:[#allocation10 + $0x110] sm:$0xff]
    %v2986 = vld [vmem:[#allocation10 + $0x118] sm:$0xff]
    %v2987 = vld [vmem:[#allocation10 + $0x120] sm:$0xff]
    %v2988 = vld [vmem:[#allocation10 + $0x128] sm:$0xff]
    %v2989 = vld [vmem:[#allocation10 + $0x130] sm:$0xff]
    %v2990 = vld [vmem:[#allocation10 + $0x138] sm:$0xff]
    %v2991 = vld [vmem:[#allocation10 + $0x140] sm:$0xff]
    %v2992 = vld [vmem:[#allocation10 + $0x148] sm:$0xff]
    %v2993 = vld [vmem:[#allocation10 + $0x150] sm:$0xff]
    %v2994 = vld [vmem:[#allocation10 + $0x158] sm:$0xff]
    %v2995 = vld [vmem:[#allocation10 + $0x160] sm:$0xff]
    %v2996 = vld [vmem:[#allocation10 + $0x168] sm:$0xff]
    %v2997 = vld [vmem:[#allocation10 + $0x170] sm:$0xff]
    %v2998 = vld [vmem:[#allocation10 + $0x178] sm:$0xff]
    %v2999 = vld [vmem:[%s5] sm:$0x7]
    %v3001 = vperm.slane %v2999, 0
    %v3002 = vperm.slane %v2999, 1
    %v3003 = vperm.slane %v2999, 2
    %3007 = vmatpush.msra.mxu0 %v2996
    %3008 = vmatpush.msra.mxu0 %v2993
    %3009 = vmatpush.msra.mxu0 %v2990
    %3010 = vmatpush.msra.mxu0 %v2987
    %3011 = vmatpush.msra.mxu0 %v2984
    %3012 = vmatpush.msra.mxu0 %v2981
    %3013 = vmatpush.msra.mxu0 %v2978
    %3014 = vmatpush.msra.mxu0 %v2975
    %3015 = vmatpush.msra.mxu0 %v2972
    %3016 = vmatpush.msra.mxu0 %v2969
    %3017 = vmatpush.msra.mxu0 %v2966
    %3018 = vmatpush.msra.mxu0 %v2963
    %3019 = vmatpush.msra.mxu0 %v2960
    %3020 = vmatpush.msra.mxu0 %v2957
    %3021 = vmatpush.msra.mxu0 %v2954
    %3022 = vmatpush.msra.mxu0 %v2951
    %3023 = vmatmul.f32.gmra.mxu0 %v2772
    %v3024 = vpop.f32.mrf.mxu0
    %v3025 = vadd.f32 %v3001, %v3024
    %3026 = vdwg.mxu0
    %3027 = vmatpush.msra.mxu0 %v2997
    %3028 = vmatpush.msra.mxu0 %v2994
    %3029 = vmatpush.msra.mxu0 %v2991
    %3030 = vmatpush.msra.mxu0 %v2988
    %3031 = vmatpush.msra.mxu0 %v2985
    %3032 = vmatpush.msra.mxu0 %v2982
    %3033 = vmatpush.msra.mxu0 %v2979
    %3034 = vmatpush.msra.mxu0 %v2976
    %3035 = vmatpush.msra.mxu0 %v2973
    %3036 = vmatpush.msra.mxu0 %v2970
    %3037 = vmatpush.msra.mxu0 %v2967
    %3038 = vmatpush.msra.mxu0 %v2964
    %3039 = vmatpush.msra.mxu0 %v2961
    %3040 = vmatpush.msra.mxu0 %v2958
    %3041 = vmatpush.msra.mxu0 %v2955
    %3042 = vmatpush.msra.mxu0 %v2952
    %3043 = vmatmul.f32.gmra.mxu0 %v2772
    %v3044 = vpop.f32.mrf.mxu0
    %v3045 = vadd.f32 %v3002, %v3044
    %3046 = vdwg.mxu0
    %3047 = vmatpush.msra.mxu0 %v2998
    %3048 = vmatpush.msra.mxu0 %v2995
    %3049 = vmatpush.msra.mxu0 %v2992
    %3050 = vmatpush.msra.mxu0 %v2989
    %3051 = vmatpush.msra.mxu0 %v2986
    %3052 = vmatpush.msra.mxu0 %v2983
    %3053 = vmatpush.msra.mxu0 %v2980
    %3054 = vmatpush.msra.mxu0 %v2977
    %3055 = vmatpush.msra.mxu0 %v2974
    %3056 = vmatpush.msra.mxu0 %v2971
    %3057 = vmatpush.msra.mxu0 %v2968
    %3058 = vmatpush.msra.mxu0 %v2965
    %3059 = vmatpush.msra.mxu0 %v2962
    %3060 = vmatpush.msra.mxu0 %v2959
    %3061 = vmatpush.msra.mxu0 %v2956
    %3062 = vmatpush.msra.mxu0 %v2953
    %3063 = vmatmul.f32.gmra.mxu0 %v2772
    %v3064 = vpop.f32.mrf.mxu0
    %v3065 = vadd.f32 %v3003, %v3064
    %3066 = vdwg.mxu0
    %v3067 = vadd.f32 %v2948, %v3025
    %v3068 = vxor.u32 %v3067, 2147483648
    %v3069 = vmul.f32 %v3068, 1.442695
    %v3070 = vpow.pop %v3069
    %v3071 = vadd.f32 %v3070, 1.0
    %v3072 = vrcp.pop %v3071
    %v3073 = vmul.f32 %v3071, %v3072
    %v3074 = vsub.f32 1.0, %v3073
    %v3075 = vmul.f32 %v3072, %v3074
    %v3076 = vadd.f32 %v3072, %v3075
    %vm3077 = vweird.f32 %v3071
    %vm3078 = vweird.f32 %v3072
    %vm3079 = vmor %vm3077, %vm3078
    %v3080 = vsel %vm3079, %v3072, %v3076
    %v3081 = vand.u32 2147483647, %v3071
    %vm3082 = vcmp.eq.f32.partialorder %v3081, 8.507059e+37
    %v3083 = vand.u32 %v3071, 2147483648
    %v3084 = vor.u32 1.1754944e-38, %v3083
    %v3085 = vsel %vm3082, %v3084, %v3080
    %v3086 = vmul.f32 1.0, %v3085
    %v3087 = vadd.f32 %v2949, %v3045
    %v3088 = vxor.u32 %v3087, 2147483648
    %v3089 = vmul.f32 %v3088, 1.442695
    %v3090 = vpow.pop %v3089
    %v3091 = vadd.f32 %v3090, 1.0
    %v3092 = vrcp.pop %v3091
    %v3093 = vmul.f32 %v3091, %v3092
    %v3094 = vsub.f32 1.0, %v3093
    %v3095 = vmul.f32 %v3092, %v3094
    %v3096 = vadd.f32 %v3092, %v3095
    %vm3097 = vweird.f32 %v3091
    %vm3098 = vweird.f32 %v3092
    %vm3099 = vmor %vm3097, %vm3098
    %v3100 = vsel %vm3099, %v3092, %v3096
    %v3101 = vand.u32 2147483647, %v3091
    %vm3102 = vcmp.eq.f32.partialorder %v3101, 8.507059e+37
    %v3103 = vand.u32 %v3091, 2147483648
    %v3104 = vor.u32 1.1754944e-38, %v3103
    %v3105 = vsel %vm3102, %v3104, %v3100
    %v3106 = vmul.f32 1.0, %v3105
    %v3107 = vmul.f32 %v3086, %v3065
    %v3108 = vadd.f32 %v2950, %v3107
    %v3109 = vtanh.pop %v3108
    %v3110 = vsub.f32 1.0, %v3106
    %v3111 = vmul.f32 %v3110, %v3109
    %v3112 = vmul.f32 %v3106, %v2772
    %v3113 = vadd.f32 %v3111, %v3112
    %v3114 = vsel %vm855, %v3113, %v2772
    %v3115 = vsel %vm855, %v3113, 0.0
    %s3116 = scalar_lea.vmem [#allocation13], 56
    %3117 = vst [vmem:[%s3116] sm:$0xff] %v3115
    %v3118 = vld [vmem:[#allocation3] sm:$0xff]
    %v3119 = vld [vmem:[#allocation3 + $0x8] sm:$0xff]
    %v3120 = vld [vmem:[#allocation3 + $0x10] sm:$0xff]
    %v3121 = vld [vmem:[#allocation11] sm:$0xff]
    %v3122 = vld [vmem:[#allocation11 + $0x8] sm:$0xff]
    %v3123 = vld [vmem:[#allocation11 + $0x10] sm:$0xff]
    %v3124 = vld [vmem:[#allocation11 + $0x18] sm:$0xff]
    %v3125 = vld [vmem:[#allocation11 + $0x20] sm:$0xff]
    %v3126 = vld [vmem:[#allocation11 + $0x28] sm:$0xff]
    %v3127 = vld [vmem:[#allocation11 + $0x30] sm:$0xff]
    %v3128 = vld [vmem:[#allocation11 + $0x38] sm:$0xff]
    %v3129 = vld [vmem:[#allocation11 + $0x40] sm:$0xff]
    %v3130 = vld [vmem:[#allocation11 + $0x48] sm:$0xff]
    %v3131 = vld [vmem:[#allocation11 + $0x50] sm:$0xff]
    %v3132 = vld [vmem:[#allocation11 + $0x58] sm:$0xff]
    %v3133 = vld [vmem:[#allocation11 + $0x60] sm:$0xff]
    %v3134 = vld [vmem:[#allocation11 + $0x68] sm:$0xff]
    %v3135 = vld [vmem:[#allocation11 + $0x70] sm:$0xff]
    %v3136 = vld [vmem:[#allocation11 + $0x78] sm:$0xff]
    %v3137 = vld [vmem:[#allocation11 + $0x80] sm:$0xff]
    %v3138 = vld [vmem:[#allocation11 + $0x88] sm:$0xff]
    %v3139 = vld [vmem:[#allocation11 + $0x90] sm:$0xff]
    %v3140 = vld [vmem:[#allocation11 + $0x98] sm:$0xff]
    %v3141 = vld [vmem:[#allocation11 + $0xa0] sm:$0xff]
    %v3142 = vld [vmem:[#allocation11 + $0xa8] sm:$0xff]
    %v3143 = vld [vmem:[#allocation11 + $0xb0] sm:$0xff]
    %v3144 = vld [vmem:[#allocation11 + $0xb8] sm:$0xff]
    %v3145 = vld [vmem:[#allocation11 + $0xc0] sm:$0xff]
    %v3146 = vld [vmem:[#allocation11 + $0xc8] sm:$0xff]
    %v3147 = vld [vmem:[#allocation11 + $0xd0] sm:$0xff]
    %v3148 = vld [vmem:[#allocation11 + $0xd8] sm:$0xff]
    %v3149 = vld [vmem:[#allocation11 + $0xe0] sm:$0xff]
    %v3150 = vld [vmem:[#allocation11 + $0xe8] sm:$0xff]
    %v3151 = vld [vmem:[#allocation11 + $0xf0] sm:$0xff]
    %v3152 = vld [vmem:[#allocation11 + $0xf8] sm:$0xff]
    %v3153 = vld [vmem:[#allocation11 + $0x100] sm:$0xff]
    %v3154 = vld [vmem:[#allocation11 + $0x108] sm:$0xff]
    %v3155 = vld [vmem:[#allocation11 + $0x110] sm:$0xff]
    %v3156 = vld [vmem:[#allocation11 + $0x118] sm:$0xff]
    %v3157 = vld [vmem:[#allocation11 + $0x120] sm:$0xff]
    %v3158 = vld [vmem:[#allocation11 + $0x128] sm:$0xff]
    %v3159 = vld [vmem:[#allocation11 + $0x130] sm:$0xff]
    %v3160 = vld [vmem:[#allocation11 + $0x138] sm:$0xff]
    %v3161 = vld [vmem:[#allocation11 + $0x140] sm:$0xff]
    %v3162 = vld [vmem:[#allocation11 + $0x148] sm:$0xff]
    %v3163 = vld [vmem:[#allocation11 + $0x150] sm:$0xff]
    %v3164 = vld [vmem:[#allocation11 + $0x158] sm:$0xff]
    %v3165 = vld [vmem:[#allocation11 + $0x160] sm:$0xff]
    %v3166 = vld [vmem:[#allocation11 + $0x168] sm:$0xff]
    %v3167 = vld [vmem:[#allocation11 + $0x170] sm:$0xff]
    %v3168 = vld [vmem:[#allocation11 + $0x178] sm:$0xff]
    %v3169 = vld [vmem:[%s7] sm:$0x7]
    %v3171 = vperm.slane %v3169, 0
    %v3172 = vperm.slane %v3169, 1
    %v3173 = vperm.slane %v3169, 2
    %3177 = vmatpush.msra.mxu0 %v3166
    %3178 = vmatpush.msra.mxu0 %v3163
    %3179 = vmatpush.msra.mxu0 %v3160
    %3180 = vmatpush.msra.mxu0 %v3157
    %3181 = vmatpush.msra.mxu0 %v3154
    %3182 = vmatpush.msra.mxu0 %v3151
    %3183 = vmatpush.msra.mxu0 %v3148
    %3184 = vmatpush.msra.mxu0 %v3145
    %3185 = vmatpush.msra.mxu0 %v3142
    %3186 = vmatpush.msra.mxu0 %v3139
    %3187 = vmatpush.msra.mxu0 %v3136
    %3188 = vmatpush.msra.mxu0 %v3133
    %3189 = vmatpush.msra.mxu0 %v3130
    %3190 = vmatpush.msra.mxu0 %v3127
    %3191 = vmatpush.msra.mxu0 %v3124
    %3192 = vmatpush.msra.mxu0 %v3121
    %3193 = vmatmul.f32.gmra.mxu0 %v2943
    %v3194 = vpop.f32.mrf.mxu0
    %v3195 = vadd.f32 %v3171, %v3194
    %3196 = vdwg.mxu0
    %3197 = vmatpush.msra.mxu0 %v3167
    %3198 = vmatpush.msra.mxu0 %v3164
    %3199 = vmatpush.msra.mxu0 %v3161
    %3200 = vmatpush.msra.mxu0 %v3158
    %3201 = vmatpush.msra.mxu0 %v3155
    %3202 = vmatpush.msra.mxu0 %v3152
    %3203 = vmatpush.msra.mxu0 %v3149
    %3204 = vmatpush.msra.mxu0 %v3146
    %3205 = vmatpush.msra.mxu0 %v3143
    %3206 = vmatpush.msra.mxu0 %v3140
    %3207 = vmatpush.msra.mxu0 %v3137
    %3208 = vmatpush.msra.mxu0 %v3134
    %3209 = vmatpush.msra.mxu0 %v3131
    %3210 = vmatpush.msra.mxu0 %v3128
    %3211 = vmatpush.msra.mxu0 %v3125
    %3212 = vmatpush.msra.mxu0 %v3122
    %3213 = vmatmul.f32.gmra.mxu0 %v2943
    %v3214 = vpop.f32.mrf.mxu0
    %v3215 = vadd.f32 %v3172, %v3214
    %3216 = vdwg.mxu0
    %3217 = vmatpush.msra.mxu0 %v3168
    %3218 = vmatpush.msra.mxu0 %v3165
    %3219 = vmatpush.msra.mxu0 %v3162
    %3220 = vmatpush.msra.mxu0 %v3159
    %3221 = vmatpush.msra.mxu0 %v3156
    %3222 = vmatpush.msra.mxu0 %v3153
    %3223 = vmatpush.msra.mxu0 %v3150
    %3224 = vmatpush.msra.mxu0 %v3147
    %3225 = vmatpush.msra.mxu0 %v3144
    %3226 = vmatpush.msra.mxu0 %v3141
    %3227 = vmatpush.msra.mxu0 %v3138
    %3228 = vmatpush.msra.mxu0 %v3135
    %3229 = vmatpush.msra.mxu0 %v3132
    %3230 = vmatpush.msra.mxu0 %v3129
    %3231 = vmatpush.msra.mxu0 %v3126
    %3232 = vmatpush.msra.mxu0 %v3123
    %3233 = vmatmul.f32.gmra.mxu0 %v2943
    %v3234 = vpop.f32.mrf.mxu0
    %v3235 = vadd.f32 %v3173, %v3234
    %3236 = vdwg.mxu0
    %v3237 = vadd.f32 %v3118, %v3195
    %v3238 = vxor.u32 %v3237, 2147483648
    %v3239 = vmul.f32 %v3238, 1.442695
    %v3240 = vpow.pop %v3239
    %v3241 = vadd.f32 %v3240, 1.0
    %v3242 = vrcp.pop %v3241
    %v3243 = vmul.f32 %v3241, %v3242
    %v3244 = vsub.f32 1.0, %v3243
    %v3245 = vmul.f32 %v3242, %v3244
    %v3246 = vadd.f32 %v3242, %v3245
    %vm3247 = vweird.f32 %v3241
    %vm3248 = vweird.f32 %v3242
    %vm3249 = vmor %vm3247, %vm3248
    %v3250 = vsel %vm3249, %v3242, %v3246
    %v3251 = vand.u32 2147483647, %v3241
    %vm3252 = vcmp.eq.f32.partialorder %v3251, 8.507059e+37
    %v3253 = vand.u32 %v3241, 2147483648
    %v3254 = vor.u32 1.1754944e-38, %v3253
    %v3255 = vsel %vm3252, %v3254, %v3250
    %v3256 = vmul.f32 1.0, %v3255
    %v3257 = vadd.f32 %v3119, %v3215
    %v3258 = vxor.u32 %v3257, 2147483648
    %v3259 = vmul.f32 %v3258, 1.442695
    %v3260 = vpow.pop %v3259
    %v3261 = vadd.f32 %v3260, 1.0
    %v3262 = vrcp.pop %v3261
    %v3263 = vmul.f32 %v3261, %v3262
    %v3264 = vsub.f32 1.0, %v3263
    %v3265 = vmul.f32 %v3262, %v3264
    %v3266 = vadd.f32 %v3262, %v3265
    %vm3267 = vweird.f32 %v3261
    %vm3268 = vweird.f32 %v3262
    %vm3269 = vmor %vm3267, %vm3268
    %v3270 = vsel %vm3269, %v3262, %v3266
    %v3271 = vand.u32 2147483647, %v3261
    %vm3272 = vcmp.eq.f32.partialorder %v3271, 8.507059e+37
    %v3273 = vand.u32 %v3261, 2147483648
    %v3274 = vor.u32 1.1754944e-38, %v3273
    %v3275 = vsel %vm3272, %v3274, %v3270
    %v3276 = vmul.f32 1.0, %v3275
    %v3277 = vmul.f32 %v3256, %v3235
    %v3278 = vadd.f32 %v3120, %v3277
    %v3279 = vtanh.pop %v3278
    %v3280 = vsub.f32 1.0, %v3276
    %v3281 = vmul.f32 %v3280, %v3279
    %v3282 = vmul.f32 %v3276, %v2943
    %v3283 = vadd.f32 %v3281, %v3282
    %v3284 = vsel %vm680, %v3283, %v2943
    %v3285 = vsel %vm680, %v3283, 0.0
    %3286 = vst [vmem:[#allocation4] sm:$0xff] %v3285
    %v3287 = vld [vmem:[#allocation13] sm:$0xff]
    %v3288 = vld [vmem:[#allocation13 + $0x8] sm:$0xff]
    %v3289 = vld [vmem:[#allocation13 + $0x10] sm:$0xff]
    %v3290 = vld [vmem:[#allocation13 + $0x18] sm:$0xff]
    %v3291 = vld [vmem:[#allocation13 + $0x20] sm:$0xff]
    %v3292 = vld [vmem:[#allocation13 + $0x28] sm:$0xff]
    %v3293 = vld [vmem:[#allocation13 + $0x30] sm:$0xff]
    %v3294 = vld [vmem:[#allocation13 + $0x38] sm:$0xff]
    %v3295 = vld [vmem:[#allocation4] sm:$0xff]
    %v3296 = vld [vmem:[#allocation4 + $0x8] sm:$0xff]
    %v3297 = vld [vmem:[#allocation4 + $0x10] sm:$0xff]
    %v3298 = vld [vmem:[#allocation4 + $0x18] sm:$0xff]
    %v3299 = vld [vmem:[#allocation4 + $0x20] sm:$0xff]
    %v3300 = vld [vmem:[#allocation4 + $0x28] sm:$0xff]
    %v3301 = vld [vmem:[#allocation4 + $0x30] sm:$0xff]
    %v3302 = vld [vmem:[#allocation4 + $0x38] sm:$0xff]
    %v3303 = vadd.f32 %v3287, %v3295
    %v3304 = vadd.f32 %v3288, %v3296
    %v3305 = vadd.f32 %v3289, %v3297
    %v3306 = vadd.f32 %v3290, %v3298
    %v3307 = vadd.f32 %v3291, %v3299
    %v3308 = vadd.f32 %v3292, %v3300
    %v3309 = vadd.f32 %v3293, %v3301
    %v3310 = vadd.f32 %v3294, %v3302
    %3311 = vst [vmem:[#allocation13] sm:$0xff] %v3303
    %3312 = vst [vmem:[#allocation13 + $0x8] sm:$0xff] %v3304
    %3313 = vst [vmem:[#allocation13 + $0x10] sm:$0xff] %v3305
    %3314 = vst [vmem:[#allocation13 + $0x18] sm:$0xff] %v3306
    %3315 = vst [vmem:[#allocation13 + $0x20] sm:$0xff] %v3307
    %3316 = vst [vmem:[#allocation13 + $0x28] sm:$0xff] %v3308
    %3317 = vst [vmem:[#allocation13 + $0x30] sm:$0xff] %v3309
    %3318 = vst [vmem:[#allocation13 + $0x38] sm:$0xff] %v3310
    %3319 = vst [vmem:[#allocation14] sm:$0xff] %v3114
    %s3320 = scalar_lea.vmem [#allocation14], 8
    %3321 = vst [vmem:[%s3320] sm:$0xff] %v3284
    // Predicated region
    $region50: #{tpu_custom_call.1} parent=1 // pred_check
      _
    $region51: #{tpu_custom_call.1} parent=1 // pred_check_branch
      %3323 = sbr.rel (0) target = $region53
    $region52: #{tpu_custom_call.1} parent=1 // pred_region
      %3325 = vsyncadd [#allocation7], 0
      %s3326 = sshll.u32 [#allocation13], 4
      %s3327 = int_to_ptr.vmem [resolvable:$true] %s3326
      %s3328 = sshll.u32 %s8, 4
      %s3329 = int_to_ptr.hbm [resolvable:$true] %s3328
      %3334 = dma.vmem_to_hbm [thread:$0]  %s3327, 1024, %s3329, [#allocation7], 128, 128, 8
    $region53: #{tpu_custom_call.1} parent=1 // pred_fallthru
      _
    // Predicated region
    $region54: #{tpu_custom_call.1} parent=1 // pred_check
      _
    $region55: #{tpu_custom_call.1} parent=1 // pred_check_branch
      %3336 = sbr.rel (0) target = $region57
    $region56: #{tpu_custom_call.1} parent=1 // pred_region
      %3338 = vsyncadd [#allocation15], 0
      %s3339 = sshll.u32 [#allocation14], 4
      %s3340 = int_to_ptr.vmem [resolvable:$true] %s3339
      %s3341 = sshll.u32 %s9, 4
      %s3342 = int_to_ptr.hbm [resolvable:$true] %s3341
      %3347 = dma.vmem_to_hbm [thread:$0]  %s3340, 256, %s3342, [#allocation15], 128, 128, 8
    $region57: #{tpu_custom_call.1} parent=1 // pred_fallthru
      _
    // Predicated region
    $region58: #{tpu_custom_call.1} parent=1 // pred_check
      _
    $region59: #{tpu_custom_call.1} parent=1 // pred_check_branch
      %3349 = sbr.rel (0) target = $region61
    $region60: #{tpu_custom_call.1} parent=1 // pred_region
      %3351 = dma.done [#allocation7], 1024
    $region61: #{tpu_custom_call.1} parent=1 // pred_fallthru
      _
    // Predicated region
    $region62: #{tpu_custom_call.1} parent=1 // pred_check
      _
    $region63: #{tpu_custom_call.1} parent=1 // pred_check_branch
      %3353 = sbr.rel (0) target = $region65
    $region64: #{tpu_custom_call.1} parent=1 // pred_region
      %3355 = dma.done [#allocation15], 256
    $region65: #{tpu_custom_call.1} parent=1 // pred_fallthru
      _
    %3356 = vsyncpa [#allocation6], 1
    %3357 = vsyncpa [#allocation9], 1
    %3358 = vsyncpa [#allocation12], 1
    %3359 = vsyncpa [#allocation7], 1
    %3360 = vsyncpa [#allocation15], 1

</llo_original>
